<compile_context>
chip_gen: v7x
topology: tpu7x:2x2x1
jax: 0.10.0
libtpu: 0.0.40
codegen_flags: <defaults>
</compile_context>

<pallas_src>
import functools

import jax
import jax.numpy as jnp
from jax import lax
from jax.experimental import pallas as pl
from jax.experimental.pallas import tpu as pltpu

KSIZE = 7        # PyTorch module default (kernel_size=7)
PAD = 3          # padding = 3 for kernel_size = 7
LANES = 128
SUBLANES = 8
VPAD_TOP = 8     # top zero-padding rows (>= PAD, multiple of 8 so the interior
                 # store into the padded scratch is sublane-aligned)


def _pick_hw_tile(hw):
    """Largest lane tile (<=1024, multiple of 128) dividing H*W, else H*W."""
    if hw % LANES != 0 or hw <= 1024:
        return hw
    for t in (1024, 512, 256, 128):
        if hw % t == 0:
            return t
    return hw


# ----------------------------------------------------------------------------
# Stage 1: fused channel mean + max, lane-dense over H*W.
# ----------------------------------------------------------------------------
def _channel_reduce_kernel(x_ref, o_ref, *, C):
    # x_ref: VMEM [1, C, T]     (T = H*W lane tile)
    # o_ref: VMEM f32[1, 2, T]  row 0 = channel mean, row 1 = channel max
    T = x_ref.shape[2]
    num_full = C // SUBLANES
    rem = C - num_full * SUBLANES

    s = None    # (1, T) running sum
    mx = None   # (1, T) running max

    if num_full > 0:
        if num_full <= 8:
            # Small C: fully unrolled; accumulators start from chunk 0.
            s8 = x_ref[0, 0:SUBLANES, :].astype(jnp.float32)
            mx8 = s8
            for i in range(1, num_full):
                chunk = x_ref[0, i * SUBLANES:(i + 1) * SUBLANES, :].astype(jnp.float32)
                s8 = s8 + chunk
                mx8 = jnp.maximum(mx8, chunk)
        else:
            # Large C: fori_loop bounds code size / live ranges (no spills).
            def body(i, carry):
                s8, mx8 = carry
                lo = pl.multiple_of(i * SUBLANES, SUBLANES)
                chunk = x_ref[0, pl.ds(lo, SUBLANES), :].astype(jnp.float32)
                return s8 + chunk, jnp.maximum(mx8, chunk)

            s8, mx8 = lax.fori_loop(
                0, num_full, body,
                (jnp.zeros((SUBLANES, T), jnp.float32),
                 jnp.full((SUBLANES, T), -jnp.inf, jnp.float32)),
                unroll=2)
        # Single cross-sublane (XLU) reduction after the VALU-only loop.
        s = jnp.sum(s8, axis=0, keepdims=True)
        mx = jnp.max(mx8, axis=0, keepdims=True)

    if rem > 0:  # channel tail (C not a multiple of 8)
        tail = x_ref[0, num_full * SUBLANES:C, :].astype(jnp.float32)
        ts = jnp.sum(tail, axis=0, keepdims=True)
        tm = jnp.max(tail, axis=0, keepdims=True)
        s = ts if s is None else s + ts
        mx = tm if mx is None else jnp.maximum(mx, tm)

    o_ref[0, 0:1, :] = (s / C).astype(o_ref.dtype)   # true division, like torch.mean
    o_ref[0, 1:2, :] = mx.astype(o_ref.dtype)


# ----------------------------------------------------------------------------
# Stage 2: 7x7 conv (2 -> 1, bias-free) on the MXU + sigmoid.
# ----------------------------------------------------------------------------
def _make_band_matrices(weight, W):
    """Banded (W, W) matrices with kw taps + horizontal zero-padding folded in.

    bands[c*7+kh][j, w] = weight[0, c, kh, j - w + PAD]  if 0 <= j-w+PAD < 7
                          else 0
    so that  conv_out[i, w] = sum_{c,kh} (Pvert[c, rows(kh), :] @ bands[c*7+kh])[i, w]
    where Pvert is the map with *vertical* zero padding only.
    Returned as a bf16 hi/lo pair for f32-accurate bf16x3 MXU accumulation.
    """
    w = jnp.asarray(weight, jnp.float32).reshape(2, KSIZE, KSIZE)
    j = jnp.arange(W)[:, None]        # contraction index (input column)
    u = jnp.arange(W)[None, :]        # output column
    kw = j - u + PAD                  # (W, W)
    valid = (kw >= 0) & (kw < KSIZE)
    kw_c = jnp.clip(kw, 0, KSIZE - 1)
    bands = jnp.where(valid[None, None], w[:, :, kw_c], 0.0)   # (2, 7, W, W)
    bands = bands.reshape(2 * KSIZE, W, W)
    b_hi = bands.astype(jnp.bfloat16)
    b_lo = (bands - b_hi.astype(jnp.float32)).astype(jnp.bfloat16)
    return b_hi, b_lo


def _conv_sigmoid_kernel(bands_hi_ref, bands_lo_ref, m_ref, o_ref, pad_ref, *, H, W):
    # bands_*_ref: VMEM bf16[14, W, W]  grid-invariant banded conv matrices
    # m_ref      : VMEM f32[1, 2, H, W] (mean, max) maps for one image
    # o_ref      : VMEM    [1, 1, H, W] attention mask output
    # pad_ref    : VMEM f32[2, R, W]    vertically zero-padded maps (scratch)
    R = VPAD_TOP + H + PAD

    # Vertical zero-padding: one zero store + one 8-aligned full-width interior
    # store per channel (replaces the old per-row scatter).  Re-done every step
    # because scratch is per-core and uninitialized.
    pad_ref[...] = jnp.zeros((2, R, W), jnp.float32)
    for c in range(2):
        pad_ref[c, VPAD_TOP:VPAD_TOP + H, :] = m_ref[0, c].astype(jnp.float32)

    acc = jnp.zeros((H, W), jnp.float32)
    for c in range(2):
        pc = pad_ref[c]                                   # (R, W) f32, loaded once
        for kh in range(KSIZE):
            idx = c * KSIZE + kh
            start = VPAD_TOP - PAD + kh                   # 5 + kh
            s = pc[start:start + H, :]                    # (H, W) sublane slice
            # bf16 hi/lo split -> 3 MXU-native bf16 matmuls, f32 accumulate:
            # f32-level accuracy, v5e-friendly, cheaper than f32 matmul passes.
            s_hi = s.astype(jnp.bfloat16)
            s_lo = (s - s_hi.astype(jnp.float32)).astype(jnp.bfloat16)
            b_hi = bands_hi_ref[idx]
            b_lo = bands_lo_ref[idx]
            acc = acc + jnp.dot(s_hi, b_hi, preferred_element_type=jnp.float32)
            acc = acc + jnp.dot(s_hi, b_lo, preferred_element_type=jnp.float32)
            acc = acc + jnp.dot(s_lo, b_hi, preferred_element_type=jnp.float32)

    o_ref[0, 0] = jax.nn.sigmoid(acc).astype(o_ref.dtype)


# ----------------------------------------------------------------------------
# Wrapper.
# ----------------------------------------------------------------------------
@jax.jit
def spatial_attention(x, weight):
    """x: (N, C, H, W); weight: (1, 2, 7, 7) (PyTorch OIHW layout, bias-free)."""
    N, C, H, W = x.shape
    assert weight.shape == (1, 2, KSIZE, KSIZE), weight.shape
    HW = H * W
    itemsize = jnp.dtype(x.dtype).itemsize

    # ------------- Stage 1: channel mean + max (lane-dense) -------------
    HWT = _pick_hw_tile(HW)
    nT = HW // HWT
    x_flat = x.reshape(N, C, HW)

    vmem1 = int(min(48 << 20, max(16 << 20, 4 * HWT * (C * itemsize + 2 * 4))))
    cat_flat = pl.pallas_call(
        functools.partial(_channel_reduce_kernel, C=C),
        out_shape=jax.ShapeDtypeStruct((N, 2, HW), jnp.float32),
        grid_spec=pltpu.PrefetchScalarGridSpec(
            num_scalar_prefetch=0,
            grid=(N, nT),
            in_specs=[pl.BlockSpec((1, C, HWT), lambda n, t: (n, 0, t))],
            out_specs=pl.BlockSpec((1, 2, HWT), lambda n, t: (n, 0, t)),
        ),
        compiler_params=pltpu.CompilerParams(
            dimension_semantics=("parallel", "parallel"),
            vmem_limit_bytes=vmem1,
        ),
    )(x_flat)

    # HBM reshape is pure metadata; the stage-2 input DMA does the relayout.
    cat = cat_flat.reshape(N, 2, H, W)

    # ------------- Stage 2: 7x7 conv (2 -> 1) on the MXU + sigmoid -------------
    bands_hi, bands_lo = _make_band_matrices(weight, W)
    band_bytes = 2 * (2 * KSIZE * W * W * 2)
    pad_bytes = 2 * (VPAD_TOP + H + PAD) * W * 4
    vmem2 = int(min(48 << 20, max(16 << 20,
                                  4 * (band_bytes + 2 * HW * 4 + HW * itemsize)
                                  + pad_bytes)))
    out = pl.pallas_call(
        functools.partial(_conv_sigmoid_kernel, H=H, W=W),
        out_shape=jax.ShapeDtypeStruct((N, 1, H, W), x.dtype),
        grid_spec=pltpu.PrefetchScalarGridSpec(
            num_scalar_prefetch=0,
            grid=(N,),
            in_specs=[
                pl.BlockSpec((2 * KSIZE, W, W), lambda n: (0, 0, 0)),   # bands hi
                pl.BlockSpec((2 * KSIZE, W, W), lambda n: (0, 0, 0)),   # bands lo
                pl.BlockSpec((1, 2, H, W), lambda n: (n, 0, 0, 0)),     # (mean, max)
            ],
            out_specs=pl.BlockSpec((1, 1, H, W), lambda n: (n, 0, 0, 0)),
            scratch_shapes=[pltpu.VMEM((2, VPAD_TOP + H + PAD, W), jnp.float32)],
        ),
        compiler_params=pltpu.CompilerParams(
            dimension_semantics=("parallel",),
            vmem_limit_bytes=vmem2,
        ),
    )(bands_hi, bands_lo, cat)
    return out


def spatial_attention_ref(x, weight):
    """Pure-JAX reference (mirrors the PyTorch forward)."""
    avg = jnp.mean(x, axis=1, keepdims=True)
    mx = jnp.max(x, axis=1, keepdims=True)
    cat = jnp.concatenate([avg, mx], axis=1)
    y = lax.conv_general_dilated(
        cat, weight,
        window_strides=(1, 1),
        padding=((PAD, PAD), (PAD, PAD)),
        dimension_numbers=("NCHW", "OIHW", "NCHW"),
        precision=lax.Precision.HIGHEST,
    )
    return jax.nn.sigmoid(y)


if __name__ == "__main__":
    key = jax.random.PRNGKey(0)
    kx, kw_, kx2 = jax.random.split(key, 3)

    # Conv weight (out=1, in=2, 7, 7), as in nn.Conv2d(2, 1, 7, bias=False).
    weight = jax.random.normal(kw_, (1, 2, KSIZE, KSIZE), dtype=jnp.float32) * 0.1

    # Primary small config (matches the module's expected small-shape usage).
    N, C, H, W = 2, 4, 16, 16
    x = jax.random.normal(kx, (N, C, H, W), dtype=jnp.float32)
    out = jax.block_until_ready(spatial_attention(x, weight))
    ref = spatial_attention_ref(x, weight)
    assert out.shape == (N, 1, H, W), out.shape
    # bf16x3 MXU accumulation keeps error at the ~1e-6 level; 1e-4 leaves margin.
    assert jnp.allclose(out, ref, atol=1e-4, rtol=1e-4), "mismatch (small config)"

    # Secondary config exercising the fori_loop channel chunking (C > 64) and
    # the H*W lane-tile grid axis (H*W > 1024).
    N2, C2, H2, W2 = 2, 72, 64, 64
    x2 = jax.random.normal(kx2, (N2, C2, H2, W2), dtype=jnp.float32)
    out2 = jax.block_until_ready(spatial_attention(x2, weight))
    ref2 = spatial_attention_ref(x2, weight)
    assert out2.shape == (N2, 1, H2, W2), out2.shape
    assert jnp.allclose(out2, ref2, atol=1e-4, rtol=1e-4), "mismatch (large config)"

    print("KERNEL_OK")
</pallas_src>

<mosaic_0001>
module attributes {stable_mosaic.version = 11 : i64} {
  func.func @_channel_reduce_kernel(%arg0: i32, %arg1: i32, %arg2: memref<1x4x256xf32, #tpu.memory_space<vmem>>, %arg3: memref<1x2x256xf32, #tpu.memory_space<vmem>>) attributes {dimension_semantics = [#tpu.dimension_semantics<parallel>, #tpu.dimension_semantics<parallel>], iteration_bounds = array<i64: 2, 1>, scalar_prefetch = 0 : i64, scratch_operands = 0 : i64, tpu.core_type = #tpu.core_type<tc>, window_params = [{transform_indices = @transform_0, window_bounds = array<i64: 1, 4, 256>}, {transform_indices = @transform_1, window_bounds = array<i64: 1, 2, 256>}]} {
    %c0 = arith.constant 0 : index
    %c0_0 = arith.constant 0 : index
    %c0_1 = arith.constant 0 : index
    %0 = vector.load %arg2[%c0, %c0_0, %c0_1] : memref<1x4x256xf32, #tpu.memory_space<vmem>>, vector<1x4x256xf32>
    %1 = vector.shape_cast %0 : vector<1x4x256xf32> to vector<4x256xf32>
    %cst = arith.constant dense<0.000000e+00> : vector<256xf32>
    %2 = vector.multi_reduction <add>, %1, %cst [0] : vector<4x256xf32> to vector<256xf32>
    %3 = vector.shape_cast %2 : vector<256xf32> to vector<1x256xf32>
    %cst_2 = arith.constant dense<0xFF800000> : vector<256xf32>
    %4 = vector.multi_reduction <maximumf>, %1, %cst_2 [0] : vector<4x256xf32> to vector<256xf32>
    %5 = vector.shape_cast %4 : vector<256xf32> to vector<1x256xf32>
    %cst_3 = arith.constant 4.000000e+00 : f32
    %6 = vector.broadcast %cst_3 : f32 to vector<1x256xf32>
    %7 = arith.divf %3, %6 : vector<1x256xf32>
    %c0_4 = arith.constant 0 : index
    %c0_5 = arith.constant 0 : index
    %c0_6 = arith.constant 0 : index
    %8 = vector.load %arg3[%c0_4, %c0_5, %c0_6] : memref<1x2x256xf32, #tpu.memory_space<vmem>>, vector<1x1x256xf32>
    %9 = vector.shape_cast %8 : vector<1x1x256xf32> to vector<1x256xf32>
    %10 = vector.shape_cast %7 : vector<1x256xf32> to vector<1x1x256xf32>
    tpu.vector_store %arg3[%c0_4, %c0_5, %c0_6], %10 {strides = array<i32>} : memref<1x2x256xf32, #tpu.memory_space<vmem>>, vector<1x1x256xf32>,
    %c0_7 = arith.constant 0 : index
    %c1 = arith.constant 1 : index
    %c0_8 = arith.constant 0 : index
    %11 = vector.load %arg3[%c0_7, %c1, %c0_8] : memref<1x2x256xf32, #tpu.memory_space<vmem>>, vector<1x1x256xf32>
    %12 = vector.shape_cast %11 : vector<1x1x256xf32> to vector<1x256xf32>
    %13 = vector.shape_cast %5 : vector<1x256xf32> to vector<1x1x256xf32>
    tpu.vector_store %arg3[%c0_7, %c1, %c0_8], %13 {strides = array<i32>} : memref<1x2x256xf32, #tpu.memory_space<vmem>>, vector<1x1x256xf32>,
    return
  }
  func.func @transform_0(%arg0: i32, %arg1: i32) -> (i32, i32, i32) {
    %c0_i32 = arith.constant 0 : i32
    %c0_i32_0 = arith.constant 0 : i32
    return %arg0, %c0_i32, %arg1 : i32, i32, i32
  }
  func.func @transform_1(%arg0: i32, %arg1: i32) -> (i32, i32, i32) {
    %c0_i32 = arith.constant 0 : i32
    %c0_i32_0 = arith.constant 0 : i32
    return %arg0, %c0_i32, %arg1 : i32, i32, i32
  }
}

module attributes {stable_mosaic.version = 11 : i64} {
  func.func @_conv_sigmoid_kernel(%arg0: i32, %arg1: memref<14x16x16xbf16, #tpu.memory_space<vmem>>, %arg2: memref<14x16x16xbf16, #tpu.memory_space<vmem>>, %arg3: memref<1x2x16x16xf32, #tpu.memory_space<vmem>>, %arg4: memref<1x1x16x16xf32, #tpu.memory_space<vmem>>, %arg5: memref<2x27x16xf32, #tpu.memory_space<vmem>>) attributes {dimension_semantics = [#tpu.dimension_semantics<parallel>], iteration_bounds = array<i64: 2>, scalar_prefetch = 0 : i64, scratch_operands = 1 : i64, tpu.core_type = #tpu.core_type<tc>, window_params = [{pipeline_mode = #tpu.pipeline_mode<synchronous>, transform_indices = @transform_0, window_bounds = array<i64: 14, 16, 16>}, {pipeline_mode = #tpu.pipeline_mode<synchronous>, transform_indices = @transform_1, window_bounds = array<i64: 14, 16, 16>}, {transform_indices = @transform_2, window_bounds = array<i64: 1, 2, 16, 16>}, {transform_indices = @transform_3, window_bounds = array<i64: 1, 1, 16, 16>}]} {
    %cst = arith.constant 0.000000e+00 : f32
    %0 = vector.broadcast %cst : f32 to vector<2x27x16xf32>
    %c0 = arith.constant 0 : index
    %c0_0 = arith.constant 0 : index
    %c0_1 = arith.constant 0 : index
    %1 = vector.load %arg5[%c0, %c0_0, %c0_1] : memref<2x27x16xf32, #tpu.memory_space<vmem>>, vector<2x27x16xf32>
    tpu.vector_store %arg5[%c0, %c0_0, %c0_1], %0 {strides = array<i32>} : memref<2x27x16xf32, #tpu.memory_space<vmem>>, vector<2x27x16xf32>,
    %c0_2 = arith.constant 0 : index
    %c0_3 = arith.constant 0 : index
    %c0_4 = arith.constant 0 : index
    %c0_5 = arith.constant 0 : index
    %2 = vector.load %arg3[%c0_2, %c0_3, %c0_4, %c0_5] : memref<1x2x16x16xf32, #tpu.memory_space<vmem>>, vector<1x1x16x16xf32>
    %3 = vector.shape_cast %2 : vector<1x1x16x16xf32> to vector<16x16xf32>
    %c0_6 = arith.constant 0 : index
    %c8 = arith.constant 8 : index
    %c0_7 = arith.constant 0 : index
    %4 = vector.load %arg5[%c0_6, %c8, %c0_7] : memref<2x27x16xf32, #tpu.memory_space<vmem>>, vector<1x16x16xf32>
    %5 = vector.shape_cast %4 : vector<1x16x16xf32> to vector<16x16xf32>
    %6 = vector.shape_cast %3 : vector<16x16xf32> to vector<1x16x16xf32>
    tpu.vector_store %arg5[%c0_6, %c8, %c0_7], %6 {strides = array<i32>} : memref<2x27x16xf32, #tpu.memory_space<vmem>>, vector<1x16x16xf32>,
    %c0_8 = arith.constant 0 : index
    %c1 = arith.constant 1 : index
    %c0_9 = arith.constant 0 : index
    %c0_10 = arith.constant 0 : index
    %7 = vector.load %arg3[%c0_8, %c1, %c0_9, %c0_10] : memref<1x2x16x16xf32, #tpu.memory_space<vmem>>, vector<1x1x16x16xf32>
    %8 = vector.shape_cast %7 : vector<1x1x16x16xf32> to vector<16x16xf32>
    %c1_11 = arith.constant 1 : index
    %c8_12 = arith.constant 8 : index
    %c0_13 = arith.constant 0 : index
    %9 = vector.load %arg5[%c1_11, %c8_12, %c0_13] : memref<2x27x16xf32, #tpu.memory_space<vmem>>, vector<1x16x16xf32>
    %10 = vector.shape_cast %9 : vector<1x16x16xf32> to vector<16x16xf32>
    %11 = vector.shape_cast %8 : vector<16x16xf32> to vector<1x16x16xf32>
    tpu.vector_store %arg5[%c1_11, %c8_12, %c0_13], %11 {strides = array<i32>} : memref<2x27x16xf32, #tpu.memory_space<vmem>>, vector<1x16x16xf32>,
    %cst_14 = arith.constant 0.000000e+00 : f32
    %12 = vector.broadcast %cst_14 : f32 to vector<16x16xf32>
    %c0_15 = arith.constant 0 : index
    %c0_16 = arith.constant 0 : index
    %c0_17 = arith.constant 0 : index
    %13 = vector.load %arg5[%c0_15, %c0_16, %c0_17] : memref<2x27x16xf32, #tpu.memory_space<vmem>>, vector<1x27x16xf32>
    %14 = vector.shape_cast %13 : vector<1x27x16xf32> to vector<27x16xf32>
    %15 = vector.extract_strided_slice %14 {offsets = [5, 0], sizes = [16, 16], strides = [1, 1]} : vector<27x16xf32> to vector<16x16xf32>
    %16 = arith.truncf %15 : vector<16x16xf32> to vector<16x16xbf16>
    %17 = arith.extf %16 : vector<16x16xbf16> to vector<16x16xf32>
    %18 = arith.subf %15, %17 : vector<16x16xf32>
    %19 = arith.truncf %18 : vector<16x16xf32> to vector<16x16xbf16>
    %c0_18 = arith.constant 0 : index
    %c0_19 = arith.constant 0 : index
    %c0_20 = arith.constant 0 : index
    %20 = vector.load %arg1[%c0_18, %c0_19, %c0_20] : memref<14x16x16xbf16, #tpu.memory_space<vmem>>, vector<1x16x16xbf16>
    %21 = vector.shape_cast %20 : vector<1x16x16xbf16> to vector<16x16xbf16>
    %c0_21 = arith.constant 0 : index
    %c0_22 = arith.constant 0 : index
    %c0_23 = arith.constant 0 : index
    %22 = vector.load %arg2[%c0_21, %c0_22, %c0_23] : memref<14x16x16xbf16, #tpu.memory_space<vmem>>, vector<1x16x16xbf16>
    %23 = vector.shape_cast %22 : vector<1x16x16xbf16> to vector<16x16xbf16>
    %cst_24 = arith.constant dense<0.000000e+00> : vector<16x16xf32>
    %24 = tpu.matmul %16, %21, %cst_24 {dimension_numbers = #tpu.dot_dimension_numbers<[1], [0], [0], [1], [0, 0, 1, 1], [], []>} : vector<16x16xbf16>, vector<16x16xbf16>, vector<16x16xf32> -> vector<16x16xf32>
    %25 = arith.addf %12, %24 : vector<16x16xf32>
    %cst_25 = arith.constant dense<0.000000e+00> : vector<16x16xf32>
    %26 = tpu.matmul %16, %23, %cst_25 {dimension_numbers = #tpu.dot_dimension_numbers<[1], [0], [0], [1], [0, 0, 1, 1], [], []>} : vector<16x16xbf16>, vector<16x16xbf16>, vector<16x16xf32> -> vector<16x16xf32>
    %27 = arith.addf %25, %26 : vector<16x16xf32>
    %cst_26 = arith.constant dense<0.000000e+00> : vector<16x16xf32>
    %28 = tpu.matmul %19, %21, %cst_26 {dimension_numbers = #tpu.dot_dimension_numbers<[1], [0], [0], [1], [0, 0, 1, 1], [], []>} : vector<16x16xbf16>, vector<16x16xbf16>, vector<16x16xf32> -> vector<16x16xf32>
    %29 = arith.addf %27, %28 : vector<16x16xf32>
    %30 = vector.extract_strided_slice %14 {offsets = [6, 0], sizes = [16, 16], strides = [1, 1]} : vector<27x16xf32> to vector<16x16xf32>
    %31 = arith.truncf %30 : vector<16x16xf32> to vector<16x16xbf16>
    %32 = arith.extf %31 : vector<16x16xbf16> to vector<16x16xf32>
    %33 = arith.subf %30, %32 : vector<16x16xf32>
    %34 = arith.truncf %33 : vector<16x16xf32> to vector<16x16xbf16>
    %c1_27 = arith.constant 1 : index
    %c0_28 = arith.constant 0 : index
    %c0_29 = arith.constant 0 : index
    %35 = vector.load %arg1[%c1_27, %c0_28, %c0_29] : memref<14x16x16xbf16, #tpu.memory_space<vmem>>, vector<1x16x16xbf16>
    %36 = vector.shape_cast %35 : vector<1x16x16xbf16> to vector<16x16xbf16>
    %c1_30 = arith.constant 1 : index
    %c0_31 = arith.constant 0 : index
    %c0_32 = arith.constant 0 : index
    %37 = vector.load %arg2[%c1_30, %c0_31, %c0_32] : memref<14x16x16xbf16, #tpu.memory_space<vmem>>, vector<1x16x16xbf16>
    %38 = vector.shape_cast %37 : vector<1x16x16xbf16> to vector<16x16xbf16>
    %cst_33 = arith.constant dense<0.000000e+00> : vector<16x16xf32>
    %39 = tpu.matmul %31, %36, %cst_33 {dimension_numbers = #tpu.dot_dimension_numbers<[1], [0], [0], [1], [0, 0, 1, 1], [], []>} : vector<16x16xbf16>, vector<16x16xbf16>, vector<16x16xf32> -> vector<16x16xf32>
    %40 = arith.addf %29, %39 : vector<16x16xf32>
    %cst_34 = arith.constant dense<0.000000e+00> : vector<16x16xf32>
    %41 = tpu.matmul %31, %38, %cst_34 {dimension_numbers = #tpu.dot_dimension_numbers<[1], [0], [0], [1], [0, 0, 1, 1], [], []>} : vector<16x16xbf16>, vector<16x16xbf16>, vector<16x16xf32> -> vector<16x16xf32>
    %42 = arith.addf %40, %41 : vector<16x16xf32>
    %cst_35 = arith.constant dense<0.000000e+00> : vector<16x16xf32>
    %43 = tpu.matmul %34, %36, %cst_35 {dimension_numbers = #tpu.dot_dimension_numbers<[1], [0], [0], [1], [0, 0, 1, 1], [], []>} : vector<16x16xbf16>, vector<16x16xbf16>, vector<16x16xf32> -> vector<16x16xf32>
    %44 = arith.addf %42, %43 : vector<16x16xf32>
    %45 = vector.extract_strided_slice %14 {offsets = [7, 0], sizes = [16, 16], strides = [1, 1]} : vector<27x16xf32> to vector<16x16xf32>
    %46 = arith.truncf %45 : vector<16x16xf32> to vector<16x16xbf16>
    %47 = arith.extf %46 : vector<16x16xbf16> to vector<16x16xf32>
    %48 = arith.subf %45, %47 : vector<16x16xf32>
    %49 = arith.truncf %48 : vector<16x16xf32> to vector<16x16xbf16>
    %c2 = arith.constant 2 : index
    %c0_36 = arith.constant 0 : index
    %c0_37 = arith.constant 0 : index
    %50 = vector.load %arg1[%c2, %c0_36, %c0_37] : memref<14x16x16xbf16, #tpu.memory_space<vmem>>, vector<1x16x16xbf16>
    %51 = vector.shape_cast %50 : vector<1x16x16xbf16> to vector<16x16xbf16>
    %c2_38 = arith.constant 2 : index
    %c0_39 = arith.constant 0 : index
    %c0_40 = arith.constant 0 : index
    %52 = vector.load %arg2[%c2_38, %c0_39, %c0_40] : memref<14x16x16xbf16, #tpu.memory_space<vmem>>, vector<1x16x16xbf16>
    %53 = vector.shape_cast %52 : vector<1x16x16xbf16> to vector<16x16xbf16>
    %cst_41 = arith.constant dense<0.000000e+00> : vector<16x16xf32>
    %54 = tpu.matmul %46, %51, %cst_41 {dimension_numbers = #tpu.dot_dimension_numbers<[1], [0], [0], [1], [0, 0, 1, 1], [], []>} : vector<16x16xbf16>, vector<16x16xbf16>, vector<16x16xf32> -> vector<16x16xf32>
    %55 = arith.addf %44, %54 : vector<16x16xf32>
    %cst_42 = arith.constant dense<0.000000e+00> : vector<16x16xf32>
    %56 = tpu.matmul %46, %53, %cst_42 {dimension_numbers = #tpu.dot_dimension_numbers<[1], [0], [0], [1], [0, 0, 1, 1], [], []>} : vector<16x16xbf16>, vector<16x16xbf16>, vector<16x16xf32> -> vector<16x16xf32>
    %57 = arith.addf %55, %56 : vector<16x16xf32>
    %cst_43 = arith.constant dense<0.000000e+00> : vector<16x16xf32>
    %58 = tpu.matmul %49, %51, %cst_43 {dimension_numbers = #tpu.dot_dimension_numbers<[1], [0], [0], [1], [0, 0, 1, 1], [], []>} : vector<16x16xbf16>, vector<16x16xbf16>, vector<16x16xf32> -> vector<16x16xf32>
    %59 = arith.addf %57, %58 : vector<16x16xf32>
    %60 = vector.extract_strided_slice %14 {offsets = [8, 0], sizes = [16, 16], strides = [1, 1]} : vector<27x16xf32> to vector<16x16xf32>
    %61 = arith.truncf %60 : vector<16x16xf32> to vector<16x16xbf16>
    %62 = arith.extf %61 : vector<16x16xbf16> to vector<16x16xf32>
    %63 = arith.subf %60, %62 : vector<16x16xf32>
    %64 = arith.truncf %63 : vector<16x16xf32> to vector<16x16xbf16>
    %c3 = arith.constant 3 : index
    %c0_44 = arith.constant 0 : index
    %c0_45 = arith.constant 0 : index
    %65 = vector.load %arg1[%c3, %c0_44, %c0_45] : memref<14x16x16xbf16, #tpu.memory_space<vmem>>, vector<1x16x16xbf16>
    %66 = vector.shape_cast %65 : vector<1x16x16xbf16> to vector<16x16xbf16>
    %c3_46 = arith.constant 3 : index
    %c0_47 = arith.constant 0 : index
    %c0_48 = arith.constant 0 : index
    %67 = vector.load %arg2[%c3_46, %c0_47, %c0_48] : memref<14x16x16xbf16, #tpu.memory_space<vmem>>, vector<1x16x16xbf16>
    %68 = vector.shape_cast %67 : vector<1x16x16xbf16> to vector<16x16xbf16>
    %cst_49 = arith.constant dense<0.000000e+00> : vector<16x16xf32>
    %69 = tpu.matmul %61, %66, %cst_49 {dimension_numbers = #tpu.dot_dimension_numbers<[1], [0], [0], [1], [0, 0, 1, 1], [], []>} : vector<16x16xbf16>, vector<16x16xbf16>, vector<16x16xf32> -> vector<16x16xf32>
    %70 = arith.addf %59, %69 : vector<16x16xf32>
    %cst_50 = arith.constant dense<0.000000e+00> : vector<16x16xf32>
    %71 = tpu.matmul %61, %68, %cst_50 {dimension_numbers = #tpu.dot_dimension_numbers<[1], [0], [0], [1], [0, 0, 1, 1], [], []>} : vector<16x16xbf16>, vector<16x16xbf16>, vector<16x16xf32> -> vector<16x16xf32>
    %72 = arith.addf %70, %71 : vector<16x16xf32>
    %cst_51 = arith.constant dense<0.000000e+00> : vector<16x16xf32>
    %73 = tpu.matmul %64, %66, %cst_51 {dimension_numbers = #tpu.dot_dimension_numbers<[1], [0], [0], [1], [0, 0, 1, 1], [], []>} : vector<16x16xbf16>, vector<16x16xbf16>, vector<16x16xf32> -> vector<16x16xf32>
    %74 = arith.addf %72, %73 : vector<16x16xf32>
    %75 = vector.extract_strided_slice %14 {offsets = [9, 0], sizes = [16, 16], strides = [1, 1]} : vector<27x16xf32> to vector<16x16xf32>
    %76 = arith.truncf %75 : vector<16x16xf32> to vector<16x16xbf16>
    %77 = arith.extf %76 : vector<16x16xbf16> to vector<16x16xf32>
    %78 = arith.subf %75, %77 : vector<16x16xf32>
    %79 = arith.truncf %78 : vector<16x16xf32> to vector<16x16xbf16>
    %c4 = arith.constant 4 : index
    %c0_52 = arith.constant 0 : index
    %c0_53 = arith.constant 0 : index
    %80 = vector.load %arg1[%c4, %c0_52, %c0_53] : memref<14x16x16xbf16, #tpu.memory_space<vmem>>, vector<1x16x16xbf16>
    %81 = vector.shape_cast %80 : vector<1x16x16xbf16> to vector<16x16xbf16>
    %c4_54 = arith.constant 4 : index
    %c0_55 = arith.constant 0 : index
    %c0_56 = arith.constant 0 : index
    %82 = vector.load %arg2[%c4_54, %c0_55, %c0_56] : memref<14x16x16xbf16, #tpu.memory_space<vmem>>, vector<1x16x16xbf16>
    %83 = vector.shape_cast %82 : vector<1x16x16xbf16> to vector<16x16xbf16>
    %cst_57 = arith.constant dense<0.000000e+00> : vector<16x16xf32>
    %84 = tpu.matmul %76, %81, %cst_57 {dimension_numbers = #tpu.dot_dimension_numbers<[1], [0], [0], [1], [0, 0, 1, 1], [], []>} : vector<16x16xbf16>, vector<16x16xbf16>, vector<16x16xf32> -> vector<16x16xf32>
    %85 = arith.addf %74, %84 : vector<16x16xf32>
    %cst_58 = arith.constant dense<0.000000e+00> : vector<16x16xf32>
    %86 = tpu.matmul %76, %83, %cst_58 {dimension_numbers = #tpu.dot_dimension_numbers<[1], [0], [0], [1], [0, 0, 1, 1], [], []>} : vector<16x16xbf16>, vector<16x16xbf16>, vector<16x16xf32> -> vector<16x16xf32>
    %87 = arith.addf %85, %86 : vector<16x16xf32>
    %cst_59 = arith.constant dense<0.000000e+00> : vector<16x16xf32>
    %88 = tpu.matmul %79, %81, %cst_59 {dimension_numbers = #tpu.dot_dimension_numbers<[1], [0], [0], [1], [0, 0, 1, 1], [], []>} : vector<16x16xbf16>, vector<16x16xbf16>, vector<16x16xf32> -> vector<16x16xf32>
    %89 = arith.addf %87, %88 : vector<16x16xf32>
    %90 = vector.extract_strided_slice %14 {offsets = [10, 0], sizes = [16, 16], strides = [1, 1]} : vector<27x16xf32> to vector<16x16xf32>
    %91 = arith.truncf %90 : vector<16x16xf32> to vector<16x16xbf16>
    %92 = arith.extf %91 : vector<16x16xbf16> to vector<16x16xf32>
    %93 = arith.subf %90, %92 : vector<16x16xf32>
    %94 = arith.truncf %93 : vector<16x16xf32> to vector<16x16xbf16>
    %c5 = arith.constant 5 : index
    %c0_60 = arith.constant 0 : index
    %c0_61 = arith.constant 0 : index
    %95 = vector.load %arg1[%c5, %c0_60, %c0_61] : memref<14x16x16xbf16, #tpu.memory_space<vmem>>, vector<1x16x16xbf16>
    %96 = vector.shape_cast %95 : vector<1x16x16xbf16> to vector<16x16xbf16>
    %c5_62 = arith.constant 5 : index
    %c0_63 = arith.constant 0 : index
    %c0_64 = arith.constant 0 : index
    %97 = vector.load %arg2[%c5_62, %c0_63, %c0_64] : memref<14x16x16xbf16, #tpu.memory_space<vmem>>, vector<1x16x16xbf16>
    %98 = vector.shape_cast %97 : vector<1x16x16xbf16> to vector<16x16xbf16>
    %cst_65 = arith.constant dense<0.000000e+00> : vector<16x16xf32>
    %99 = tpu.matmul %91, %96, %cst_65 {dimension_numbers = #tpu.dot_dimension_numbers<[1], [0], [0], [1], [0, 0, 1, 1], [], []>} : vector<16x16xbf16>, vector<16x16xbf16>, vector<16x16xf32> -> vector<16x16xf32>
    %100 = arith.addf %89, %99 : vector<16x16xf32>
    %cst_66 = arith.constant dense<0.000000e+00> : vector<16x16xf32>
    %101 = tpu.matmul %91, %98, %cst_66 {dimension_numbers = #tpu.dot_dimension_numbers<[1], [0], [0], [1], [0, 0, 1, 1], [], []>} : vector<16x16xbf16>, vector<16x16xbf16>, vector<16x16xf32> -> vector<16x16xf32>
    %102 = arith.addf %100, %101 : vector<16x16xf32>
    %cst_67 = arith.constant dense<0.000000e+00> : vector<16x16xf32>
    %103 = tpu.matmul %94, %96, %cst_67 {dimension_numbers = #tpu.dot_dimension_numbers<[1], [0], [0], [1], [0, 0, 1, 1], [], []>} : vector<16x16xbf16>, vector<16x16xbf16>, vector<16x16xf32> -> vector<16x16xf32>
    %104 = arith.addf %102, %103 : vector<16x16xf32>
    %105 = vector.extract_strided_slice %14 {offsets = [11, 0], sizes = [16, 16], strides = [1, 1]} : vector<27x16xf32> to vector<16x16xf32>
    %106 = arith.truncf %105 : vector<16x16xf32> to vector<16x16xbf16>
    %107 = arith.extf %106 : vector<16x16xbf16> to vector<16x16xf32>
    %108 = arith.subf %105, %107 : vector<16x16xf32>
    %109 = arith.truncf %108 : vector<16x16xf32> to vector<16x16xbf16>
    %c6 = arith.constant 6 : index
    %c0_68 = arith.constant 0 : index
    %c0_69 = arith.constant 0 : index
    %110 = vector.load %arg1[%c6, %c0_68, %c0_69] : memref<14x16x16xbf16, #tpu.memory_space<vmem>>, vector<1x16x16xbf16>
    %111 = vector.shape_cast %110 : vector<1x16x16xbf16> to vector<16x16xbf16>
    %c6_70 = arith.constant 6 : index
    %c0_71 = arith.constant 0 : index
    %c0_72 = arith.constant 0 : index
    %112 = vector.load %arg2[%c6_70, %c0_71, %c0_72] : memref<14x16x16xbf16, #tpu.memory_space<vmem>>, vector<1x16x16xbf16>
    %113 = vector.shape_cast %112 : vector<1x16x16xbf16> to vector<16x16xbf16>
    %cst_73 = arith.constant dense<0.000000e+00> : vector<16x16xf32>
    %114 = tpu.matmul %106, %111, %cst_73 {dimension_numbers = #tpu.dot_dimension_numbers<[1], [0], [0], [1], [0, 0, 1, 1], [], []>} : vector<16x16xbf16>, vector<16x16xbf16>, vector<16x16xf32> -> vector<16x16xf32>
    %115 = arith.addf %104, %114 : vector<16x16xf32>
    %cst_74 = arith.constant dense<0.000000e+00> : vector<16x16xf32>
    %116 = tpu.matmul %106, %113, %cst_74 {dimension_numbers = #tpu.dot_dimension_numbers<[1], [0], [0], [1], [0, 0, 1, 1], [], []>} : vector<16x16xbf16>, vector<16x16xbf16>, vector<16x16xf32> -> vector<16x16xf32>
    %117 = arith.addf %115, %116 : vector<16x16xf32>
    %cst_75 = arith.constant dense<0.000000e+00> : vector<16x16xf32>
    %118 = tpu.matmul %109, %111, %cst_75 {dimension_numbers = #tpu.dot_dimension_numbers<[1], [0], [0], [1], [0, 0, 1, 1], [], []>} : vector<16x16xbf16>, vector<16x16xbf16>, vector<16x16xf32> -> vector<16x16xf32>
    %119 = arith.addf %117, %118 : vector<16x16xf32>
    %c1_76 = arith.constant 1 : index
    %c0_77 = arith.constant 0 : index
    %c0_78 = arith.constant 0 : index
    %120 = vector.load %arg5[%c1_76, %c0_77, %c0_78] : memref<2x27x16xf32, #tpu.memory_space<vmem>>, vector<1x27x16xf32>
    %121 = vector.shape_cast %120 : vector<1x27x16xf32> to vector<27x16xf32>
    %122 = vector.extract_strided_slice %121 {offsets = [5, 0], sizes = [16, 16], strides = [1, 1]} : vector<27x16xf32> to vector<16x16xf32>
    %123 = arith.truncf %122 : vector<16x16xf32> to vector<16x16xbf16>
    %124 = arith.extf %123 : vector<16x16xbf16> to vector<16x16xf32>
    %125 = arith.subf %122, %124 : vector<16x16xf32>
    %126 = arith.truncf %125 : vector<16x16xf32> to vector<16x16xbf16>
    %c7 = arith.constant 7 : index
    %c0_79 = arith.constant 0 : index
    %c0_80 = arith.constant 0 : index
    %127 = vector.load %arg1[%c7, %c0_79, %c0_80] : memref<14x16x16xbf16, #tpu.memory_space<vmem>>, vector<1x16x16xbf16>
    %128 = vector.shape_cast %127 : vector<1x16x16xbf16> to vector<16x16xbf16>
    %c7_81 = arith.constant 7 : index
    %c0_82 = arith.constant 0 : index
    %c0_83 = arith.constant 0 : index
    %129 = vector.load %arg2[%c7_81, %c0_82, %c0_83] : memref<14x16x16xbf16, #tpu.memory_space<vmem>>, vector<1x16x16xbf16>
    %130 = vector.shape_cast %129 : vector<1x16x16xbf16> to vector<16x16xbf16>
    %cst_84 = arith.constant dense<0.000000e+00> : vector<16x16xf32>
    %131 = tpu.matmul %123, %128, %cst_84 {dimension_numbers = #tpu.dot_dimension_numbers<[1], [0], [0], [1], [0, 0, 1, 1], [], []>} : vector<16x16xbf16>, vector<16x16xbf16>, vector<16x16xf32> -> vector<16x16xf32>
    %132 = arith.addf %119, %131 : vector<16x16xf32>
    %cst_85 = arith.constant dense<0.000000e+00> : vector<16x16xf32>
    %133 = tpu.matmul %123, %130, %cst_85 {dimension_numbers = #tpu.dot_dimension_numbers<[1], [0], [0], [1], [0, 0, 1, 1], [], []>} : vector<16x16xbf16>, vector<16x16xbf16>, vector<16x16xf32> -> vector<16x16xf32>
    %134 = arith.addf %132, %133 : vector<16x16xf32>
    %cst_86 = arith.constant dense<0.000000e+00> : vector<16x16xf32>
    %135 = tpu.matmul %126, %128, %cst_86 {dimension_numbers = #tpu.dot_dimension_numbers<[1], [0], [0], [1], [0, 0, 1, 1], [], []>} : vector<16x16xbf16>, vector<16x16xbf16>, vector<16x16xf32> -> vector<16x16xf32>
    %136 = arith.addf %134, %135 : vector<16x16xf32>
    %137 = vector.extract_strided_slice %121 {offsets = [6, 0], sizes = [16, 16], strides = [1, 1]} : vector<27x16xf32> to vector<16x16xf32>
    %138 = arith.truncf %137 : vector<16x16xf32> to vector<16x16xbf16>
    %139 = arith.extf %138 : vector<16x16xbf16> to vector<16x16xf32>
    %140 = arith.subf %137, %139 : vector<16x16xf32>
    %141 = arith.truncf %140 : vector<16x16xf32> to vector<16x16xbf16>
    %c8_87 = arith.constant 8 : index
    %c0_88 = arith.constant 0 : index
    %c0_89 = arith.constant 0 : index
    %142 = vector.load %arg1[%c8_87, %c0_88, %c0_89] : memref<14x16x16xbf16, #tpu.memory_space<vmem>>, vector<1x16x16xbf16>
    %143 = vector.shape_cast %142 : vector<1x16x16xbf16> to vector<16x16xbf16>
    %c8_90 = arith.constant 8 : index
    %c0_91 = arith.constant 0 : index
    %c0_92 = arith.constant 0 : index
    %144 = vector.load %arg2[%c8_90, %c0_91, %c0_92] : memref<14x16x16xbf16, #tpu.memory_space<vmem>>, vector<1x16x16xbf16>
    %145 = vector.shape_cast %144 : vector<1x16x16xbf16> to vector<16x16xbf16>
    %cst_93 = arith.constant dense<0.000000e+00> : vector<16x16xf32>
    %146 = tpu.matmul %138, %143, %cst_93 {dimension_numbers = #tpu.dot_dimension_numbers<[1], [0], [0], [1], [0, 0, 1, 1], [], []>} : vector<16x16xbf16>, vector<16x16xbf16>, vector<16x16xf32> -> vector<16x16xf32>
    %147 = arith.addf %136, %146 : vector<16x16xf32>
    %cst_94 = arith.constant dense<0.000000e+00> : vector<16x16xf32>
    %148 = tpu.matmul %138, %145, %cst_94 {dimension_numbers = #tpu.dot_dimension_numbers<[1], [0], [0], [1], [0, 0, 1, 1], [], []>} : vector<16x16xbf16>, vector<16x16xbf16>, vector<16x16xf32> -> vector<16x16xf32>
    %149 = arith.addf %147, %148 : vector<16x16xf32>
    %cst_95 = arith.constant dense<0.000000e+00> : vector<16x16xf32>
    %150 = tpu.matmul %141, %143, %cst_95 {dimension_numbers = #tpu.dot_dimension_numbers<[1], [0], [0], [1], [0, 0, 1, 1], [], []>} : vector<16x16xbf16>, vector<16x16xbf16>, vector<16x16xf32> -> vector<16x16xf32>
    %151 = arith.addf %149, %150 : vector<16x16xf32>
    %152 = vector.extract_strided_slice %121 {offsets = [7, 0], sizes = [16, 16], strides = [1, 1]} : vector<27x16xf32> to vector<16x16xf32>
    %153 = arith.truncf %152 : vector<16x16xf32> to vector<16x16xbf16>
    %154 = arith.extf %153 : vector<16x16xbf16> to vector<16x16xf32>
    %155 = arith.subf %152, %154 : vector<16x16xf32>
    %156 = arith.truncf %155 : vector<16x16xf32> to vector<16x16xbf16>
    %c9 = arith.constant 9 : index
    %c0_96 = arith.constant 0 : index
    %c0_97 = arith.constant 0 : index
    %157 = vector.load %arg1[%c9, %c0_96, %c0_97] : memref<14x16x16xbf16, #tpu.memory_space<vmem>>, vector<1x16x16xbf16>
    %158 = vector.shape_cast %157 : vector<1x16x16xbf16> to vector<16x16xbf16>
    %c9_98 = arith.constant 9 : index
    %c0_99 = arith.constant 0 : index
    %c0_100 = arith.constant 0 : index
    %159 = vector.load %arg2[%c9_98, %c0_99, %c0_100] : memref<14x16x16xbf16, #tpu.memory_space<vmem>>, vector<1x16x16xbf16>
    %160 = vector.shape_cast %159 : vector<1x16x16xbf16> to vector<16x16xbf16>
    %cst_101 = arith.constant dense<0.000000e+00> : vector<16x16xf32>
    %161 = tpu.matmul %153, %158, %cst_101 {dimension_numbers = #tpu.dot_dimension_numbers<[1], [0], [0], [1], [0, 0, 1, 1], [], []>} : vector<16x16xbf16>, vector<16x16xbf16>, vector<16x16xf32> -> vector<16x16xf32>
    %162 = arith.addf %151, %161 : vector<16x16xf32>
    %cst_102 = arith.constant dense<0.000000e+00> : vector<16x16xf32>
    %163 = tpu.matmul %153, %160, %cst_102 {dimension_numbers = #tpu.dot_dimension_numbers<[1], [0], [0], [1], [0, 0, 1, 1], [], []>} : vector<16x16xbf16>, vector<16x16xbf16>, vector<16x16xf32> -> vector<16x16xf32>
    %164 = arith.addf %162, %163 : vector<16x16xf32>
    %cst_103 = arith.constant dense<0.000000e+00> : vector<16x16xf32>
    %165 = tpu.matmul %156, %158, %cst_103 {dimension_numbers = #tpu.dot_dimension_numbers<[1], [0], [0], [1], [0, 0, 1, 1], [], []>} : vector<16x16xbf16>, vector<16x16xbf16>, vector<16x16xf32> -> vector<16x16xf32>
    %166 = arith.addf %164, %165 : vector<16x16xf32>
    %167 = vector.extract_strided_slice %121 {offsets = [8, 0], sizes = [16, 16], strides = [1, 1]} : vector<27x16xf32> to vector<16x16xf32>
    %168 = arith.truncf %167 : vector<16x16xf32> to vector<16x16xbf16>
    %169 = arith.extf %168 : vector<16x16xbf16> to vector<16x16xf32>
    %170 = arith.subf %167, %169 : vector<16x16xf32>
    %171 = arith.truncf %170 : vector<16x16xf32> to vector<16x16xbf16>
    %c10 = arith.constant 10 : index
    %c0_104 = arith.constant 0 : index
    %c0_105 = arith.constant 0 : index
    %172 = vector.load %arg1[%c10, %c0_104, %c0_105] : memref<14x16x16xbf16, #tpu.memory_space<vmem>>, vector<1x16x16xbf16>
    %173 = vector.shape_cast %172 : vector<1x16x16xbf16> to vector<16x16xbf16>
    %c10_106 = arith.constant 10 : index
    %c0_107 = arith.constant 0 : index
    %c0_108 = arith.constant 0 : index
    %174 = vector.load %arg2[%c10_106, %c0_107, %c0_108] : memref<14x16x16xbf16, #tpu.memory_space<vmem>>, vector<1x16x16xbf16>
    %175 = vector.shape_cast %174 : vector<1x16x16xbf16> to vector<16x16xbf16>
    %cst_109 = arith.constant dense<0.000000e+00> : vector<16x16xf32>
    %176 = tpu.matmul %168, %173, %cst_109 {dimension_numbers = #tpu.dot_dimension_numbers<[1], [0], [0], [1], [0, 0, 1, 1], [], []>} : vector<16x16xbf16>, vector<16x16xbf16>, vector<16x16xf32> -> vector<16x16xf32>
    %177 = arith.addf %166, %176 : vector<16x16xf32>
    %cst_110 = arith.constant dense<0.000000e+00> : vector<16x16xf32>
    %178 = tpu.matmul %168, %175, %cst_110 {dimension_numbers = #tpu.dot_dimension_numbers<[1], [0], [0], [1], [0, 0, 1, 1], [], []>} : vector<16x16xbf16>, vector<16x16xbf16>, vector<16x16xf32> -> vector<16x16xf32>
    %179 = arith.addf %177, %178 : vector<16x16xf32>
    %cst_111 = arith.constant dense<0.000000e+00> : vector<16x16xf32>
    %180 = tpu.matmul %171, %173, %cst_111 {dimension_numbers = #tpu.dot_dimension_numbers<[1], [0], [0], [1], [0, 0, 1, 1], [], []>} : vector<16x16xbf16>, vector<16x16xbf16>, vector<16x16xf32> -> vector<16x16xf32>
    %181 = arith.addf %179, %180 : vector<16x16xf32>
    %182 = vector.extract_strided_slice %121 {offsets = [9, 0], sizes = [16, 16], strides = [1, 1]} : vector<27x16xf32> to vector<16x16xf32>
    %183 = arith.truncf %182 : vector<16x16xf32> to vector<16x16xbf16>
    %184 = arith.extf %183 : vector<16x16xbf16> to vector<16x16xf32>
    %185 = arith.subf %182, %184 : vector<16x16xf32>
    %186 = arith.truncf %185 : vector<16x16xf32> to vector<16x16xbf16>
    %c11 = arith.constant 11 : index
    %c0_112 = arith.constant 0 : index
    %c0_113 = arith.constant 0 : index
    %187 = vector.load %arg1[%c11, %c0_112, %c0_113] : memref<14x16x16xbf16, #tpu.memory_space<vmem>>, vector<1x16x16xbf16>
    %188 = vector.shape_cast %187 : vector<1x16x16xbf16> to vector<16x16xbf16>
    %c11_114 = arith.constant 11 : index
    %c0_115 = arith.constant 0 : index
    %c0_116 = arith.constant 0 : index
    %189 = vector.load %arg2[%c11_114, %c0_115, %c0_116] : memref<14x16x16xbf16, #tpu.memory_space<vmem>>, vector<1x16x16xbf16>
    %190 = vector.shape_cast %189 : vector<1x16x16xbf16> to vector<16x16xbf16>
    %cst_117 = arith.constant dense<0.000000e+00> : vector<16x16xf32>
    %191 = tpu.matmul %183, %188, %cst_117 {dimension_numbers = #tpu.dot_dimension_numbers<[1], [0], [0], [1], [0, 0, 1, 1], [], []>} : vector<16x16xbf16>, vector<16x16xbf16>, vector<16x16xf32> -> vector<16x16xf32>
    %192 = arith.addf %181, %191 : vector<16x16xf32>
    %cst_118 = arith.constant dense<0.000000e+00> : vector<16x16xf32>
    %193 = tpu.matmul %183, %190, %cst_118 {dimension_numbers = #tpu.dot_dimension_numbers<[1], [0], [0], [1], [0, 0, 1, 1], [], []>} : vector<16x16xbf16>, vector<16x16xbf16>, vector<16x16xf32> -> vector<16x16xf32>
    %194 = arith.addf %192, %193 : vector<16x16xf32>
    %cst_119 = arith.constant dense<0.000000e+00> : vector<16x16xf32>
    %195 = tpu.matmul %186, %188, %cst_119 {dimension_numbers = #tpu.dot_dimension_numbers<[1], [0], [0], [1], [0, 0, 1, 1], [], []>} : vector<16x16xbf16>, vector<16x16xbf16>, vector<16x16xf32> -> vector<16x16xf32>
    %196 = arith.addf %194, %195 : vector<16x16xf32>
    %197 = vector.extract_strided_slice %121 {offsets = [10, 0], sizes = [16, 16], strides = [1, 1]} : vector<27x16xf32> to vector<16x16xf32>
    %198 = arith.truncf %197 : vector<16x16xf32> to vector<16x16xbf16>
    %199 = arith.extf %198 : vector<16x16xbf16> to vector<16x16xf32>
    %200 = arith.subf %197, %199 : vector<16x16xf32>
    %201 = arith.truncf %200 : vector<16x16xf32> to vector<16x16xbf16>
    %c12 = arith.constant 12 : index
    %c0_120 = arith.constant 0 : index
    %c0_121 = arith.constant 0 : index
    %202 = vector.load %arg1[%c12, %c0_120, %c0_121] : memref<14x16x16xbf16, #tpu.memory_space<vmem>>, vector<1x16x16xbf16>
    %203 = vector.shape_cast %202 : vector<1x16x16xbf16> to vector<16x16xbf16>
    %c12_122 = arith.constant 12 : index
    %c0_123 = arith.constant 0 : index
    %c0_124 = arith.constant 0 : index
    %204 = vector.load %arg2[%c12_122, %c0_123, %c0_124] : memref<14x16x16xbf16, #tpu.memory_space<vmem>>, vector<1x16x16xbf16>
    %205 = vector.shape_cast %204 : vector<1x16x16xbf16> to vector<16x16xbf16>
    %cst_125 = arith.constant dense<0.000000e+00> : vector<16x16xf32>
    %206 = tpu.matmul %198, %203, %cst_125 {dimension_numbers = #tpu.dot_dimension_numbers<[1], [0], [0], [1], [0, 0, 1, 1], [], []>} : vector<16x16xbf16>, vector<16x16xbf16>, vector<16x16xf32> -> vector<16x16xf32>
    %207 = arith.addf %196, %206 : vector<16x16xf32>
    %cst_126 = arith.constant dense<0.000000e+00> : vector<16x16xf32>
    %208 = tpu.matmul %198, %205, %cst_126 {dimension_numbers = #tpu.dot_dimension_numbers<[1], [0], [0], [1], [0, 0, 1, 1], [], []>} : vector<16x16xbf16>, vector<16x16xbf16>, vector<16x16xf32> -> vector<16x16xf32>
    %209 = arith.addf %207, %208 : vector<16x16xf32>
    %cst_127 = arith.constant dense<0.000000e+00> : vector<16x16xf32>
    %210 = tpu.matmul %201, %203, %cst_127 {dimension_numbers = #tpu.dot_dimension_numbers<[1], [0], [0], [1], [0, 0, 1, 1], [], []>} : vector<16x16xbf16>, vector<16x16xbf16>, vector<16x16xf32> -> vector<16x16xf32>
    %211 = arith.addf %209, %210 : vector<16x16xf32>
    %212 = vector.extract_strided_slice %121 {offsets = [11, 0], sizes = [16, 16], strides = [1, 1]} : vector<27x16xf32> to vector<16x16xf32>
    %213 = arith.truncf %212 : vector<16x16xf32> to vector<16x16xbf16>
    %214 = arith.extf %213 : vector<16x16xbf16> to vector<16x16xf32>
    %215 = arith.subf %212, %214 : vector<16x16xf32>
    %216 = arith.truncf %215 : vector<16x16xf32> to vector<16x16xbf16>
    %c13 = arith.constant 13 : index
    %c0_128 = arith.constant 0 : index
    %c0_129 = arith.constant 0 : index
    %217 = vector.load %arg1[%c13, %c0_128, %c0_129] : memref<14x16x16xbf16, #tpu.memory_space<vmem>>, vector<1x16x16xbf16>
    %218 = vector.shape_cast %217 : vector<1x16x16xbf16> to vector<16x16xbf16>
    %c13_130 = arith.constant 13 : index
    %c0_131 = arith.constant 0 : index
    %c0_132 = arith.constant 0 : index
    %219 = vector.load %arg2[%c13_130, %c0_131, %c0_132] : memref<14x16x16xbf16, #tpu.memory_space<vmem>>, vector<1x16x16xbf16>
    %220 = vector.shape_cast %219 : vector<1x16x16xbf16> to vector<16x16xbf16>
    %cst_133 = arith.constant dense<0.000000e+00> : vector<16x16xf32>
    %221 = tpu.matmul %213, %218, %cst_133 {dimension_numbers = #tpu.dot_dimension_numbers<[1], [0], [0], [1], [0, 0, 1, 1], [], []>} : vector<16x16xbf16>, vector<16x16xbf16>, vector<16x16xf32> -> vector<16x16xf32>
    %222 = arith.addf %211, %221 : vector<16x16xf32>
    %cst_134 = arith.constant dense<0.000000e+00> : vector<16x16xf32>
    %223 = tpu.matmul %213, %220, %cst_134 {dimension_numbers = #tpu.dot_dimension_numbers<[1], [0], [0], [1], [0, 0, 1, 1], [], []>} : vector<16x16xbf16>, vector<16x16xbf16>, vector<16x16xf32> -> vector<16x16xf32>
    %224 = arith.addf %222, %223 : vector<16x16xf32>
    %cst_135 = arith.constant dense<0.000000e+00> : vector<16x16xf32>
    %225 = tpu.matmul %216, %218, %cst_135 {dimension_numbers = #tpu.dot_dimension_numbers<[1], [0], [0], [1], [0, 0, 1, 1], [], []>} : vector<16x16xbf16>, vector<16x16xbf16>, vector<16x16xf32> -> vector<16x16xf32>
    %226 = arith.addf %224, %225 : vector<16x16xf32>
    %227 = arith.negf %226 : vector<16x16xf32>
    %228 = math.exp %227 : vector<16x16xf32>
    %cst_136 = arith.constant 1.000000e+00 : f32
    %229 = vector.broadcast %cst_136 : f32 to vector<16x16xf32>
    %230 = arith.addf %229, %228 : vector<16x16xf32>
    %231 = arith.divf %229, %230 : vector<16x16xf32>
    %c0_137 = arith.constant 0 : index
    %c0_138 = arith.constant 0 : index
    %c0_139 = arith.constant 0 : index
    %c0_140 = arith.constant 0 : index
    %232 = vector.load %arg4[%c0_137, %c0_138, %c0_139, %c0_140] : memref<1x1x16x16xf32, #tpu.memory_space<vmem>>, vector<1x1x16x16xf32>
    %233 = vector.shape_cast %232 : vector<1x1x16x16xf32> to vector<16x16xf32>
    %234 = vector.shape_cast %231 : vector<16x16xf32> to vector<1x1x16x16xf32>
    tpu.vector_store %arg4[%c0_137, %c0_138, %c0_139, %c0_140], %234 {strides = array<i32>} : memref<1x1x16x16xf32, #tpu.memory_space<vmem>>, vector<1x1x16x16xf32>,
    return
  }
  func.func @transform_0(%arg0: i32) -> (i32, i32, i32) {
    %c0_i32 = arith.constant 0 : i32
    %c0_i32_0 = arith.constant 0 : i32
    %c0_i32_1 = arith.constant 0 : i32
    %c0_i32_2 = arith.constant 0 : i32
    return %c0_i32, %c0_i32_0, %c0_i32_1 : i32, i32, i32
  }
  func.func @transform_1(%arg0: i32) -> (i32, i32, i32) {
    %c0_i32 = arith.constant 0 : i32
    %c0_i32_0 = arith.constant 0 : i32
    %c0_i32_1 = arith.constant 0 : i32
    %c0_i32_2 = arith.constant 0 : i32
    return %c0_i32, %c0_i32_0, %c0_i32_1 : i32, i32, i32
  }
  func.func @transform_2(%arg0: i32) -> (i32, i32, i32, i32) {
    %c0_i32 = arith.constant 0 : i32
    %c0_i32_0 = arith.constant 0 : i32
    %c0_i32_1 = arith.constant 0 : i32
    %c0_i32_2 = arith.constant 0 : i32
    return %arg0, %c0_i32, %c0_i32_0, %c0_i32_1 : i32, i32, i32, i32
  }
  func.func @transform_3(%arg0: i32) -> (i32, i32, i32, i32) {
    %c0_i32 = arith.constant 0 : i32
    %c0_i32_0 = arith.constant 0 : i32
    %c0_i32_1 = arith.constant 0 : i32
    %c0_i32_2 = arith.constant 0 : i32
    return %arg0, %c0_i32, %c0_i32_0, %c0_i32_1 : i32, i32, i32, i32
  }
}

</mosaic_0001>

<llo_original>
// kernel: spatial_attention.2
$region0: #{spatial_attention.2}
  #allocation0 [shape = 'u32[]', space=smem, size = 0x4, offset = 0x4, fixed_abs, tag = 'smem constant byte address 0x4 - core index']
  #allocation1 [shape = 'u32[144,128]{1,0:T(1,128)}', space=vmem, size = 0x12000, scoped, tag = 'internal scratch']
  %s0 = inlined_call_operand.vmem [shape: f32[2,4,256], index: 0, kind: input, shape index: {}]
  %s1 = inlined_call_operand.vmem [shape: f32[2,2,256], index: 1, kind: output, shape index: {}]
  %s2 = sld [smem:[#allocation0]]
  $region37: #{spatial_attention.2} parent=0
    _
  %s4 = ssub.s32 1, %s2
  %s5 = scalar_select 0, %s4, %s2
  loop: start=0, step=1, limit=4
  $region2: #{spatial_attention.2} parent=0 // loop_pre_header
    _
  $region3: #{spatial_attention.2} parent=0 // loop_header
    %s7 = sphi 0, %s11
    %p8 = scmp.ge.s32.totalorder %s7, 4
    %s14 = sphi 0, %s26
    %s15 = sphi 0, %s22
    %s16 = sphi 0, %s14
    %s17 = sphi 0, %s15
    %s18 = sphi 0, %s16
    %s19 = sphi 0, %s17
    %s31 = sphi 0, %s33
    %s34 = sphi 0, %s31
    %s35 = sphi 0, %s34
    %s51 = sphi 0, %s35
    %s59 = sphi 0, %s61
    %s62 = sphi 0, %s59
    %s63 = sphi 0, %s62
    %s79 = sphi 0, %s63
  $region4: #{spatial_attention.2} parent=0 // loop_header_branch
    %10 = sbr.rel (%p8) target = $region8
  $region5: #{spatial_attention.2} parent=0 // loop_body
    %s12 = ssub.s32 %s7, 1
    %s13 = ssub.s32 %s7, 2
    %s20 = sadd.s32 1, %s15
    %p21 = scmp.ge.s32.totalorder %s20, 1
    %s22 = scalar_select %p21, 0, %s20
    %s23 = sadd.s32 1, %s14
    %s24 = scalar_select %p21, %s23, %s14
    %p25 = scmp.ge.s32.totalorder %s24, 2
    %s26 = scalar_select %p25, 0, %s24
    %s27 = ssub.s32 %s14, %s26
    %s28 = ssub.s32 %s15, %s22
    %s29 = sor.u32 %s27, %s28
    %p30 = scmp.eq.s32.totalorder %s29, 0
    %s32 = sadd.s32 %s31, 1
    %s33 = scalar_select %p30, %s31, %s32
    %p36 = pneg %p30
    %p37 = scmp.eq.s32.totalorder %s7, 1
    %p38 = por %p36, %p37
    %p39 = scmp.ne.s32.totalorder %s31, %s34
    %p40 = scmp.eq.s32.totalorder %s7, 0
    %p41 = por %p39, %p40
    %p42 = scmp.ne.s32.totalorder %s31, %s34
    %p43 = scmp.eq.s32.totalorder %s12, 1
    %p44 = por %p42, %p43
    %p45 = scmp.ne.s32.totalorder %s34, %s35
    %p46 = scmp.eq.s32.totalorder %s12, 0
    %p47 = por %p45, %p46
    %p48 = scmp.ne.s32.totalorder %s34, %s35
    %p49 = scmp.eq.s32.totalorder %s13, 1
    %p50 = por %p48, %p49
    %p52 = scmp.ne.s32.totalorder %s35, %s51
    %p53 = scmp.eq.s32.totalorder %s13, 0
    %p54 = por %p52, %p53
    %s55 = ssub.s32 %s14, %s26
    %s56 = ssub.s32 %s15, %s22
    %s57 = sor.u32 %s55, %s56
    %p58 = scmp.eq.s32.totalorder %s57, 0
    %s60 = sadd.s32 %s59, 1
    %s61 = scalar_select %p58, %s59, %s60
    %p64 = pneg %p58
    %p65 = scmp.eq.s32.totalorder %s7, 1
    %p66 = por %p64, %p65
    %p67 = scmp.ne.s32.totalorder %s59, %s62
    %p68 = scmp.eq.s32.totalorder %s7, 0
    %p69 = por %p67, %p68
    %p70 = scmp.ne.s32.totalorder %s59, %s62
    %p71 = scmp.eq.s32.totalorder %s12, 1
    %p72 = por %p70, %p71
    %p73 = scmp.ne.s32.totalorder %s62, %s63
    %p74 = scmp.eq.s32.totalorder %s12, 0
    %p75 = por %p73, %p74
    %p76 = scmp.ne.s32.totalorder %s62, %s63
    %p77 = scmp.eq.s32.totalorder %s13, 1
    %p78 = por %p76, %p77
    %p80 = scmp.ne.s32.totalorder %s63, %s79
    %p81 = scmp.eq.s32.totalorder %s13, 0
    %p82 = por %p80, %p81
    %p83 = scmp.le.s32.totalorder 1, %s7
    %p84 = scmp.lt.s32.totalorder %s7, 3
    %p85 = pnand %p83, %p84
    %p86 = pneg %p85
    // Predicated region
    $region9: #{spatial_attention.2} parent=5 // pred_check
      _
    $region10: #{spatial_attention.2} parent=5 // pred_check_branch
      %88 = sbr.rel (%p85) target = $region12
    $region11: #{spatial_attention.2} parent=5 // pred_region
      %s89 = ssub.s32 %s7, 1
    $region12: #{spatial_attention.2} parent=5 // pred_fallthru
      _
    %p90 = scmp.lt.s32.totalorder %s7, 2
    // Predicated region
    $region13: #{spatial_attention.2} parent=5 // pred_check
      %p91 = pneg %p90
    $region14: #{spatial_attention.2} parent=5 // pred_check_branch
      %93 = sbr.rel (%p91) target = $region16
    $region15: #{spatial_attention.2} parent=5 // pred_region
      // Predicated region
      $region17: #{spatial_attention.2} parent=15 // pred_check
        %p94 = pneg %p41
      $region18: #{spatial_attention.2} parent=15 // pred_check_branch
        %96 = sbr.rel (%p94) target = $region20
      $region19: #{spatial_attention.2} parent=15 // pred_region
        %s97 = smul.u32 2, %s15
        %p98 = scmp.lt.s32.totalorder %s14, 1
        %s99 = scalar_select %p98, %s14, 1
        %p100 = scmp.lt.s32.totalorder %s97, 1
        %s101 = scalar_select %p100, %s97, 1
        %s102 = smul.addr %s99, 2
        %s103 = sadd.s32 %s101, %s102
        %s104 = smul.addr %s103, 4
        %s105 = scalar_lea.vmem %s0, %s104
        %s106 = smul.u32 2, %s15
      $region20: #{spatial_attention.2} parent=15 // pred_fallthru
        _
    $region16: #{spatial_attention.2} parent=5 // pred_fallthru
      _
    %p107 = scmp.le.s32.totalorder 1, %s7
    %p108 = scmp.lt.s32.totalorder %s7, 3
    %p109 = pnand %p107, %p108
    %p110 = pneg %p109
    // Predicated region
    $region21: #{spatial_attention.2} parent=5 // pred_check
      _
    $region22: #{spatial_attention.2} parent=5 // pred_check_branch
      %112 = sbr.rel (%p109) target = $region24
    $region23: #{spatial_attention.2} parent=5 // pred_region
      %s113 = ssub.s32 %s7, 1
      %s114 = smul.u32 2, %s17
      %p115 = scmp.lt.s32.totalorder %s16, 1
      %s116 = scalar_select %p115, %s16, 1
      %p117 = scmp.lt.s32.totalorder %s114, 1
      %s118 = scalar_select %p117, %s114, 1
      %s119 = smul.addr %s116, 2
      %s120 = sadd.s32 %s118, %s119
      %s121 = smul.addr %s120, 4
      %s122 = scalar_lea.vmem %s0, %s121
      %p123 = pneg %p47
      %p124 = pneg %p44
      %p125 = pneg %p75
      %p126 = pneg %p72
      %s127 = smul.u32 2, %s17
      %p128 = scmp.lt.s32.totalorder %s16, 1
      %s129 = scalar_select %p128, %s16, 1
      %p130 = scmp.lt.s32.totalorder %s127, 1
      %s131 = scalar_select %p130, %s127, 1
      %s132 = smul.addr %s129, 2
      %s133 = sadd.s32 %s131, %s132
      %s134 = smul.addr %s133, 2
      %s135 = scalar_lea.vmem %s1, %s134
      %s136 = smul.u32 2, %s17
      %p137 = scmp.lt.s32.totalorder %s16, 1
      %s138 = scalar_select %p137, %s16, 1
      %p139 = scmp.lt.s32.totalorder %s136, 1
      %s140 = scalar_select %p139, %s136, 1
      %s141 = smul.addr %s138, 2
      %s142 = sadd.s32 %s140, %s141
      %s143 = smul.addr %s142, 4
      %s144 = scalar_lea.vmem %s0, %s143
      %s145 = smul.u32 2, %s17
      %s146 = smul.u32 2, %s17
      %p147 = scmp.lt.s32.totalorder %s16, 1
      %s148 = scalar_select %p147, %s16, 1
      %p149 = scmp.lt.s32.totalorder %s146, 1
      %s150 = scalar_select %p149, %s146, 1
      %s151 = smul.addr %s148, 2
      %s152 = sadd.s32 %s150, %s151
      %s153 = smul.addr %s152, 2
      %s154 = scalar_lea.vmem %s1, %s153
      %s155 = smul.u32 2, %s17
      %v156 = vld [vmem:[%s144] sm:$0xff]
      %v158 = vcombine.high %v156, %v156
      %vm160 = vcmask 1043456
      %v161 = vsel %vm160, %v156, 0.0
      %v162 = vrot.slane %v161, 4
      %v163 = vadd.f32 %v161, %v162
      %v164 = vrot.slane %v163, 2
      %v165 = vadd.f32 %v163, %v164
      %v166 = vrot.slane %v165, 1
      %v167 = vadd.f32 %v165, %v166
      %v168 = vsel %vm160, %v158, 0.0
      %v169 = vrot.slane %v168, 4
      %v170 = vadd.f32 %v168, %v169
      %v171 = vrot.slane %v170, 2
      %v172 = vadd.f32 %v170, %v171
      %v173 = vrot.slane %v172, 1
      %v174 = vadd.f32 %v172, %v173
      %v175 = vsel %vm160, %v156, -inf
      %v176 = vrot.slane %v175, 4
      %v177 = vmax.f32 %v175, %v176
      %v178 = vrot.slane %v177, 2
      %v179 = vmax.f32 %v177, %v178
      %v180 = vrot.slane %v179, 1
      %v181 = vmax.f32 %v179, %v180
      %v182 = vsel %vm160, %v158, -inf
      %v183 = vrot.slane %v182, 4
      %v184 = vmax.f32 %v182, %v183
      %v185 = vrot.slane %v184, 2
      %v186 = vmax.f32 %v184, %v185
      %v187 = vrot.slane %v186, 1
      %v188 = vmax.f32 %v186, %v187
      %v189 = vrcp.pop 4.0
      %v190 = vmul.f32 %v167, %v189
      %v191 = vmul.f32 %v174, %v189
      %v194 = vcombine.low %v190, %v191
      %v196 = vunpack.c.l.s4 1966171168
      %v197 = vunpack.c.0.s8 %v196
      %v198 = vlaneseq
      %v199 = vshrl.u32 %v198, 7
      %v200 = vsub.s32 %v197, %v199
      %v201 = vrot.slane %v194, %v200
      %v203 = vunpack.c.l.s4 1966171168
      %v204 = vunpack.c.0.s8 %v203
      %v205 = vlaneseq
      %v206 = vshrl.u32 %v205, 7
      %v207 = vsub.s32 %v204, %v206
      %v208 = vrot.slane %v201, %v207
      %v210 = vlaneseq
      %vm211 = vcmp.ge.s32.totalorder %v210, 0
      %vm212 = vcmp.lt.s32.totalorder %v210, 256
      %vm213 = vmand %vm211, %vm212
      %214 = vst.msk [vmem:[%s154] ss:$2 sm:$0x3] %vm213, %v208
      %v217 = vcombine.low %v181, %v188
      %v219 = vunpack.c.l.s4 1966171168
      %v220 = vunpack.c.0.s8 %v219
      %v221 = vlaneseq
      %v222 = vshrl.u32 %v221, 7
      %v223 = vsub.s32 %v220, %v222
      %v224 = vrot.slane %v217, %v223
      %v226 = vunpack.c.l.s4 1966171168
      %v227 = vunpack.c.0.s8 %v226
      %v228 = vlaneseq
      %v229 = vshrl.u32 %v228, 7
      %v230 = vsub.s32 %v227, %v229
      %v231 = vrot.slane %v224, %v230
      %s233 = scalar_lea.vmem %s154, 1
      %234 = vst.msk [vmem:[%s233] ss:$2 sm:$0x3] %vm213, %v231
      %s235 = smul.u32 2, %s17
      %p236 = scmp.lt.s32.totalorder %s16, 1
      %s237 = scalar_select %p236, %s16, 1
      %p238 = scmp.lt.s32.totalorder %s235, 1
      %s239 = scalar_select %p238, %s235, 1
      %s240 = smul.addr %s237, 2
      %s241 = sadd.s32 %s239, %s240
      %s242 = smul.addr %s241, 2
      %s243 = scalar_lea.vmem %s1, %s242
      // Predicated region
      $region25: #{spatial_attention.2} parent=23 // pred_check
        %p244 = pneg %p72
      $region26: #{spatial_attention.2} parent=23 // pred_check_branch
        %246 = sbr.rel (%p244) target = $region28
      $region27: #{spatial_attention.2} parent=23 // pred_region
        %s247 = smul.u32 2, %s17
      $region28: #{spatial_attention.2} parent=23 // pred_fallthru
        _
    $region24: #{spatial_attention.2} parent=5 // pred_fallthru
      _
    %p248 = scmp.le.s32.totalorder 2, %s7
    // Predicated region
    $region29: #{spatial_attention.2} parent=5 // pred_check
      %p249 = pneg %p248
    $region30: #{spatial_attention.2} parent=5 // pred_check_branch
      %251 = sbr.rel (%p249) target = $region32
    $region31: #{spatial_attention.2} parent=5 // pred_region
      %s252 = ssub.s32 %s7, 2
      // Predicated region
      $region33: #{spatial_attention.2} parent=31 // pred_check
        %p253 = pneg %p78
      $region34: #{spatial_attention.2} parent=31 // pred_check_branch
        %255 = sbr.rel (%p253) target = $region36
      $region35: #{spatial_attention.2} parent=31 // pred_region
        %s256 = smul.u32 2, %s19
        %p257 = scmp.lt.s32.totalorder %s18, 1
        %s258 = scalar_select %p257, %s18, 1
        %p259 = scmp.lt.s32.totalorder %s256, 1
        %s260 = scalar_select %p259, %s256, 1
        %s261 = smul.addr %s258, 2
        %s262 = sadd.s32 %s260, %s261
        %s263 = smul.addr %s262, 2
        %s264 = scalar_lea.vmem %s1, %s263
      $region36: #{spatial_attention.2} parent=31 // pred_fallthru
        _
    $region32: #{spatial_attention.2} parent=5 // pred_fallthru
      _
  $region6: #{spatial_attention.2} parent=0 // loop_footer
    %s11 = sadd.s32 1, %s7
  $region7: #{spatial_attention.2} parent=0 // loop_footer_branch
    %6 = sbr.rel target = $region3
  $region8: #{spatial_attention.2} parent=0 // loop_exit
    _

// kernel: spatial_attention.3
$region0: #{spatial_attention.3}
  #allocation0 [shape = 'u32[]', space=smem, size = 0x4, offset = 0x4, fixed_abs, tag = 'smem constant byte address 0x4 - core index']
  #allocation1 [shape = 'u32[144,128]{1,0:T(1,128)}', space=vmem, size = 0x12000, scoped, tag = 'internal scratch']
  #allocation2 [shape = 'f32[2,27,16]{2,1,0:T(8,128)}', space=vmem, size = 0x8000, scoped, tag = 'scratch operand']
  %s0 = inlined_call_operand.vmem [shape: bf16[14,16,16], index: 0, kind: input, shape index: {}]
  %s1 = inlined_call_operand.vmem [shape: bf16[14,16,16], index: 1, kind: input, shape index: {}]
  %s2 = inlined_call_operand.vmem [shape: f32[2,2,16,16], index: 2, kind: input, shape index: {}]
  %s3 = inlined_call_operand.hbm [shape: f32[2,1,16,16], index: 3, kind: output, shape index: {}]
  %s4 = sld [smem:[#allocation0]]
  $region45: #{spatial_attention.3} parent=0
    _
  %s6 = ssub.s32 1, %s4
  %s7 = scalar_select 0, %s6, %s4
  $region1: #{spatial_attention.3} parent=0
    #allocation3 [shape = 'u8[16384]{0}', space=vmem, size = 0x4000, scoped, tag = 'output window, operand 0']
    #allocation4 [shape = 's32[2]{0}', space=sflag, size = 0x8, scoped, tag = 'scoped memory for spatial_attention.3']
    %8 = vsyncpa [#allocation4], 0
    %s9 = scalar_lea.sflag [#allocation4], 1
    %10 = vsyncpa %s9, 0
    loop: start=0, step=1, limit=4
    $region2: #{spatial_attention.3} parent=1 // loop_pre_header
      _
    $region3: #{spatial_attention.3} parent=1 // loop_header
      %s12 = sphi 0, %s16
      %p13 = scmp.ge.s32.totalorder %s12, 4
      %s20 = sphi 0, %s20
      %s22 = sphi 0, %s20
      %s23 = sphi 0, %s22
      %s37 = sphi 0, %s23
      %s41 = sphi 0, %s41
      %s43 = sphi 0, %s41
      %s44 = sphi 0, %s43
      %s58 = sphi 0, %s44
      %s64 = sphi 0, %s66
      %s67 = sphi 0, %s64
      %s68 = sphi 0, %s67
      %s84 = sphi 0, %s68
      %s90 = sphi 0, %s92
      %s93 = sphi 0, %s90
      %s94 = sphi 0, %s93
      %s110 = sphi 0, %s94
    $region4: #{spatial_attention.3} parent=1 // loop_header_branch
      %15 = sbr.rel (%p13) target = $region8
    $region5: #{spatial_attention.3} parent=1 // loop_body
      %s17 = ssub.s32 %s12, 1
      %s18 = ssub.s32 %s12, 2
      %s19 = sadd.s32 %s12, 1
      %s21 = sadd.s32 %s20, 1
      %p24 = scmp.eq.s32.totalorder %s12, 1
      %p25 = scmp.ne.s32.totalorder %s20, %s22
      %p26 = scmp.eq.s32.totalorder %s12, 0
      %p27 = por %p25, %p26
      %p28 = scmp.ne.s32.totalorder %s20, %s22
      %p29 = scmp.eq.s32.totalorder %s17, 1
      %p30 = por %p28, %p29
      %p31 = scmp.ne.s32.totalorder %s22, %s23
      %p32 = scmp.eq.s32.totalorder %s17, 0
      %p33 = por %p31, %p32
      %p34 = scmp.ne.s32.totalorder %s22, %s23
      %p35 = scmp.eq.s32.totalorder %s18, 1
      %p36 = por %p34, %p35
      %p38 = scmp.ne.s32.totalorder %s23, %s37
      %p39 = scmp.eq.s32.totalorder %s18, 0
      %p40 = por %p38, %p39
      %s42 = sadd.s32 %s41, 1
      %p45 = scmp.eq.s32.totalorder %s12, 1
      %p46 = scmp.ne.s32.totalorder %s41, %s43
      %p47 = scmp.eq.s32.totalorder %s12, 0
      %p48 = por %p46, %p47
      %p49 = scmp.ne.s32.totalorder %s41, %s43
      %p50 = scmp.eq.s32.totalorder %s17, 1
      %p51 = por %p49, %p50
      %p52 = scmp.ne.s32.totalorder %s43, %s44
      %p53 = scmp.eq.s32.totalorder %s17, 0
      %p54 = por %p52, %p53
      %p55 = scmp.ne.s32.totalorder %s43, %s44
      %p56 = scmp.eq.s32.totalorder %s18, 1
      %p57 = por %p55, %p56
      %p59 = scmp.ne.s32.totalorder %s44, %s58
      %p60 = scmp.eq.s32.totalorder %s18, 0
      %p61 = por %p59, %p60
      %s62 = ssub.s32 %s12, %s19
      %p63 = scmp.eq.s32.totalorder %s62, 0
      %s65 = sadd.s32 %s64, 1
      %s66 = scalar_select %p63, %s64, %s65
      %p69 = pneg %p63
      %p70 = scmp.eq.s32.totalorder %s12, 1
      %p71 = por %p69, %p70
      %p72 = scmp.ne.s32.totalorder %s64, %s67
      %p73 = scmp.eq.s32.totalorder %s12, 0
      %p74 = por %p72, %p73
      %p75 = scmp.ne.s32.totalorder %s64, %s67
      %p76 = scmp.eq.s32.totalorder %s17, 1
      %p77 = por %p75, %p76
      %p78 = scmp.ne.s32.totalorder %s67, %s68
      %p79 = scmp.eq.s32.totalorder %s17, 0
      %p80 = por %p78, %p79
      %p81 = scmp.ne.s32.totalorder %s67, %s68
      %p82 = scmp.eq.s32.totalorder %s18, 1
      %p83 = por %p81, %p82
      %p85 = scmp.ne.s32.totalorder %s68, %s84
      %p86 = scmp.eq.s32.totalorder %s18, 0
      %p87 = por %p85, %p86
      %s88 = ssub.s32 %s12, %s19
      %p89 = scmp.eq.s32.totalorder %s88, 0
      %s91 = sadd.s32 %s90, 1
      %s92 = scalar_select %p89, %s90, %s91
      %p95 = pneg %p89
      %p96 = scmp.eq.s32.totalorder %s12, 1
      %p97 = por %p95, %p96
      %p98 = scmp.ne.s32.totalorder %s90, %s93
      %p99 = scmp.eq.s32.totalorder %s12, 0
      %p100 = por %p98, %p99
      %p101 = scmp.ne.s32.totalorder %s90, %s93
      %p102 = scmp.eq.s32.totalorder %s17, 1
      %p103 = por %p101, %p102
      %p104 = scmp.ne.s32.totalorder %s93, %s94
      %p105 = scmp.eq.s32.totalorder %s17, 0
      %p106 = por %p104, %p105
      %p107 = scmp.ne.s32.totalorder %s93, %s94
      %p108 = scmp.eq.s32.totalorder %s18, 1
      %p109 = por %p107, %p108
      %p111 = scmp.ne.s32.totalorder %s94, %s110
      %p112 = scmp.eq.s32.totalorder %s18, 0
      %p113 = por %p111, %p112
      %p114 = scmp.le.s32.totalorder 1, %s12
      %p115 = scmp.lt.s32.totalorder %s12, 3
      %p116 = pnand %p114, %p115
      %p117 = pneg %p116
      // Predicated region
      $region9: #{spatial_attention.3} parent=5 // pred_check
        _
      $region10: #{spatial_attention.3} parent=5 // pred_check_branch
        %119 = sbr.rel (%p116) target = $region12
      $region11: #{spatial_attention.3} parent=5 // pred_region
        %s120 = ssub.s32 %s12, 1
        // Predicated region
        $region13: #{spatial_attention.3} parent=11 // pred_check
          %p121 = pneg %p33
        $region14: #{spatial_attention.3} parent=11 // pred_check_branch
          %123 = sbr.rel (%p121) target = $region16
        $region15: #{spatial_attention.3} parent=11 // pred_region
          _
        $region16: #{spatial_attention.3} parent=11 // pred_fallthru
          _
        // Predicated region
        $region17: #{spatial_attention.3} parent=11 // pred_check
          %p124 = pneg %p54
        $region18: #{spatial_attention.3} parent=11 // pred_check_branch
          %126 = sbr.rel (%p124) target = $region20
        $region19: #{spatial_attention.3} parent=11 // pred_region
          _
        $region20: #{spatial_attention.3} parent=11 // pred_fallthru
          _
      $region12: #{spatial_attention.3} parent=5 // pred_fallthru
        _
      %p127 = scmp.lt.s32.totalorder %s12, 2
      // Predicated region
      $region21: #{spatial_attention.3} parent=5 // pred_check
        %p128 = pneg %p127
      $region22: #{spatial_attention.3} parent=5 // pred_check_branch
        %130 = sbr.rel (%p128) target = $region24
      $region23: #{spatial_attention.3} parent=5 // pred_region
        // Predicated region
        $region25: #{spatial_attention.3} parent=23 // pred_check
          %p131 = pneg %p74
        $region26: #{spatial_attention.3} parent=23 // pred_check_branch
          %133 = sbr.rel (%p131) target = $region28
        $region27: #{spatial_attention.3} parent=23 // pred_region
          %p134 = scmp.lt.s32.totalorder %s12, 1
          %s135 = scalar_select %p134, %s12, 1
          %s136 = smul.addr %s135, 4
          %s137 = smul.addr %s136, 8
          %s138 = scalar_lea.vmem %s2, %s137
        $region28: #{spatial_attention.3} parent=23 // pred_fallthru
          _
      $region24: #{spatial_attention.3} parent=5 // pred_fallthru
        _
      %p139 = scmp.le.s32.totalorder 1, %s12
      %p140 = scmp.lt.s32.totalorder %s12, 3
      %p141 = pnand %p139, %p140
      %p142 = pneg %p141
      // Predicated region
      $region29: #{spatial_attention.3} parent=5 // pred_check
        _
      $region30: #{spatial_attention.3} parent=5 // pred_check_branch
        %144 = sbr.rel (%p141) target = $region32
      $region31: #{spatial_attention.3} parent=5 // pred_region
        %s145 = ssub.s32 %s12, 1
        %p146 = pneg %p33
        %p147 = pneg %p30
        %p148 = pneg %p54
        %p149 = pneg %p51
        %p150 = scmp.lt.s32.totalorder %s17, 1
        %s151 = scalar_select %p150, %s17, 1
        %s152 = smul.addr %s151, 4
        %s153 = smul.addr %s152, 8
        %s154 = scalar_lea.vmem %s2, %s153
        %p155 = pneg %p80
        %p156 = pneg %p77
        %p157 = pneg %p106
        %p158 = pneg %p103
        %s159 = sand.u32 %s93, 1
        %s160 = scalar_lea.sflag [#allocation4], %s159
        %s161 = sand.u32 %s93, 1
        %s162 = smul.addr %s161, 16
        %s163 = scalar_lea.vmem [#allocation3], %s162
        %p164 = scmp.lt.s32.totalorder %s17, 1
        %s165 = scalar_select %p164, %s17, 1
        %s166 = smul.addr %s165, 4
        %s167 = smul.addr %s166, 8
        %s168 = scalar_lea.vmem %s2, %s167
        %vm170 = vcmask 130048
        %171 = vst.msk [vmem:[#allocation2] sm:$0xff] %vm170, 0.0
        %172 = vst.msk [vmem:[#allocation2 + $0x8] sm:$0xff] %vm170, 0.0
        %173 = vst.msk [vmem:[#allocation2 + $0x10] sm:$0xff] %vm170, 0.0
        %vm174 = vcmask 124928
        %175 = vst.msk [vmem:[#allocation2 + $0x18] sm:$0x7] %vm174, 0.0
        %176 = vst.msk [vmem:[#allocation2 + $0x20] sm:$0xff] %vm170, 0.0
        %177 = vst.msk [vmem:[#allocation2 + $0x28] sm:$0xff] %vm170, 0.0
        %178 = vst.msk [vmem:[#allocation2 + $0x30] sm:$0xff] %vm170, 0.0
        %179 = vst.msk [vmem:[#allocation2 + $0x38] sm:$0x7] %vm174, 0.0
        %v180 = vld [vmem:[%s168] sm:$0xff]
        %v181 = vld [vmem:[%s168 + $0x8] sm:$0xff]
        %182 = vst.msk [vmem:[#allocation2 + $0x8] sm:$0xff] %vm170, %v180
        %183 = vst.msk [vmem:[#allocation2 + $0x10] sm:$0xff] %vm170, %v181
        %s184 = scalar_lea.vmem %s168, 16
        %v185 = vld [vmem:[%s184] sm:$0xff]
        %v186 = vld [vmem:[%s184 + $0x8] sm:$0xff]
        %s187 = scalar_lea.vmem [#allocation2], 32
        %188 = vst.msk [vmem:[%s187 + $0x8] sm:$0xff] %vm170, %v185
        %189 = vst.msk [vmem:[%s187 + $0x10] sm:$0xff] %vm170, %v186
        %v190 = vld [vmem:[#allocation2] sm:$0xff]
        %v191 = vld [vmem:[#allocation2 + $0x8] sm:$0xff]
        %v192 = vld [vmem:[#allocation2 + $0x10] sm:$0xff]
        %v193 = vld [vmem:[#allocation2 + $0x18] sm:$0x7]
        %v194 = vpack.c.bf16 %v191, %v190
        %v195 = vpack.c.bf16 %v192, %v192
        %v196 = vunpack.c.l.bf16 %v194
        %v197 = vunpack.c.h.bf16 %v194
        %v198 = vunpack.c.l.bf16 %v195
        %v199 = vsub.f32 %v190, %v196
        %v200 = vsub.f32 %v191, %v197
        %v201 = vsub.f32 %v192, %v198
        %v202 = vpack.c.bf16 %v200, %v199
        %v203 = vpack.c.bf16 %v201, %v201
        %v204 = vld [vmem:[%s0] sm:$0xf]
        %v205 = vld [vmem:[%s0 + $0x4] sm:$0xf]
        %v206 = vld [vmem:[%s1] sm:$0xf]
        %v207 = vld [vmem:[%s1 + $0x4] sm:$0xf]
        %vm208 = vsmask.f32 5376
        %v210 = vshrl.u32 %v194, 16
        %v212 = vrot.slane %v210, 2
        %v213 = vshll.u32 %v194, 16
        %v215 = vrot.slane %v213, 3
        %v216 = vor.u32 %v212, %v215
        %v218 = vshrl.u32 %v195, 16
        %v220 = vrot.slane %v218, 2
        %v221 = vshll.u32 %v195, 16
        %v223 = vrot.slane %v221, 3
        %v224 = vor.u32 %v220, %v223
        %v225 = vsel %vm208, %v216, %v224
        %v228 = vunpack.c.l.b16 %v206
        %v229 = vunpack.c.l.b16 %v207
        %v230 = vpack.c.b16 %v229, %v228
        %v233 = vsel %vm170, %v225, 0
        %235 = vmatprep.subr.bf16.mxu0 0
        %236 = vmatpush1.bf16.msra.mxu0 %v230
        %237 = vmatprep.subr.bf16.mxu0 0
        %238 = vmatpush1.bf16.msra.mxu0 0
        %239 = vmatprep.subr.bf16.mxu0 0
        %240 = vmatpush1.bf16.msra.mxu0 0
        %241 = vmatprep.subr.bf16.mxu0 0
        %242 = vmatpush1.bf16.msra.mxu0 0
        %243 = vmatprep.subr.bf16.mxu0 0
        %244 = vmatpush1.bf16.msra.mxu0 0
        %245 = vmatprep.subr.bf16.mxu0 0
        %246 = vmatpush1.bf16.msra.mxu0 0
        %247 = vmatprep.subr.bf16.mxu0 0
        %248 = vmatpush1.bf16.msra.mxu0 0
        %249 = vmatprep.subr.bf16.mxu0 0
        %250 = vmatpush1.bf16.msra.mxu0 0
        %251 = vmatprep.subr.bf16.mxu0 0
        %252 = vmatpush1.bf16.msra.mxu0 0
        %253 = vmatprep.subr.bf16.mxu0 0
        %254 = vmatpush1.bf16.msra.mxu0 0
        %255 = vmatprep.subr.bf16.mxu0 0
        %256 = vmatpush1.bf16.msra.mxu0 0
        %257 = vmatprep.subr.bf16.mxu0 0
        %258 = vmatpush1.bf16.msra.mxu0 0
        %259 = vmatprep.subr.bf16.mxu0 0
        %260 = vmatpush1.bf16.msra.mxu0 0
        %261 = vmatprep.subr.bf16.mxu0 0
        %262 = vmatpush1.bf16.msra.mxu0 0
        %263 = vmatprep.subr.bf16.mxu0 0
        %264 = vmatpush1.bf16.msra.mxu0 0
        %265 = vmatprep.subr.bf16.mxu0 0
        %266 = vmatpush1.bf16.msra.mxu0 0
        %267 = vmatprep.mubr.bf16.mxu0 0
        %268 = vmatmul.mubr.bf16.gmra.mrb[0].mxu0 %v233
        %v269 = vpop.f32.mrb[0].mxu0
        %v270 = vadd.f32 0.0, %v269
        %v271 = vpop.f32.mrb[0].mxu0
        %v272 = vpop.f32.mrb[0].mxu0
        %v273 = vadd.f32 0.0, %v272
        %v274 = vpop.f32.mrb[0].mxu0
        %275 = vdwg.mxu0
        %v278 = vunpack.c.l.b16 %v204
        %v279 = vunpack.c.l.b16 %v205
        %v280 = vpack.c.b16 %v279, %v278
        %282 = vmatprep.subr.bf16.mxu0 0
        %283 = vmatpush1.bf16.msra.mxu0 %v280
        %284 = vmatprep.subr.bf16.mxu0 0
        %285 = vmatpush1.bf16.msra.mxu0 0
        %286 = vmatprep.subr.bf16.mxu0 0
        %287 = vmatpush1.bf16.msra.mxu0 0
        %288 = vmatprep.subr.bf16.mxu0 0
        %289 = vmatpush1.bf16.msra.mxu0 0
        %290 = vmatprep.subr.bf16.mxu0 0
        %291 = vmatpush1.bf16.msra.mxu0 0
        %292 = vmatprep.subr.bf16.mxu0 0
        %293 = vmatpush1.bf16.msra.mxu0 0
        %294 = vmatprep.subr.bf16.mxu0 0
        %295 = vmatpush1.bf16.msra.mxu0 0
        %296 = vmatprep.subr.bf16.mxu0 0
        %297 = vmatpush1.bf16.msra.mxu0 0
        %298 = vmatprep.subr.bf16.mxu0 0
        %299 = vmatpush1.bf16.msra.mxu0 0
        %300 = vmatprep.subr.bf16.mxu0 0
        %301 = vmatpush1.bf16.msra.mxu0 0
        %302 = vmatprep.subr.bf16.mxu0 0
        %303 = vmatpush1.bf16.msra.mxu0 0
        %304 = vmatprep.subr.bf16.mxu0 0
        %305 = vmatpush1.bf16.msra.mxu0 0
        %306 = vmatprep.subr.bf16.mxu0 0
        %307 = vmatpush1.bf16.msra.mxu0 0
        %308 = vmatprep.subr.bf16.mxu0 0
        %309 = vmatpush1.bf16.msra.mxu0 0
        %310 = vmatprep.subr.bf16.mxu0 0
        %311 = vmatpush1.bf16.msra.mxu0 0
        %312 = vmatprep.subr.bf16.mxu0 0
        %313 = vmatpush1.bf16.msra.mxu0 0
        %314 = vmatprep.mubr.bf16.mxu0 0
        %315 = vmatmul.mubr.bf16.gmra.mrb[0].mxu0 %v233
        %v316 = vpop.f32.mrb[0].mxu0
        %v317 = vadd.f32 %v270, %v316
        %v318 = vpop.f32.mrb[0].mxu0
        %v319 = vpop.f32.mrb[0].mxu0
        %v320 = vadd.f32 %v273, %v319
        %v321 = vpop.f32.mrb[0].mxu0
        %322 = vdwg.mxu0
        %v324 = vshrl.u32 %v202, 16
        %v326 = vrot.slane %v324, 2
        %v327 = vshll.u32 %v202, 16
        %v329 = vrot.slane %v327, 3
        %v330 = vor.u32 %v326, %v329
        %v332 = vshrl.u32 %v203, 16
        %v334 = vrot.slane %v332, 2
        %v335 = vshll.u32 %v203, 16
        %v337 = vrot.slane %v335, 3
        %v338 = vor.u32 %v334, %v337
        %v339 = vsel %vm208, %v330, %v338
        %v341 = vsel %vm170, %v339, 0
        %343 = vmatprep.subr.bf16.mxu0 0
        %344 = vmatpush1.bf16.msra.mxu0 %v280
        %345 = vmatprep.subr.bf16.mxu0 0
        %346 = vmatpush1.bf16.msra.mxu0 0
        %347 = vmatprep.subr.bf16.mxu0 0
        %348 = vmatpush1.bf16.msra.mxu0 0
        %349 = vmatprep.subr.bf16.mxu0 0
        %350 = vmatpush1.bf16.msra.mxu0 0
        %351 = vmatprep.subr.bf16.mxu0 0
        %352 = vmatpush1.bf16.msra.mxu0 0
        %353 = vmatprep.subr.bf16.mxu0 0
        %354 = vmatpush1.bf16.msra.mxu0 0
        %355 = vmatprep.subr.bf16.mxu0 0
        %356 = vmatpush1.bf16.msra.mxu0 0
        %357 = vmatprep.subr.bf16.mxu0 0
        %358 = vmatpush1.bf16.msra.mxu0 0
        %359 = vmatprep.subr.bf16.mxu0 0
        %360 = vmatpush1.bf16.msra.mxu0 0
        %361 = vmatprep.subr.bf16.mxu0 0
        %362 = vmatpush1.bf16.msra.mxu0 0
        %363 = vmatprep.subr.bf16.mxu0 0
        %364 = vmatpush1.bf16.msra.mxu0 0
        %365 = vmatprep.subr.bf16.mxu0 0
        %366 = vmatpush1.bf16.msra.mxu0 0
        %367 = vmatprep.subr.bf16.mxu0 0
        %368 = vmatpush1.bf16.msra.mxu0 0
        %369 = vmatprep.subr.bf16.mxu0 0
        %370 = vmatpush1.bf16.msra.mxu0 0
        %371 = vmatprep.subr.bf16.mxu0 0
        %372 = vmatpush1.bf16.msra.mxu0 0
        %373 = vmatprep.subr.bf16.mxu0 0
        %374 = vmatpush1.bf16.msra.mxu0 0
        %375 = vmatprep.mubr.bf16.mxu0 0
        %376 = vmatmul.mubr.bf16.gmra.mrb[0].mxu0 %v341
        %v377 = vpop.f32.mrb[0].mxu0
        %v378 = vadd.f32 0.0, %v377
        %v379 = vpop.f32.mrb[0].mxu0
        %v380 = vpop.f32.mrb[0].mxu0
        %v381 = vadd.f32 0.0, %v380
        %v382 = vpop.f32.mrb[0].mxu0
        %383 = vdwg.mxu0
        %v384 = vadd.f32 %v317, %v378
        %v385 = vadd.f32 %v320, %v381
        %s386 = scalar_lea.vmem %s0, 8
        %v387 = vld [vmem:[%s386] sm:$0xf]
        %v388 = vld [vmem:[%s386 + $0x4] sm:$0xf]
        %s389 = scalar_lea.vmem %s1, 8
        %v390 = vld [vmem:[%s389] sm:$0xf]
        %v391 = vld [vmem:[%s389 + $0x4] sm:$0xf]
        %vm394 = vcmask 1044480
        %v395 = vrot.slane %v194, 3
        %v396 = vrot.slane %v195, 3
        %v397 = vsel %vm394, %v395, %v396
        %v400 = vunpack.c.l.b16 %v387
        %v401 = vunpack.c.l.b16 %v388
        %v402 = vpack.c.b16 %v401, %v400
        %v405 = vsel %vm170, %v397, 0
        %407 = vmatprep.subr.bf16.mxu0 0
        %408 = vmatpush1.bf16.msra.mxu0 %v402
        %409 = vmatprep.subr.bf16.mxu0 0
        %410 = vmatpush1.bf16.msra.mxu0 0
        %411 = vmatprep.subr.bf16.mxu0 0
        %412 = vmatpush1.bf16.msra.mxu0 0
        %413 = vmatprep.subr.bf16.mxu0 0
        %414 = vmatpush1.bf16.msra.mxu0 0
        %415 = vmatprep.subr.bf16.mxu0 0
        %416 = vmatpush1.bf16.msra.mxu0 0
        %417 = vmatprep.subr.bf16.mxu0 0
        %418 = vmatpush1.bf16.msra.mxu0 0
        %419 = vmatprep.subr.bf16.mxu0 0
        %420 = vmatpush1.bf16.msra.mxu0 0
        %421 = vmatprep.subr.bf16.mxu0 0
        %422 = vmatpush1.bf16.msra.mxu0 0
        %423 = vmatprep.subr.bf16.mxu0 0
        %424 = vmatpush1.bf16.msra.mxu0 0
        %425 = vmatprep.subr.bf16.mxu0 0
        %426 = vmatpush1.bf16.msra.mxu0 0
        %427 = vmatprep.subr.bf16.mxu0 0
        %428 = vmatpush1.bf16.msra.mxu0 0
        %429 = vmatprep.subr.bf16.mxu0 0
        %430 = vmatpush1.bf16.msra.mxu0 0
        %431 = vmatprep.subr.bf16.mxu0 0
        %432 = vmatpush1.bf16.msra.mxu0 0
        %433 = vmatprep.subr.bf16.mxu0 0
        %434 = vmatpush1.bf16.msra.mxu0 0
        %435 = vmatprep.subr.bf16.mxu0 0
        %436 = vmatpush1.bf16.msra.mxu0 0
        %437 = vmatprep.subr.bf16.mxu0 0
        %438 = vmatpush1.bf16.msra.mxu0 0
        %439 = vmatprep.mubr.bf16.mxu0 0
        %440 = vmatmul.mubr.bf16.gmra.mrb[0].mxu0 %v405
        %v441 = vpop.f32.mrb[0].mxu0
        %v442 = vadd.f32 0.0, %v441
        %v443 = vpop.f32.mrb[0].mxu0
        %v444 = vpop.f32.mrb[0].mxu0
        %v445 = vadd.f32 0.0, %v444
        %v446 = vpop.f32.mrb[0].mxu0
        %447 = vdwg.mxu0
        %v448 = vadd.f32 %v384, %v442
        %v449 = vadd.f32 %v385, %v445
        %v452 = vunpack.c.l.b16 %v390
        %v453 = vunpack.c.l.b16 %v391
        %v454 = vpack.c.b16 %v453, %v452
        %456 = vmatprep.subr.bf16.mxu0 0
        %457 = vmatpush1.bf16.msra.mxu0 %v454
        %458 = vmatprep.subr.bf16.mxu0 0
        %459 = vmatpush1.bf16.msra.mxu0 0
        %460 = vmatprep.subr.bf16.mxu0 0
        %461 = vmatpush1.bf16.msra.mxu0 0
        %462 = vmatprep.subr.bf16.mxu0 0
        %463 = vmatpush1.bf16.msra.mxu0 0
        %464 = vmatprep.subr.bf16.mxu0 0
        %465 = vmatpush1.bf16.msra.mxu0 0
        %466 = vmatprep.subr.bf16.mxu0 0
        %467 = vmatpush1.bf16.msra.mxu0 0
        %468 = vmatprep.subr.bf16.mxu0 0
        %469 = vmatpush1.bf16.msra.mxu0 0
        %470 = vmatprep.subr.bf16.mxu0 0
        %471 = vmatpush1.bf16.msra.mxu0 0
        %472 = vmatprep.subr.bf16.mxu0 0
        %473 = vmatpush1.bf16.msra.mxu0 0
        %474 = vmatprep.subr.bf16.mxu0 0
        %475 = vmatpush1.bf16.msra.mxu0 0
        %476 = vmatprep.subr.bf16.mxu0 0
        %477 = vmatpush1.bf16.msra.mxu0 0
        %478 = vmatprep.subr.bf16.mxu0 0
        %479 = vmatpush1.bf16.msra.mxu0 0
        %480 = vmatprep.subr.bf16.mxu0 0
        %481 = vmatpush1.bf16.msra.mxu0 0
        %482 = vmatprep.subr.bf16.mxu0 0
        %483 = vmatpush1.bf16.msra.mxu0 0
        %484 = vmatprep.subr.bf16.mxu0 0
        %485 = vmatpush1.bf16.msra.mxu0 0
        %486 = vmatprep.subr.bf16.mxu0 0
        %487 = vmatpush1.bf16.msra.mxu0 0
        %488 = vmatprep.mubr.bf16.mxu0 0
        %489 = vmatmul.mubr.bf16.gmra.mrb[0].mxu0 %v405
        %v490 = vpop.f32.mrb[0].mxu0
        %v491 = vadd.f32 0.0, %v490
        %v492 = vpop.f32.mrb[0].mxu0
        %v493 = vpop.f32.mrb[0].mxu0
        %v494 = vadd.f32 0.0, %v493
        %v495 = vpop.f32.mrb[0].mxu0
        %496 = vdwg.mxu0
        %v497 = vadd.f32 %v448, %v491
        %v498 = vadd.f32 %v449, %v494
        %v501 = vrot.slane %v202, 3
        %v502 = vrot.slane %v203, 3
        %v503 = vsel %vm394, %v501, %v502
        %v505 = vsel %vm170, %v503, 0
        %507 = vmatprep.subr.bf16.mxu0 0
        %508 = vmatpush1.bf16.msra.mxu0 %v402
        %509 = vmatprep.subr.bf16.mxu0 0
        %510 = vmatpush1.bf16.msra.mxu0 0
        %511 = vmatprep.subr.bf16.mxu0 0
        %512 = vmatpush1.bf16.msra.mxu0 0
        %513 = vmatprep.subr.bf16.mxu0 0
        %514 = vmatpush1.bf16.msra.mxu0 0
        %515 = vmatprep.subr.bf16.mxu0 0
        %516 = vmatpush1.bf16.msra.mxu0 0
        %517 = vmatprep.subr.bf16.mxu0 0
        %518 = vmatpush1.bf16.msra.mxu0 0
        %519 = vmatprep.subr.bf16.mxu0 0
        %520 = vmatpush1.bf16.msra.mxu0 0
        %521 = vmatprep.subr.bf16.mxu0 0
        %522 = vmatpush1.bf16.msra.mxu0 0
        %523 = vmatprep.subr.bf16.mxu0 0
        %524 = vmatpush1.bf16.msra.mxu0 0
        %525 = vmatprep.subr.bf16.mxu0 0
        %526 = vmatpush1.bf16.msra.mxu0 0
        %527 = vmatprep.subr.bf16.mxu0 0
        %528 = vmatpush1.bf16.msra.mxu0 0
        %529 = vmatprep.subr.bf16.mxu0 0
        %530 = vmatpush1.bf16.msra.mxu0 0
        %531 = vmatprep.subr.bf16.mxu0 0
        %532 = vmatpush1.bf16.msra.mxu0 0
        %533 = vmatprep.subr.bf16.mxu0 0
        %534 = vmatpush1.bf16.msra.mxu0 0
        %535 = vmatprep.subr.bf16.mxu0 0
        %536 = vmatpush1.bf16.msra.mxu0 0
        %537 = vmatprep.subr.bf16.mxu0 0
        %538 = vmatpush1.bf16.msra.mxu0 0
        %539 = vmatprep.mubr.bf16.mxu0 0
        %540 = vmatmul.mubr.bf16.gmra.mrb[0].mxu0 %v505
        %v541 = vpop.f32.mrb[0].mxu0
        %v542 = vadd.f32 0.0, %v541
        %v543 = vpop.f32.mrb[0].mxu0
        %v544 = vpop.f32.mrb[0].mxu0
        %v545 = vadd.f32 0.0, %v544
        %v546 = vpop.f32.mrb[0].mxu0
        %547 = vdwg.mxu0
        %v548 = vadd.f32 %v497, %v542
        %v549 = vadd.f32 %v498, %v545
        %s550 = scalar_lea.vmem %s0, 16
        %v551 = vld [vmem:[%s550] sm:$0xf]
        %v552 = vld [vmem:[%s550 + $0x4] sm:$0xf]
        %s553 = scalar_lea.vmem %s1, 16
        %v554 = vld [vmem:[%s553] sm:$0xf]
        %v555 = vld [vmem:[%s553 + $0x4] sm:$0xf]
        %vm556 = vsmask.f32 4352
        %v557 = vrot.slane %v210, 3
        %v558 = vrot.slane %v213, 4
        %v559 = vor.u32 %v557, %v558
        %v560 = vrot.slane %v218, 3
        %v561 = vrot.slane %v221, 4
        %v562 = vor.u32 %v560, %v561
        %v563 = vsel %vm556, %v559, %v562
        %v566 = vunpack.c.l.b16 %v551
        %v567 = vunpack.c.l.b16 %v552
        %v568 = vpack.c.b16 %v567, %v566
        %v571 = vsel %vm170, %v563, 0
        %573 = vmatprep.subr.bf16.mxu0 0
        %574 = vmatpush1.bf16.msra.mxu0 %v568
        %575 = vmatprep.subr.bf16.mxu0 0
        %576 = vmatpush1.bf16.msra.mxu0 0
        %577 = vmatprep.subr.bf16.mxu0 0
        %578 = vmatpush1.bf16.msra.mxu0 0
        %579 = vmatprep.subr.bf16.mxu0 0
        %580 = vmatpush1.bf16.msra.mxu0 0
        %581 = vmatprep.subr.bf16.mxu0 0
        %582 = vmatpush1.bf16.msra.mxu0 0
        %583 = vmatprep.subr.bf16.mxu0 0
        %584 = vmatpush1.bf16.msra.mxu0 0
        %585 = vmatprep.subr.bf16.mxu0 0
        %586 = vmatpush1.bf16.msra.mxu0 0
        %587 = vmatprep.subr.bf16.mxu0 0
        %588 = vmatpush1.bf16.msra.mxu0 0
        %589 = vmatprep.subr.bf16.mxu0 0
        %590 = vmatpush1.bf16.msra.mxu0 0
        %591 = vmatprep.subr.bf16.mxu0 0
        %592 = vmatpush1.bf16.msra.mxu0 0
        %593 = vmatprep.subr.bf16.mxu0 0
        %594 = vmatpush1.bf16.msra.mxu0 0
        %595 = vmatprep.subr.bf16.mxu0 0
        %596 = vmatpush1.bf16.msra.mxu0 0
        %597 = vmatprep.subr.bf16.mxu0 0
        %598 = vmatpush1.bf16.msra.mxu0 0
        %599 = vmatprep.subr.bf16.mxu0 0
        %600 = vmatpush1.bf16.msra.mxu0 0
        %601 = vmatprep.subr.bf16.mxu0 0
        %602 = vmatpush1.bf16.msra.mxu0 0
        %603 = vmatprep.subr.bf16.mxu0 0
        %604 = vmatpush1.bf16.msra.mxu0 0
        %605 = vmatprep.mubr.bf16.mxu0 0
        %606 = vmatmul.mubr.bf16.gmra.mrb[0].mxu0 %v571
        %v607 = vpop.f32.mrb[0].mxu0
        %v608 = vadd.f32 0.0, %v607
        %v609 = vpop.f32.mrb[0].mxu0
        %v610 = vpop.f32.mrb[0].mxu0
        %v611 = vadd.f32 0.0, %v610
        %v612 = vpop.f32.mrb[0].mxu0
        %613 = vdwg.mxu0
        %v614 = vadd.f32 %v548, %v608
        %v615 = vadd.f32 %v549, %v611
        %v618 = vunpack.c.l.b16 %v554
        %v619 = vunpack.c.l.b16 %v555
        %v620 = vpack.c.b16 %v619, %v618
        %622 = vmatprep.subr.bf16.mxu0 0
        %623 = vmatpush1.bf16.msra.mxu0 %v620
        %624 = vmatprep.subr.bf16.mxu0 0
        %625 = vmatpush1.bf16.msra.mxu0 0
        %626 = vmatprep.subr.bf16.mxu0 0
        %627 = vmatpush1.bf16.msra.mxu0 0
        %628 = vmatprep.subr.bf16.mxu0 0
        %629 = vmatpush1.bf16.msra.mxu0 0
        %630 = vmatprep.subr.bf16.mxu0 0
        %631 = vmatpush1.bf16.msra.mxu0 0
        %632 = vmatprep.subr.bf16.mxu0 0
        %633 = vmatpush1.bf16.msra.mxu0 0
        %634 = vmatprep.subr.bf16.mxu0 0
        %635 = vmatpush1.bf16.msra.mxu0 0
        %636 = vmatprep.subr.bf16.mxu0 0
        %637 = vmatpush1.bf16.msra.mxu0 0
        %638 = vmatprep.subr.bf16.mxu0 0
        %639 = vmatpush1.bf16.msra.mxu0 0
        %640 = vmatprep.subr.bf16.mxu0 0
        %641 = vmatpush1.bf16.msra.mxu0 0
        %642 = vmatprep.subr.bf16.mxu0 0
        %643 = vmatpush1.bf16.msra.mxu0 0
        %644 = vmatprep.subr.bf16.mxu0 0
        %645 = vmatpush1.bf16.msra.mxu0 0
        %646 = vmatprep.subr.bf16.mxu0 0
        %647 = vmatpush1.bf16.msra.mxu0 0
        %648 = vmatprep.subr.bf16.mxu0 0
        %649 = vmatpush1.bf16.msra.mxu0 0
        %650 = vmatprep.subr.bf16.mxu0 0
        %651 = vmatpush1.bf16.msra.mxu0 0
        %652 = vmatprep.subr.bf16.mxu0 0
        %653 = vmatpush1.bf16.msra.mxu0 0
        %654 = vmatprep.mubr.bf16.mxu0 0
        %655 = vmatmul.mubr.bf16.gmra.mrb[0].mxu0 %v571
        %v656 = vpop.f32.mrb[0].mxu0
        %v657 = vadd.f32 0.0, %v656
        %v658 = vpop.f32.mrb[0].mxu0
        %v659 = vpop.f32.mrb[0].mxu0
        %v660 = vadd.f32 0.0, %v659
        %v661 = vpop.f32.mrb[0].mxu0
        %662 = vdwg.mxu0
        %v663 = vadd.f32 %v614, %v657
        %v664 = vadd.f32 %v615, %v660
        %v665 = vrot.slane %v324, 3
        %v666 = vrot.slane %v327, 4
        %v667 = vor.u32 %v665, %v666
        %v668 = vrot.slane %v332, 3
        %v669 = vrot.slane %v335, 4
        %v670 = vor.u32 %v668, %v669
        %v671 = vsel %vm556, %v667, %v670
        %v673 = vsel %vm170, %v671, 0
        %675 = vmatprep.subr.bf16.mxu0 0
        %676 = vmatpush1.bf16.msra.mxu0 %v568
        %677 = vmatprep.subr.bf16.mxu0 0
        %678 = vmatpush1.bf16.msra.mxu0 0
        %679 = vmatprep.subr.bf16.mxu0 0
        %680 = vmatpush1.bf16.msra.mxu0 0
        %681 = vmatprep.subr.bf16.mxu0 0
        %682 = vmatpush1.bf16.msra.mxu0 0
        %683 = vmatprep.subr.bf16.mxu0 0
        %684 = vmatpush1.bf16.msra.mxu0 0
        %685 = vmatprep.subr.bf16.mxu0 0
        %686 = vmatpush1.bf16.msra.mxu0 0
        %687 = vmatprep.subr.bf16.mxu0 0
        %688 = vmatpush1.bf16.msra.mxu0 0
        %689 = vmatprep.subr.bf16.mxu0 0
        %690 = vmatpush1.bf16.msra.mxu0 0
        %691 = vmatprep.subr.bf16.mxu0 0
        %692 = vmatpush1.bf16.msra.mxu0 0
        %693 = vmatprep.subr.bf16.mxu0 0
        %694 = vmatpush1.bf16.msra.mxu0 0
        %695 = vmatprep.subr.bf16.mxu0 0
        %696 = vmatpush1.bf16.msra.mxu0 0
        %697 = vmatprep.subr.bf16.mxu0 0
        %698 = vmatpush1.bf16.msra.mxu0 0
        %699 = vmatprep.subr.bf16.mxu0 0
        %700 = vmatpush1.bf16.msra.mxu0 0
        %701 = vmatprep.subr.bf16.mxu0 0
        %702 = vmatpush1.bf16.msra.mxu0 0
        %703 = vmatprep.subr.bf16.mxu0 0
        %704 = vmatpush1.bf16.msra.mxu0 0
        %705 = vmatprep.subr.bf16.mxu0 0
        %706 = vmatpush1.bf16.msra.mxu0 0
        %707 = vmatprep.mubr.bf16.mxu0 0
        %708 = vmatmul.mubr.bf16.gmra.mrb[0].mxu0 %v673
        %v709 = vpop.f32.mrb[0].mxu0
        %v710 = vadd.f32 0.0, %v709
        %v711 = vpop.f32.mrb[0].mxu0
        %v712 = vpop.f32.mrb[0].mxu0
        %v713 = vadd.f32 0.0, %v712
        %v714 = vpop.f32.mrb[0].mxu0
        %715 = vdwg.mxu0
        %v716 = vadd.f32 %v663, %v710
        %v717 = vadd.f32 %v664, %v713
        %v718 = vpack.c.bf16 %v192, %v191
        %v719 = vunpack.c.l.bf16 %v718
        %v720 = vunpack.c.h.bf16 %v718
        %v721 = vsub.f32 %v191, %v719
        %v722 = vsub.f32 %v192, %v720
        %v723 = vpack.c.bf16 %v722, %v721
        %s724 = scalar_lea.vmem %s0, 24
        %v725 = vld [vmem:[%s724] sm:$0xf]
        %v726 = vld [vmem:[%s724 + $0x4] sm:$0xf]
        %s727 = scalar_lea.vmem %s1, 24
        %v728 = vld [vmem:[%s727] sm:$0xf]
        %v729 = vld [vmem:[%s727 + $0x4] sm:$0xf]
        %v732 = vunpack.c.l.b16 %v725
        %v733 = vunpack.c.l.b16 %v726
        %v734 = vpack.c.b16 %v733, %v732
        %v737 = vsel %vm170, %v718, 0
        %739 = vmatprep.subr.bf16.mxu0 0
        %740 = vmatpush1.bf16.msra.mxu0 %v734
        %741 = vmatprep.subr.bf16.mxu0 0
        %742 = vmatpush1.bf16.msra.mxu0 0
        %743 = vmatprep.subr.bf16.mxu0 0
        %744 = vmatpush1.bf16.msra.mxu0 0
        %745 = vmatprep.subr.bf16.mxu0 0
        %746 = vmatpush1.bf16.msra.mxu0 0
        %747 = vmatprep.subr.bf16.mxu0 0
        %748 = vmatpush1.bf16.msra.mxu0 0
        %749 = vmatprep.subr.bf16.mxu0 0
        %750 = vmatpush1.bf16.msra.mxu0 0
        %751 = vmatprep.subr.bf16.mxu0 0
        %752 = vmatpush1.bf16.msra.mxu0 0
        %753 = vmatprep.subr.bf16.mxu0 0
        %754 = vmatpush1.bf16.msra.mxu0 0
        %755 = vmatprep.subr.bf16.mxu0 0
        %756 = vmatpush1.bf16.msra.mxu0 0
        %757 = vmatprep.subr.bf16.mxu0 0
        %758 = vmatpush1.bf16.msra.mxu0 0
        %759 = vmatprep.subr.bf16.mxu0 0
        %760 = vmatpush1.bf16.msra.mxu0 0
        %761 = vmatprep.subr.bf16.mxu0 0
        %762 = vmatpush1.bf16.msra.mxu0 0
        %763 = vmatprep.subr.bf16.mxu0 0
        %764 = vmatpush1.bf16.msra.mxu0 0
        %765 = vmatprep.subr.bf16.mxu0 0
        %766 = vmatpush1.bf16.msra.mxu0 0
        %767 = vmatprep.subr.bf16.mxu0 0
        %768 = vmatpush1.bf16.msra.mxu0 0
        %769 = vmatprep.subr.bf16.mxu0 0
        %770 = vmatpush1.bf16.msra.mxu0 0
        %771 = vmatprep.mubr.bf16.mxu0 0
        %772 = vmatmul.mubr.bf16.gmra.mrb[0].mxu0 %v737
        %v773 = vpop.f32.mrb[0].mxu0
        %v774 = vadd.f32 0.0, %v773
        %v775 = vpop.f32.mrb[0].mxu0
        %v776 = vpop.f32.mrb[0].mxu0
        %v777 = vadd.f32 0.0, %v776
        %v778 = vpop.f32.mrb[0].mxu0
        %779 = vdwg.mxu0
        %v780 = vadd.f32 %v716, %v774
        %v781 = vadd.f32 %v717, %v777
        %v784 = vunpack.c.l.b16 %v728
        %v785 = vunpack.c.l.b16 %v729
        %v786 = vpack.c.b16 %v785, %v784
        %788 = vmatprep.subr.bf16.mxu0 0
        %789 = vmatpush1.bf16.msra.mxu0 %v786
        %790 = vmatprep.subr.bf16.mxu0 0
        %791 = vmatpush1.bf16.msra.mxu0 0
        %792 = vmatprep.subr.bf16.mxu0 0
        %793 = vmatpush1.bf16.msra.mxu0 0
        %794 = vmatprep.subr.bf16.mxu0 0
        %795 = vmatpush1.bf16.msra.mxu0 0
        %796 = vmatprep.subr.bf16.mxu0 0
        %797 = vmatpush1.bf16.msra.mxu0 0
        %798 = vmatprep.subr.bf16.mxu0 0
        %799 = vmatpush1.bf16.msra.mxu0 0
        %800 = vmatprep.subr.bf16.mxu0 0
        %801 = vmatpush1.bf16.msra.mxu0 0
        %802 = vmatprep.subr.bf16.mxu0 0
        %803 = vmatpush1.bf16.msra.mxu0 0
        %804 = vmatprep.subr.bf16.mxu0 0
        %805 = vmatpush1.bf16.msra.mxu0 0
        %806 = vmatprep.subr.bf16.mxu0 0
        %807 = vmatpush1.bf16.msra.mxu0 0
        %808 = vmatprep.subr.bf16.mxu0 0
        %809 = vmatpush1.bf16.msra.mxu0 0
        %810 = vmatprep.subr.bf16.mxu0 0
        %811 = vmatpush1.bf16.msra.mxu0 0
        %812 = vmatprep.subr.bf16.mxu0 0
        %813 = vmatpush1.bf16.msra.mxu0 0
        %814 = vmatprep.subr.bf16.mxu0 0
        %815 = vmatpush1.bf16.msra.mxu0 0
        %816 = vmatprep.subr.bf16.mxu0 0
        %817 = vmatpush1.bf16.msra.mxu0 0
        %818 = vmatprep.subr.bf16.mxu0 0
        %819 = vmatpush1.bf16.msra.mxu0 0
        %820 = vmatprep.mubr.bf16.mxu0 0
        %821 = vmatmul.mubr.bf16.gmra.mrb[0].mxu0 %v737
        %v822 = vpop.f32.mrb[0].mxu0
        %v823 = vadd.f32 0.0, %v822
        %v824 = vpop.f32.mrb[0].mxu0
        %v825 = vpop.f32.mrb[0].mxu0
        %v826 = vadd.f32 0.0, %v825
        %v827 = vpop.f32.mrb[0].mxu0
        %828 = vdwg.mxu0
        %v829 = vadd.f32 %v780, %v823
        %v830 = vadd.f32 %v781, %v826
        %v832 = vsel %vm170, %v723, 0
        %834 = vmatprep.subr.bf16.mxu0 0
        %835 = vmatpush1.bf16.msra.mxu0 %v734
        %836 = vmatprep.subr.bf16.mxu0 0
        %837 = vmatpush1.bf16.msra.mxu0 0
        %838 = vmatprep.subr.bf16.mxu0 0
        %839 = vmatpush1.bf16.msra.mxu0 0
        %840 = vmatprep.subr.bf16.mxu0 0
        %841 = vmatpush1.bf16.msra.mxu0 0
        %842 = vmatprep.subr.bf16.mxu0 0
        %843 = vmatpush1.bf16.msra.mxu0 0
        %844 = vmatprep.subr.bf16.mxu0 0
        %845 = vmatpush1.bf16.msra.mxu0 0
        %846 = vmatprep.subr.bf16.mxu0 0
        %847 = vmatpush1.bf16.msra.mxu0 0
        %848 = vmatprep.subr.bf16.mxu0 0
        %849 = vmatpush1.bf16.msra.mxu0 0
        %850 = vmatprep.subr.bf16.mxu0 0
        %851 = vmatpush1.bf16.msra.mxu0 0
        %852 = vmatprep.subr.bf16.mxu0 0
        %853 = vmatpush1.bf16.msra.mxu0 0
        %854 = vmatprep.subr.bf16.mxu0 0
        %855 = vmatpush1.bf16.msra.mxu0 0
        %856 = vmatprep.subr.bf16.mxu0 0
        %857 = vmatpush1.bf16.msra.mxu0 0
        %858 = vmatprep.subr.bf16.mxu0 0
        %859 = vmatpush1.bf16.msra.mxu0 0
        %860 = vmatprep.subr.bf16.mxu0 0
        %861 = vmatpush1.bf16.msra.mxu0 0
        %862 = vmatprep.subr.bf16.mxu0 0
        %863 = vmatpush1.bf16.msra.mxu0 0
        %864 = vmatprep.subr.bf16.mxu0 0
        %865 = vmatpush1.bf16.msra.mxu0 0
        %866 = vmatprep.mubr.bf16.mxu0 0
        %867 = vmatmul.mubr.bf16.gmra.mrb[0].mxu0 %v832
        %v868 = vpop.f32.mrb[0].mxu0
        %v869 = vadd.f32 0.0, %v868
        %v870 = vpop.f32.mrb[0].mxu0
        %v871 = vpop.f32.mrb[0].mxu0
        %v872 = vadd.f32 0.0, %v871
        %v873 = vpop.f32.mrb[0].mxu0
        %874 = vdwg.mxu0
        %v875 = vadd.f32 %v829, %v869
        %v876 = vadd.f32 %v830, %v872
        %v877 = vpack.c.bf16 %v193, %v193
        %v878 = vunpack.c.l.bf16 %v877
        %v879 = vsub.f32 %v193, %v878
        %v880 = vpack.c.bf16 %v879, %v879
        %s881 = scalar_lea.vmem %s0, 32
        %v882 = vld [vmem:[%s881] sm:$0xf]
        %v883 = vld [vmem:[%s881 + $0x4] sm:$0xf]
        %s884 = scalar_lea.vmem %s1, 32
        %v885 = vld [vmem:[%s884] sm:$0xf]
        %v886 = vld [vmem:[%s884 + $0x4] sm:$0xf]
        %vm887 = vsmask.f32 7424
        %v888 = vshrl.u32 %v718, 16
        %v890 = vshll.u32 %v718, 16
        %v892 = vrot.slane %v890, 1
        %v893 = vor.u32 %v888, %v892
        %v895 = vshll.u32 %v877, 16
        %v897 = vrot.slane %v895, 1
        %v898 = vsel %vm887, %v893, %v897
        %v901 = vunpack.c.l.b16 %v882
        %v902 = vunpack.c.l.b16 %v883
        %v903 = vpack.c.b16 %v902, %v901
        %v906 = vsel %vm170, %v898, 0
        %908 = vmatprep.subr.bf16.mxu0 0
        %909 = vmatpush1.bf16.msra.mxu0 %v903
        %910 = vmatprep.subr.bf16.mxu0 0
        %911 = vmatpush1.bf16.msra.mxu0 0
        %912 = vmatprep.subr.bf16.mxu0 0
        %913 = vmatpush1.bf16.msra.mxu0 0
        %914 = vmatprep.subr.bf16.mxu0 0
        %915 = vmatpush1.bf16.msra.mxu0 0
        %916 = vmatprep.subr.bf16.mxu0 0
        %917 = vmatpush1.bf16.msra.mxu0 0
        %918 = vmatprep.subr.bf16.mxu0 0
        %919 = vmatpush1.bf16.msra.mxu0 0
        %920 = vmatprep.subr.bf16.mxu0 0
        %921 = vmatpush1.bf16.msra.mxu0 0
        %922 = vmatprep.subr.bf16.mxu0 0
        %923 = vmatpush1.bf16.msra.mxu0 0
        %924 = vmatprep.subr.bf16.mxu0 0
        %925 = vmatpush1.bf16.msra.mxu0 0
        %926 = vmatprep.subr.bf16.mxu0 0
        %927 = vmatpush1.bf16.msra.mxu0 0
        %928 = vmatprep.subr.bf16.mxu0 0
        %929 = vmatpush1.bf16.msra.mxu0 0
        %930 = vmatprep.subr.bf16.mxu0 0
        %931 = vmatpush1.bf16.msra.mxu0 0
        %932 = vmatprep.subr.bf16.mxu0 0
        %933 = vmatpush1.bf16.msra.mxu0 0
        %934 = vmatprep.subr.bf16.mxu0 0
        %935 = vmatpush1.bf16.msra.mxu0 0
        %936 = vmatprep.subr.bf16.mxu0 0
        %937 = vmatpush1.bf16.msra.mxu0 0
        %938 = vmatprep.subr.bf16.mxu0 0
        %939 = vmatpush1.bf16.msra.mxu0 0
        %940 = vmatprep.mubr.bf16.mxu0 0
        %941 = vmatmul.mubr.bf16.gmra.mrb[0].mxu0 %v906
        %v942 = vpop.f32.mrb[0].mxu0
        %v943 = vadd.f32 0.0, %v942
        %v944 = vpop.f32.mrb[0].mxu0
        %v945 = vpop.f32.mrb[0].mxu0
        %v946 = vadd.f32 0.0, %v945
        %v947 = vpop.f32.mrb[0].mxu0
        %948 = vdwg.mxu0
        %v949 = vadd.f32 %v875, %v943
        %v950 = vadd.f32 %v876, %v946
        %v953 = vunpack.c.l.b16 %v885
        %v954 = vunpack.c.l.b16 %v886
        %v955 = vpack.c.b16 %v954, %v953
        %957 = vmatprep.subr.bf16.mxu0 0
        %958 = vmatpush1.bf16.msra.mxu0 %v955
        %959 = vmatprep.subr.bf16.mxu0 0
        %960 = vmatpush1.bf16.msra.mxu0 0
        %961 = vmatprep.subr.bf16.mxu0 0
        %962 = vmatpush1.bf16.msra.mxu0 0
        %963 = vmatprep.subr.bf16.mxu0 0
        %964 = vmatpush1.bf16.msra.mxu0 0
        %965 = vmatprep.subr.bf16.mxu0 0
        %966 = vmatpush1.bf16.msra.mxu0 0
        %967 = vmatprep.subr.bf16.mxu0 0
        %968 = vmatpush1.bf16.msra.mxu0 0
        %969 = vmatprep.subr.bf16.mxu0 0
        %970 = vmatpush1.bf16.msra.mxu0 0
        %971 = vmatprep.subr.bf16.mxu0 0
        %972 = vmatpush1.bf16.msra.mxu0 0
        %973 = vmatprep.subr.bf16.mxu0 0
        %974 = vmatpush1.bf16.msra.mxu0 0
        %975 = vmatprep.subr.bf16.mxu0 0
        %976 = vmatpush1.bf16.msra.mxu0 0
        %977 = vmatprep.subr.bf16.mxu0 0
        %978 = vmatpush1.bf16.msra.mxu0 0
        %979 = vmatprep.subr.bf16.mxu0 0
        %980 = vmatpush1.bf16.msra.mxu0 0
        %981 = vmatprep.subr.bf16.mxu0 0
        %982 = vmatpush1.bf16.msra.mxu0 0
        %983 = vmatprep.subr.bf16.mxu0 0
        %984 = vmatpush1.bf16.msra.mxu0 0
        %985 = vmatprep.subr.bf16.mxu0 0
        %986 = vmatpush1.bf16.msra.mxu0 0
        %987 = vmatprep.subr.bf16.mxu0 0
        %988 = vmatpush1.bf16.msra.mxu0 0
        %989 = vmatprep.mubr.bf16.mxu0 0
        %990 = vmatmul.mubr.bf16.gmra.mrb[0].mxu0 %v906
        %v991 = vpop.f32.mrb[0].mxu0
        %v992 = vadd.f32 0.0, %v991
        %v993 = vpop.f32.mrb[0].mxu0
        %v994 = vpop.f32.mrb[0].mxu0
        %v995 = vadd.f32 0.0, %v994
        %v996 = vpop.f32.mrb[0].mxu0
        %997 = vdwg.mxu0
        %v998 = vadd.f32 %v949, %v992
        %v999 = vadd.f32 %v950, %v995
        %v1000 = vshrl.u32 %v723, 16
        %v1002 = vshll.u32 %v723, 16
        %v1004 = vrot.slane %v1002, 1
        %v1005 = vor.u32 %v1000, %v1004
        %v1007 = vshll.u32 %v880, 16
        %v1009 = vrot.slane %v1007, 1
        %v1010 = vsel %vm887, %v1005, %v1009
        %v1012 = vsel %vm170, %v1010, 0
        %1014 = vmatprep.subr.bf16.mxu0 0
        %1015 = vmatpush1.bf16.msra.mxu0 %v903
        %1016 = vmatprep.subr.bf16.mxu0 0
        %1017 = vmatpush1.bf16.msra.mxu0 0
        %1018 = vmatprep.subr.bf16.mxu0 0
        %1019 = vmatpush1.bf16.msra.mxu0 0
        %1020 = vmatprep.subr.bf16.mxu0 0
        %1021 = vmatpush1.bf16.msra.mxu0 0
        %1022 = vmatprep.subr.bf16.mxu0 0
        %1023 = vmatpush1.bf16.msra.mxu0 0
        %1024 = vmatprep.subr.bf16.mxu0 0
        %1025 = vmatpush1.bf16.msra.mxu0 0
        %1026 = vmatprep.subr.bf16.mxu0 0
        %1027 = vmatpush1.bf16.msra.mxu0 0
        %1028 = vmatprep.subr.bf16.mxu0 0
        %1029 = vmatpush1.bf16.msra.mxu0 0
        %1030 = vmatprep.subr.bf16.mxu0 0
        %1031 = vmatpush1.bf16.msra.mxu0 0
        %1032 = vmatprep.subr.bf16.mxu0 0
        %1033 = vmatpush1.bf16.msra.mxu0 0
        %1034 = vmatprep.subr.bf16.mxu0 0
        %1035 = vmatpush1.bf16.msra.mxu0 0
        %1036 = vmatprep.subr.bf16.mxu0 0
        %1037 = vmatpush1.bf16.msra.mxu0 0
        %1038 = vmatprep.subr.bf16.mxu0 0
        %1039 = vmatpush1.bf16.msra.mxu0 0
        %1040 = vmatprep.subr.bf16.mxu0 0
        %1041 = vmatpush1.bf16.msra.mxu0 0
        %1042 = vmatprep.subr.bf16.mxu0 0
        %1043 = vmatpush1.bf16.msra.mxu0 0
        %1044 = vmatprep.subr.bf16.mxu0 0
        %1045 = vmatpush1.bf16.msra.mxu0 0
        %1046 = vmatprep.mubr.bf16.mxu0 0
        %1047 = vmatmul.mubr.bf16.gmra.mrb[0].mxu0 %v1012
        %v1048 = vpop.f32.mrb[0].mxu0
        %v1049 = vadd.f32 0.0, %v1048
        %v1050 = vpop.f32.mrb[0].mxu0
        %v1051 = vpop.f32.mrb[0].mxu0
        %v1052 = vadd.f32 0.0, %v1051
        %v1053 = vpop.f32.mrb[0].mxu0
        %1054 = vdwg.mxu0
        %v1055 = vadd.f32 %v998, %v1049
        %v1056 = vadd.f32 %v999, %v1052
        %s1057 = scalar_lea.vmem %s0, 40
        %v1058 = vld [vmem:[%s1057] sm:$0xf]
        %v1059 = vld [vmem:[%s1057 + $0x4] sm:$0xf]
        %s1060 = scalar_lea.vmem %s1, 40
        %v1061 = vld [vmem:[%s1060] sm:$0xf]
        %v1062 = vld [vmem:[%s1060 + $0x4] sm:$0xf]
        %vm1065 = vcmask 1046528
        %v1066 = vrot.slane %v718, 1
        %v1067 = vrot.slane %v877, 1
        %v1068 = vsel %vm1065, %v1066, %v1067
        %v1071 = vunpack.c.l.b16 %v1058
        %v1072 = vunpack.c.l.b16 %v1059
        %v1073 = vpack.c.b16 %v1072, %v1071
        %v1076 = vsel %vm170, %v1068, 0
        %1078 = vmatprep.subr.bf16.mxu0 0
        %1079 = vmatpush1.bf16.msra.mxu0 %v1073
        %1080 = vmatprep.subr.bf16.mxu0 0
        %1081 = vmatpush1.bf16.msra.mxu0 0
        %1082 = vmatprep.subr.bf16.mxu0 0
        %1083 = vmatpush1.bf16.msra.mxu0 0
        %1084 = vmatprep.subr.bf16.mxu0 0
        %1085 = vmatpush1.bf16.msra.mxu0 0
        %1086 = vmatprep.subr.bf16.mxu0 0
        %1087 = vmatpush1.bf16.msra.mxu0 0
        %1088 = vmatprep.subr.bf16.mxu0 0
        %1089 = vmatpush1.bf16.msra.mxu0 0
        %1090 = vmatprep.subr.bf16.mxu0 0
        %1091 = vmatpush1.bf16.msra.mxu0 0
        %1092 = vmatprep.subr.bf16.mxu0 0
        %1093 = vmatpush1.bf16.msra.mxu0 0
        %1094 = vmatprep.subr.bf16.mxu0 0
        %1095 = vmatpush1.bf16.msra.mxu0 0
        %1096 = vmatprep.subr.bf16.mxu0 0
        %1097 = vmatpush1.bf16.msra.mxu0 0
        %1098 = vmatprep.subr.bf16.mxu0 0
        %1099 = vmatpush1.bf16.msra.mxu0 0
        %1100 = vmatprep.subr.bf16.mxu0 0
        %1101 = vmatpush1.bf16.msra.mxu0 0
        %1102 = vmatprep.subr.bf16.mxu0 0
        %1103 = vmatpush1.bf16.msra.mxu0 0
        %1104 = vmatprep.subr.bf16.mxu0 0
        %1105 = vmatpush1.bf16.msra.mxu0 0
        %1106 = vmatprep.subr.bf16.mxu0 0
        %1107 = vmatpush1.bf16.msra.mxu0 0
        %1108 = vmatprep.subr.bf16.mxu0 0
        %1109 = vmatpush1.bf16.msra.mxu0 0
        %1110 = vmatprep.mubr.bf16.mxu0 0
        %1111 = vmatmul.mubr.bf16.gmra.mrb[0].mxu0 %v1076
        %v1112 = vpop.f32.mrb[0].mxu0
        %v1113 = vadd.f32 0.0, %v1112
        %v1114 = vpop.f32.mrb[0].mxu0
        %v1115 = vpop.f32.mrb[0].mxu0
        %v1116 = vadd.f32 0.0, %v1115
        %v1117 = vpop.f32.mrb[0].mxu0
        %1118 = vdwg.mxu0
        %v1119 = vadd.f32 %v1055, %v1113
        %v1120 = vadd.f32 %v1056, %v1116
        %v1123 = vunpack.c.l.b16 %v1061
        %v1124 = vunpack.c.l.b16 %v1062
        %v1125 = vpack.c.b16 %v1124, %v1123
        %1127 = vmatprep.subr.bf16.mxu0 0
        %1128 = vmatpush1.bf16.msra.mxu0 %v1125
        %1129 = vmatprep.subr.bf16.mxu0 0
        %1130 = vmatpush1.bf16.msra.mxu0 0
        %1131 = vmatprep.subr.bf16.mxu0 0
        %1132 = vmatpush1.bf16.msra.mxu0 0
        %1133 = vmatprep.subr.bf16.mxu0 0
        %1134 = vmatpush1.bf16.msra.mxu0 0
        %1135 = vmatprep.subr.bf16.mxu0 0
        %1136 = vmatpush1.bf16.msra.mxu0 0
        %1137 = vmatprep.subr.bf16.mxu0 0
        %1138 = vmatpush1.bf16.msra.mxu0 0
        %1139 = vmatprep.subr.bf16.mxu0 0
        %1140 = vmatpush1.bf16.msra.mxu0 0
        %1141 = vmatprep.subr.bf16.mxu0 0
        %1142 = vmatpush1.bf16.msra.mxu0 0
        %1143 = vmatprep.subr.bf16.mxu0 0
        %1144 = vmatpush1.bf16.msra.mxu0 0
        %1145 = vmatprep.subr.bf16.mxu0 0
        %1146 = vmatpush1.bf16.msra.mxu0 0
        %1147 = vmatprep.subr.bf16.mxu0 0
        %1148 = vmatpush1.bf16.msra.mxu0 0
        %1149 = vmatprep.subr.bf16.mxu0 0
        %1150 = vmatpush1.bf16.msra.mxu0 0
        %1151 = vmatprep.subr.bf16.mxu0 0
        %1152 = vmatpush1.bf16.msra.mxu0 0
        %1153 = vmatprep.subr.bf16.mxu0 0
        %1154 = vmatpush1.bf16.msra.mxu0 0
        %1155 = vmatprep.subr.bf16.mxu0 0
        %1156 = vmatpush1.bf16.msra.mxu0 0
        %1157 = vmatprep.subr.bf16.mxu0 0
        %1158 = vmatpush1.bf16.msra.mxu0 0
        %1159 = vmatprep.mubr.bf16.mxu0 0
        %1160 = vmatmul.mubr.bf16.gmra.mrb[0].mxu0 %v1076
        %v1161 = vpop.f32.mrb[0].mxu0
        %v1162 = vadd.f32 0.0, %v1161
        %v1163 = vpop.f32.mrb[0].mxu0
        %v1164 = vpop.f32.mrb[0].mxu0
        %v1165 = vadd.f32 0.0, %v1164
        %v1166 = vpop.f32.mrb[0].mxu0
        %1167 = vdwg.mxu0
        %v1168 = vadd.f32 %v1119, %v1162
        %v1169 = vadd.f32 %v1120, %v1165
        %v1172 = vrot.slane %v723, 1
        %v1173 = vrot.slane %v880, 1
        %v1174 = vsel %vm1065, %v1172, %v1173
        %v1176 = vsel %vm170, %v1174, 0
        %1178 = vmatprep.subr.bf16.mxu0 0
        %1179 = vmatpush1.bf16.msra.mxu0 %v1073
        %1180 = vmatprep.subr.bf16.mxu0 0
        %1181 = vmatpush1.bf16.msra.mxu0 0
        %1182 = vmatprep.subr.bf16.mxu0 0
        %1183 = vmatpush1.bf16.msra.mxu0 0
        %1184 = vmatprep.subr.bf16.mxu0 0
        %1185 = vmatpush1.bf16.msra.mxu0 0
        %1186 = vmatprep.subr.bf16.mxu0 0
        %1187 = vmatpush1.bf16.msra.mxu0 0
        %1188 = vmatprep.subr.bf16.mxu0 0
        %1189 = vmatpush1.bf16.msra.mxu0 0
        %1190 = vmatprep.subr.bf16.mxu0 0
        %1191 = vmatpush1.bf16.msra.mxu0 0
        %1192 = vmatprep.subr.bf16.mxu0 0
        %1193 = vmatpush1.bf16.msra.mxu0 0
        %1194 = vmatprep.subr.bf16.mxu0 0
        %1195 = vmatpush1.bf16.msra.mxu0 0
        %1196 = vmatprep.subr.bf16.mxu0 0
        %1197 = vmatpush1.bf16.msra.mxu0 0
        %1198 = vmatprep.subr.bf16.mxu0 0
        %1199 = vmatpush1.bf16.msra.mxu0 0
        %1200 = vmatprep.subr.bf16.mxu0 0
        %1201 = vmatpush1.bf16.msra.mxu0 0
        %1202 = vmatprep.subr.bf16.mxu0 0
        %1203 = vmatpush1.bf16.msra.mxu0 0
        %1204 = vmatprep.subr.bf16.mxu0 0
        %1205 = vmatpush1.bf16.msra.mxu0 0
        %1206 = vmatprep.subr.bf16.mxu0 0
        %1207 = vmatpush1.bf16.msra.mxu0 0
        %1208 = vmatprep.subr.bf16.mxu0 0
        %1209 = vmatpush1.bf16.msra.mxu0 0
        %1210 = vmatprep.mubr.bf16.mxu0 0
        %1211 = vmatmul.mubr.bf16.gmra.mrb[0].mxu0 %v1176
        %v1212 = vpop.f32.mrb[0].mxu0
        %v1213 = vadd.f32 0.0, %v1212
        %v1214 = vpop.f32.mrb[0].mxu0
        %v1215 = vpop.f32.mrb[0].mxu0
        %v1216 = vadd.f32 0.0, %v1215
        %v1217 = vpop.f32.mrb[0].mxu0
        %1218 = vdwg.mxu0
        %v1219 = vadd.f32 %v1168, %v1213
        %v1220 = vadd.f32 %v1169, %v1216
        %s1221 = scalar_lea.vmem %s0, 48
        %v1222 = vld [vmem:[%s1221] sm:$0xf]
        %v1223 = vld [vmem:[%s1221 + $0x4] sm:$0xf]
        %s1224 = scalar_lea.vmem %s1, 48
        %v1225 = vld [vmem:[%s1224] sm:$0xf]
        %v1226 = vld [vmem:[%s1224 + $0x4] sm:$0xf]
        %vm1227 = vsmask.f32 6400
        %v1228 = vrot.slane %v888, 1
        %v1229 = vrot.slane %v890, 2
        %v1230 = vor.u32 %v1228, %v1229
        %v1231 = vshrl.u32 %v877, 16
        %v1233 = vrot.slane %v1231, 1
        %v1234 = vrot.slane %v895, 2
        %v1235 = vor.u32 %v1233, %v1234
        %v1236 = vsel %vm1227, %v1230, %v1235
        %v1239 = vunpack.c.l.b16 %v1222
        %v1240 = vunpack.c.l.b16 %v1223
        %v1241 = vpack.c.b16 %v1240, %v1239
        %v1244 = vsel %vm170, %v1236, 0
        %1246 = vmatprep.subr.bf16.mxu0 0
        %1247 = vmatpush1.bf16.msra.mxu0 %v1241
        %1248 = vmatprep.subr.bf16.mxu0 0
        %1249 = vmatpush1.bf16.msra.mxu0 0
        %1250 = vmatprep.subr.bf16.mxu0 0
        %1251 = vmatpush1.bf16.msra.mxu0 0
        %1252 = vmatprep.subr.bf16.mxu0 0
        %1253 = vmatpush1.bf16.msra.mxu0 0
        %1254 = vmatprep.subr.bf16.mxu0 0
        %1255 = vmatpush1.bf16.msra.mxu0 0
        %1256 = vmatprep.subr.bf16.mxu0 0
        %1257 = vmatpush1.bf16.msra.mxu0 0
        %1258 = vmatprep.subr.bf16.mxu0 0
        %1259 = vmatpush1.bf16.msra.mxu0 0
        %1260 = vmatprep.subr.bf16.mxu0 0
        %1261 = vmatpush1.bf16.msra.mxu0 0
        %1262 = vmatprep.subr.bf16.mxu0 0
        %1263 = vmatpush1.bf16.msra.mxu0 0
        %1264 = vmatprep.subr.bf16.mxu0 0
        %1265 = vmatpush1.bf16.msra.mxu0 0
        %1266 = vmatprep.subr.bf16.mxu0 0
        %1267 = vmatpush1.bf16.msra.mxu0 0
        %1268 = vmatprep.subr.bf16.mxu0 0
        %1269 = vmatpush1.bf16.msra.mxu0 0
        %1270 = vmatprep.subr.bf16.mxu0 0
        %1271 = vmatpush1.bf16.msra.mxu0 0
        %1272 = vmatprep.subr.bf16.mxu0 0
        %1273 = vmatpush1.bf16.msra.mxu0 0
        %1274 = vmatprep.subr.bf16.mxu0 0
        %1275 = vmatpush1.bf16.msra.mxu0 0
        %1276 = vmatprep.subr.bf16.mxu0 0
        %1277 = vmatpush1.bf16.msra.mxu0 0
        %1278 = vmatprep.mubr.bf16.mxu0 0
        %1279 = vmatmul.mubr.bf16.gmra.mrb[0].mxu0 %v1244
        %v1280 = vpop.f32.mrb[0].mxu0
        %v1281 = vadd.f32 0.0, %v1280
        %v1282 = vpop.f32.mrb[0].mxu0
        %v1283 = vpop.f32.mrb[0].mxu0
        %v1284 = vadd.f32 0.0, %v1283
        %v1285 = vpop.f32.mrb[0].mxu0
        %1286 = vdwg.mxu0
        %v1287 = vadd.f32 %v1219, %v1281
        %v1288 = vadd.f32 %v1220, %v1284
        %v1291 = vunpack.c.l.b16 %v1225
        %v1292 = vunpack.c.l.b16 %v1226
        %v1293 = vpack.c.b16 %v1292, %v1291
        %1295 = vmatprep.subr.bf16.mxu0 0
        %1296 = vmatpush1.bf16.msra.mxu0 %v1293
        %1297 = vmatprep.subr.bf16.mxu0 0
        %1298 = vmatpush1.bf16.msra.mxu0 0
        %1299 = vmatprep.subr.bf16.mxu0 0
        %1300 = vmatpush1.bf16.msra.mxu0 0
        %1301 = vmatprep.subr.bf16.mxu0 0
        %1302 = vmatpush1.bf16.msra.mxu0 0
        %1303 = vmatprep.subr.bf16.mxu0 0
        %1304 = vmatpush1.bf16.msra.mxu0 0
        %1305 = vmatprep.subr.bf16.mxu0 0
        %1306 = vmatpush1.bf16.msra.mxu0 0
        %1307 = vmatprep.subr.bf16.mxu0 0
        %1308 = vmatpush1.bf16.msra.mxu0 0
        %1309 = vmatprep.subr.bf16.mxu0 0
        %1310 = vmatpush1.bf16.msra.mxu0 0
        %1311 = vmatprep.subr.bf16.mxu0 0
        %1312 = vmatpush1.bf16.msra.mxu0 0
        %1313 = vmatprep.subr.bf16.mxu0 0
        %1314 = vmatpush1.bf16.msra.mxu0 0
        %1315 = vmatprep.subr.bf16.mxu0 0
        %1316 = vmatpush1.bf16.msra.mxu0 0
        %1317 = vmatprep.subr.bf16.mxu0 0
        %1318 = vmatpush1.bf16.msra.mxu0 0
        %1319 = vmatprep.subr.bf16.mxu0 0
        %1320 = vmatpush1.bf16.msra.mxu0 0
        %1321 = vmatprep.subr.bf16.mxu0 0
        %1322 = vmatpush1.bf16.msra.mxu0 0
        %1323 = vmatprep.subr.bf16.mxu0 0
        %1324 = vmatpush1.bf16.msra.mxu0 0
        %1325 = vmatprep.subr.bf16.mxu0 0
        %1326 = vmatpush1.bf16.msra.mxu0 0
        %1327 = vmatprep.mubr.bf16.mxu0 0
        %1328 = vmatmul.mubr.bf16.gmra.mrb[0].mxu0 %v1244
        %v1329 = vpop.f32.mrb[0].mxu0
        %v1330 = vadd.f32 0.0, %v1329
        %v1331 = vpop.f32.mrb[0].mxu0
        %v1332 = vpop.f32.mrb[0].mxu0
        %v1333 = vadd.f32 0.0, %v1332
        %v1334 = vpop.f32.mrb[0].mxu0
        %1335 = vdwg.mxu0
        %v1336 = vadd.f32 %v1287, %v1330
        %v1337 = vadd.f32 %v1288, %v1333
        %v1338 = vrot.slane %v1000, 1
        %v1339 = vrot.slane %v1002, 2
        %v1340 = vor.u32 %v1338, %v1339
        %v1341 = vshrl.u32 %v880, 16
        %v1343 = vrot.slane %v1341, 1
        %v1344 = vrot.slane %v1007, 2
        %v1345 = vor.u32 %v1343, %v1344
        %v1346 = vsel %vm1227, %v1340, %v1345
        %v1348 = vsel %vm170, %v1346, 0
        %1350 = vmatprep.subr.bf16.mxu0 0
        %1351 = vmatpush1.bf16.msra.mxu0 %v1241
        %1352 = vmatprep.subr.bf16.mxu0 0
        %1353 = vmatpush1.bf16.msra.mxu0 0
        %1354 = vmatprep.subr.bf16.mxu0 0
        %1355 = vmatpush1.bf16.msra.mxu0 0
        %1356 = vmatprep.subr.bf16.mxu0 0
        %1357 = vmatpush1.bf16.msra.mxu0 0
        %1358 = vmatprep.subr.bf16.mxu0 0
        %1359 = vmatpush1.bf16.msra.mxu0 0
        %1360 = vmatprep.subr.bf16.mxu0 0
        %1361 = vmatpush1.bf16.msra.mxu0 0
        %1362 = vmatprep.subr.bf16.mxu0 0
        %1363 = vmatpush1.bf16.msra.mxu0 0
        %1364 = vmatprep.subr.bf16.mxu0 0
        %1365 = vmatpush1.bf16.msra.mxu0 0
        %1366 = vmatprep.subr.bf16.mxu0 0
        %1367 = vmatpush1.bf16.msra.mxu0 0
        %1368 = vmatprep.subr.bf16.mxu0 0
        %1369 = vmatpush1.bf16.msra.mxu0 0
        %1370 = vmatprep.subr.bf16.mxu0 0
        %1371 = vmatpush1.bf16.msra.mxu0 0
        %1372 = vmatprep.subr.bf16.mxu0 0
        %1373 = vmatpush1.bf16.msra.mxu0 0
        %1374 = vmatprep.subr.bf16.mxu0 0
        %1375 = vmatpush1.bf16.msra.mxu0 0
        %1376 = vmatprep.subr.bf16.mxu0 0
        %1377 = vmatpush1.bf16.msra.mxu0 0
        %1378 = vmatprep.subr.bf16.mxu0 0
        %1379 = vmatpush1.bf16.msra.mxu0 0
        %1380 = vmatprep.subr.bf16.mxu0 0
        %1381 = vmatpush1.bf16.msra.mxu0 0
        %1382 = vmatprep.mubr.bf16.mxu0 0
        %1383 = vmatmul.mubr.bf16.gmra.mrb[0].mxu0 %v1348
        %v1384 = vpop.f32.mrb[0].mxu0
        %v1385 = vadd.f32 0.0, %v1384
        %v1386 = vpop.f32.mrb[0].mxu0
        %v1387 = vpop.f32.mrb[0].mxu0
        %v1388 = vadd.f32 0.0, %v1387
        %v1389 = vpop.f32.mrb[0].mxu0
        %1390 = vdwg.mxu0
        %v1391 = vadd.f32 %v1336, %v1385
        %v1392 = vadd.f32 %v1337, %v1388
        %v1393 = vld [vmem:[%s187] sm:$0xff]
        %v1394 = vld [vmem:[%s187 + $0x8] sm:$0xff]
        %v1395 = vld [vmem:[%s187 + $0x10] sm:$0xff]
        %v1396 = vld [vmem:[%s187 + $0x18] sm:$0x7]
        %v1397 = vpack.c.bf16 %v1394, %v1393
        %v1398 = vpack.c.bf16 %v1395, %v1395
        %v1399 = vunpack.c.l.bf16 %v1397
        %v1400 = vunpack.c.h.bf16 %v1397
        %v1401 = vunpack.c.l.bf16 %v1398
        %v1402 = vsub.f32 %v1393, %v1399
        %v1403 = vsub.f32 %v1394, %v1400
        %v1404 = vsub.f32 %v1395, %v1401
        %v1405 = vpack.c.bf16 %v1403, %v1402
        %v1406 = vpack.c.bf16 %v1404, %v1404
        %s1407 = scalar_lea.vmem %s0, 56
        %v1408 = vld [vmem:[%s1407] sm:$0xf]
        %v1409 = vld [vmem:[%s1407 + $0x4] sm:$0xf]
        %s1410 = scalar_lea.vmem %s1, 56
        %v1411 = vld [vmem:[%s1410] sm:$0xf]
        %v1412 = vld [vmem:[%s1410 + $0x4] sm:$0xf]
        %v1414 = vshrl.u32 %v1397, 16
        %v1416 = vrot.slane %v1414, 2
        %v1417 = vshll.u32 %v1397, 16
        %v1419 = vrot.slane %v1417, 3
        %v1420 = vor.u32 %v1416, %v1419
        %v1422 = vshrl.u32 %v1398, 16
        %v1424 = vrot.slane %v1422, 2
        %v1425 = vshll.u32 %v1398, 16
        %v1427 = vrot.slane %v1425, 3
        %v1428 = vor.u32 %v1424, %v1427
        %v1429 = vsel %vm208, %v1420, %v1428
        %v1432 = vunpack.c.l.b16 %v1408
        %v1433 = vunpack.c.l.b16 %v1409
        %v1434 = vpack.c.b16 %v1433, %v1432
        %v1437 = vsel %vm170, %v1429, 0
        %1439 = vmatprep.subr.bf16.mxu0 0
        %1440 = vmatpush1.bf16.msra.mxu0 %v1434
        %1441 = vmatprep.subr.bf16.mxu0 0
        %1442 = vmatpush1.bf16.msra.mxu0 0
        %1443 = vmatprep.subr.bf16.mxu0 0
        %1444 = vmatpush1.bf16.msra.mxu0 0
        %1445 = vmatprep.subr.bf16.mxu0 0
        %1446 = vmatpush1.bf16.msra.mxu0 0
        %1447 = vmatprep.subr.bf16.mxu0 0
        %1448 = vmatpush1.bf16.msra.mxu0 0
        %1449 = vmatprep.subr.bf16.mxu0 0
        %1450 = vmatpush1.bf16.msra.mxu0 0
        %1451 = vmatprep.subr.bf16.mxu0 0
        %1452 = vmatpush1.bf16.msra.mxu0 0
        %1453 = vmatprep.subr.bf16.mxu0 0
        %1454 = vmatpush1.bf16.msra.mxu0 0
        %1455 = vmatprep.subr.bf16.mxu0 0
        %1456 = vmatpush1.bf16.msra.mxu0 0
        %1457 = vmatprep.subr.bf16.mxu0 0
        %1458 = vmatpush1.bf16.msra.mxu0 0
        %1459 = vmatprep.subr.bf16.mxu0 0
        %1460 = vmatpush1.bf16.msra.mxu0 0
        %1461 = vmatprep.subr.bf16.mxu0 0
        %1462 = vmatpush1.bf16.msra.mxu0 0
        %1463 = vmatprep.subr.bf16.mxu0 0
        %1464 = vmatpush1.bf16.msra.mxu0 0
        %1465 = vmatprep.subr.bf16.mxu0 0
        %1466 = vmatpush1.bf16.msra.mxu0 0
        %1467 = vmatprep.subr.bf16.mxu0 0
        %1468 = vmatpush1.bf16.msra.mxu0 0
        %1469 = vmatprep.subr.bf16.mxu0 0
        %1470 = vmatpush1.bf16.msra.mxu0 0
        %1471 = vmatprep.mubr.bf16.mxu0 0
        %1472 = vmatmul.mubr.bf16.gmra.mrb[0].mxu0 %v1437
        %v1473 = vpop.f32.mrb[0].mxu0
        %v1474 = vadd.f32 0.0, %v1473
        %v1475 = vpop.f32.mrb[0].mxu0
        %v1476 = vpop.f32.mrb[0].mxu0
        %v1477 = vadd.f32 0.0, %v1476
        %v1478 = vpop.f32.mrb[0].mxu0
        %1479 = vdwg.mxu0
        %v1480 = vadd.f32 %v1391, %v1474
        %v1481 = vadd.f32 %v1392, %v1477
        %v1484 = vunpack.c.l.b16 %v1411
        %v1485 = vunpack.c.l.b16 %v1412
        %v1486 = vpack.c.b16 %v1485, %v1484
        %1488 = vmatprep.subr.bf16.mxu0 0
        %1489 = vmatpush1.bf16.msra.mxu0 %v1486
        %1490 = vmatprep.subr.bf16.mxu0 0
        %1491 = vmatpush1.bf16.msra.mxu0 0
        %1492 = vmatprep.subr.bf16.mxu0 0
        %1493 = vmatpush1.bf16.msra.mxu0 0
        %1494 = vmatprep.subr.bf16.mxu0 0
        %1495 = vmatpush1.bf16.msra.mxu0 0
        %1496 = vmatprep.subr.bf16.mxu0 0
        %1497 = vmatpush1.bf16.msra.mxu0 0
        %1498 = vmatprep.subr.bf16.mxu0 0
        %1499 = vmatpush1.bf16.msra.mxu0 0
        %1500 = vmatprep.subr.bf16.mxu0 0
        %1501 = vmatpush1.bf16.msra.mxu0 0
        %1502 = vmatprep.subr.bf16.mxu0 0
        %1503 = vmatpush1.bf16.msra.mxu0 0
        %1504 = vmatprep.subr.bf16.mxu0 0
        %1505 = vmatpush1.bf16.msra.mxu0 0
        %1506 = vmatprep.subr.bf16.mxu0 0
        %1507 = vmatpush1.bf16.msra.mxu0 0
        %1508 = vmatprep.subr.bf16.mxu0 0
        %1509 = vmatpush1.bf16.msra.mxu0 0
        %1510 = vmatprep.subr.bf16.mxu0 0
        %1511 = vmatpush1.bf16.msra.mxu0 0
        %1512 = vmatprep.subr.bf16.mxu0 0
        %1513 = vmatpush1.bf16.msra.mxu0 0
        %1514 = vmatprep.subr.bf16.mxu0 0
        %1515 = vmatpush1.bf16.msra.mxu0 0
        %1516 = vmatprep.subr.bf16.mxu0 0
        %1517 = vmatpush1.bf16.msra.mxu0 0
        %1518 = vmatprep.subr.bf16.mxu0 0
        %1519 = vmatpush1.bf16.msra.mxu0 0
        %1520 = vmatprep.mubr.bf16.mxu0 0
        %1521 = vmatmul.mubr.bf16.gmra.mrb[0].mxu0 %v1437
        %v1522 = vpop.f32.mrb[0].mxu0
        %v1523 = vadd.f32 0.0, %v1522
        %v1524 = vpop.f32.mrb[0].mxu0
        %v1525 = vpop.f32.mrb[0].mxu0
        %v1526 = vadd.f32 0.0, %v1525
        %v1527 = vpop.f32.mrb[0].mxu0
        %1528 = vdwg.mxu0
        %v1529 = vadd.f32 %v1480, %v1523
        %v1530 = vadd.f32 %v1481, %v1526
        %v1532 = vshrl.u32 %v1405, 16
        %v1534 = vrot.slane %v1532, 2
        %v1535 = vshll.u32 %v1405, 16
        %v1537 = vrot.slane %v1535, 3
        %v1538 = vor.u32 %v1534, %v1537
        %v1540 = vshrl.u32 %v1406, 16
        %v1542 = vrot.slane %v1540, 2
        %v1543 = vshll.u32 %v1406, 16
        %v1545 = vrot.slane %v1543, 3
        %v1546 = vor.u32 %v1542, %v1545
        %v1547 = vsel %vm208, %v1538, %v1546
        %v1549 = vsel %vm170, %v1547, 0
        %1551 = vmatprep.subr.bf16.mxu0 0
        %1552 = vmatpush1.bf16.msra.mxu0 %v1434
        %1553 = vmatprep.subr.bf16.mxu0 0
        %1554 = vmatpush1.bf16.msra.mxu0 0
        %1555 = vmatprep.subr.bf16.mxu0 0
        %1556 = vmatpush1.bf16.msra.mxu0 0
        %1557 = vmatprep.subr.bf16.mxu0 0
        %1558 = vmatpush1.bf16.msra.mxu0 0
        %1559 = vmatprep.subr.bf16.mxu0 0
        %1560 = vmatpush1.bf16.msra.mxu0 0
        %1561 = vmatprep.subr.bf16.mxu0 0
        %1562 = vmatpush1.bf16.msra.mxu0 0
        %1563 = vmatprep.subr.bf16.mxu0 0
        %1564 = vmatpush1.bf16.msra.mxu0 0
        %1565 = vmatprep.subr.bf16.mxu0 0
        %1566 = vmatpush1.bf16.msra.mxu0 0
        %1567 = vmatprep.subr.bf16.mxu0 0
        %1568 = vmatpush1.bf16.msra.mxu0 0
        %1569 = vmatprep.subr.bf16.mxu0 0
        %1570 = vmatpush1.bf16.msra.mxu0 0
        %1571 = vmatprep.subr.bf16.mxu0 0
        %1572 = vmatpush1.bf16.msra.mxu0 0
        %1573 = vmatprep.subr.bf16.mxu0 0
        %1574 = vmatpush1.bf16.msra.mxu0 0
        %1575 = vmatprep.subr.bf16.mxu0 0
        %1576 = vmatpush1.bf16.msra.mxu0 0
        %1577 = vmatprep.subr.bf16.mxu0 0
        %1578 = vmatpush1.bf16.msra.mxu0 0
        %1579 = vmatprep.subr.bf16.mxu0 0
        %1580 = vmatpush1.bf16.msra.mxu0 0
        %1581 = vmatprep.subr.bf16.mxu0 0
        %1582 = vmatpush1.bf16.msra.mxu0 0
        %1583 = vmatprep.mubr.bf16.mxu0 0
        %1584 = vmatmul.mubr.bf16.gmra.mrb[0].mxu0 %v1549
        %v1585 = vpop.f32.mrb[0].mxu0
        %v1586 = vadd.f32 0.0, %v1585
        %v1587 = vpop.f32.mrb[0].mxu0
        %v1588 = vpop.f32.mrb[0].mxu0
        %v1589 = vadd.f32 0.0, %v1588
        %v1590 = vpop.f32.mrb[0].mxu0
        %1591 = vdwg.mxu0
        %v1592 = vadd.f32 %v1529, %v1586
        %v1593 = vadd.f32 %v1530, %v1589
        %s1594 = scalar_lea.vmem %s0, 64
        %v1595 = vld [vmem:[%s1594] sm:$0xf]
        %v1596 = vld [vmem:[%s1594 + $0x4] sm:$0xf]
        %s1597 = scalar_lea.vmem %s1, 64
        %v1598 = vld [vmem:[%s1597] sm:$0xf]
        %v1599 = vld [vmem:[%s1597 + $0x4] sm:$0xf]
        %v1602 = vrot.slane %v1397, 3
        %v1603 = vrot.slane %v1398, 3
        %v1604 = vsel %vm394, %v1602, %v1603
        %v1607 = vunpack.c.l.b16 %v1595
        %v1608 = vunpack.c.l.b16 %v1596
        %v1609 = vpack.c.b16 %v1608, %v1607
        %v1612 = vsel %vm170, %v1604, 0
        %1614 = vmatprep.subr.bf16.mxu0 0
        %1615 = vmatpush1.bf16.msra.mxu0 %v1609
        %1616 = vmatprep.subr.bf16.mxu0 0
        %1617 = vmatpush1.bf16.msra.mxu0 0
        %1618 = vmatprep.subr.bf16.mxu0 0
        %1619 = vmatpush1.bf16.msra.mxu0 0
        %1620 = vmatprep.subr.bf16.mxu0 0
        %1621 = vmatpush1.bf16.msra.mxu0 0
        %1622 = vmatprep.subr.bf16.mxu0 0
        %1623 = vmatpush1.bf16.msra.mxu0 0
        %1624 = vmatprep.subr.bf16.mxu0 0
        %1625 = vmatpush1.bf16.msra.mxu0 0
        %1626 = vmatprep.subr.bf16.mxu0 0
        %1627 = vmatpush1.bf16.msra.mxu0 0
        %1628 = vmatprep.subr.bf16.mxu0 0
        %1629 = vmatpush1.bf16.msra.mxu0 0
        %1630 = vmatprep.subr.bf16.mxu0 0
        %1631 = vmatpush1.bf16.msra.mxu0 0
        %1632 = vmatprep.subr.bf16.mxu0 0
        %1633 = vmatpush1.bf16.msra.mxu0 0
        %1634 = vmatprep.subr.bf16.mxu0 0
        %1635 = vmatpush1.bf16.msra.mxu0 0
        %1636 = vmatprep.subr.bf16.mxu0 0
        %1637 = vmatpush1.bf16.msra.mxu0 0
        %1638 = vmatprep.subr.bf16.mxu0 0
        %1639 = vmatpush1.bf16.msra.mxu0 0
        %1640 = vmatprep.subr.bf16.mxu0 0
        %1641 = vmatpush1.bf16.msra.mxu0 0
        %1642 = vmatprep.subr.bf16.mxu0 0
        %1643 = vmatpush1.bf16.msra.mxu0 0
        %1644 = vmatprep.subr.bf16.mxu0 0
        %1645 = vmatpush1.bf16.msra.mxu0 0
        %1646 = vmatprep.mubr.bf16.mxu0 0
        %1647 = vmatmul.mubr.bf16.gmra.mrb[0].mxu0 %v1612
        %v1648 = vpop.f32.mrb[0].mxu0
        %v1649 = vadd.f32 0.0, %v1648
        %v1650 = vpop.f32.mrb[0].mxu0
        %v1651 = vpop.f32.mrb[0].mxu0
        %v1652 = vadd.f32 0.0, %v1651
        %v1653 = vpop.f32.mrb[0].mxu0
        %1654 = vdwg.mxu0
        %v1655 = vadd.f32 %v1592, %v1649
        %v1656 = vadd.f32 %v1593, %v1652
        %v1659 = vunpack.c.l.b16 %v1598
        %v1660 = vunpack.c.l.b16 %v1599
        %v1661 = vpack.c.b16 %v1660, %v1659
        %1663 = vmatprep.subr.bf16.mxu0 0
        %1664 = vmatpush1.bf16.msra.mxu0 %v1661
        %1665 = vmatprep.subr.bf16.mxu0 0
        %1666 = vmatpush1.bf16.msra.mxu0 0
        %1667 = vmatprep.subr.bf16.mxu0 0
        %1668 = vmatpush1.bf16.msra.mxu0 0
        %1669 = vmatprep.subr.bf16.mxu0 0
        %1670 = vmatpush1.bf16.msra.mxu0 0
        %1671 = vmatprep.subr.bf16.mxu0 0
        %1672 = vmatpush1.bf16.msra.mxu0 0
        %1673 = vmatprep.subr.bf16.mxu0 0
        %1674 = vmatpush1.bf16.msra.mxu0 0
        %1675 = vmatprep.subr.bf16.mxu0 0
        %1676 = vmatpush1.bf16.msra.mxu0 0
        %1677 = vmatprep.subr.bf16.mxu0 0
        %1678 = vmatpush1.bf16.msra.mxu0 0
        %1679 = vmatprep.subr.bf16.mxu0 0
        %1680 = vmatpush1.bf16.msra.mxu0 0
        %1681 = vmatprep.subr.bf16.mxu0 0
        %1682 = vmatpush1.bf16.msra.mxu0 0
        %1683 = vmatprep.subr.bf16.mxu0 0
        %1684 = vmatpush1.bf16.msra.mxu0 0
        %1685 = vmatprep.subr.bf16.mxu0 0
        %1686 = vmatpush1.bf16.msra.mxu0 0
        %1687 = vmatprep.subr.bf16.mxu0 0
        %1688 = vmatpush1.bf16.msra.mxu0 0
        %1689 = vmatprep.subr.bf16.mxu0 0
        %1690 = vmatpush1.bf16.msra.mxu0 0
        %1691 = vmatprep.subr.bf16.mxu0 0
        %1692 = vmatpush1.bf16.msra.mxu0 0
        %1693 = vmatprep.subr.bf16.mxu0 0
        %1694 = vmatpush1.bf16.msra.mxu0 0
        %1695 = vmatprep.mubr.bf16.mxu0 0
        %1696 = vmatmul.mubr.bf16.gmra.mrb[0].mxu0 %v1612
        %v1697 = vpop.f32.mrb[0].mxu0
        %v1698 = vadd.f32 0.0, %v1697
        %v1699 = vpop.f32.mrb[0].mxu0
        %v1700 = vpop.f32.mrb[0].mxu0
        %v1701 = vadd.f32 0.0, %v1700
        %v1702 = vpop.f32.mrb[0].mxu0
        %1703 = vdwg.mxu0
        %v1704 = vadd.f32 %v1655, %v1698
        %v1705 = vadd.f32 %v1656, %v1701
        %v1708 = vrot.slane %v1405, 3
        %v1709 = vrot.slane %v1406, 3
        %v1710 = vsel %vm394, %v1708, %v1709
        %v1712 = vsel %vm170, %v1710, 0
        %1714 = vmatprep.subr.bf16.mxu0 0
        %1715 = vmatpush1.bf16.msra.mxu0 %v1609
        %1716 = vmatprep.subr.bf16.mxu0 0
        %1717 = vmatpush1.bf16.msra.mxu0 0
        %1718 = vmatprep.subr.bf16.mxu0 0
        %1719 = vmatpush1.bf16.msra.mxu0 0
        %1720 = vmatprep.subr.bf16.mxu0 0
        %1721 = vmatpush1.bf16.msra.mxu0 0
        %1722 = vmatprep.subr.bf16.mxu0 0
        %1723 = vmatpush1.bf16.msra.mxu0 0
        %1724 = vmatprep.subr.bf16.mxu0 0
        %1725 = vmatpush1.bf16.msra.mxu0 0
        %1726 = vmatprep.subr.bf16.mxu0 0
        %1727 = vmatpush1.bf16.msra.mxu0 0
        %1728 = vmatprep.subr.bf16.mxu0 0
        %1729 = vmatpush1.bf16.msra.mxu0 0
        %1730 = vmatprep.subr.bf16.mxu0 0
        %1731 = vmatpush1.bf16.msra.mxu0 0
        %1732 = vmatprep.subr.bf16.mxu0 0
        %1733 = vmatpush1.bf16.msra.mxu0 0
        %1734 = vmatprep.subr.bf16.mxu0 0
        %1735 = vmatpush1.bf16.msra.mxu0 0
        %1736 = vmatprep.subr.bf16.mxu0 0
        %1737 = vmatpush1.bf16.msra.mxu0 0
        %1738 = vmatprep.subr.bf16.mxu0 0
        %1739 = vmatpush1.bf16.msra.mxu0 0
        %1740 = vmatprep.subr.bf16.mxu0 0
        %1741 = vmatpush1.bf16.msra.mxu0 0
        %1742 = vmatprep.subr.bf16.mxu0 0
        %1743 = vmatpush1.bf16.msra.mxu0 0
        %1744 = vmatprep.subr.bf16.mxu0 0
        %1745 = vmatpush1.bf16.msra.mxu0 0
        %1746 = vmatprep.mubr.bf16.mxu0 0
        %1747 = vmatmul.mubr.bf16.gmra.mrb[0].mxu0 %v1712
        %v1748 = vpop.f32.mrb[0].mxu0
        %v1749 = vadd.f32 0.0, %v1748
        %v1750 = vpop.f32.mrb[0].mxu0
        %v1751 = vpop.f32.mrb[0].mxu0
        %v1752 = vadd.f32 0.0, %v1751
        %v1753 = vpop.f32.mrb[0].mxu0
        %1754 = vdwg.mxu0
        %v1755 = vadd.f32 %v1704, %v1749
        %v1756 = vadd.f32 %v1705, %v1752
        %s1757 = scalar_lea.vmem %s0, 72
        %v1758 = vld [vmem:[%s1757] sm:$0xf]
        %v1759 = vld [vmem:[%s1757 + $0x4] sm:$0xf]
        %s1760 = scalar_lea.vmem %s1, 72
        %v1761 = vld [vmem:[%s1760] sm:$0xf]
        %v1762 = vld [vmem:[%s1760 + $0x4] sm:$0xf]
        %v1763 = vrot.slane %v1414, 3
        %v1764 = vrot.slane %v1417, 4
        %v1765 = vor.u32 %v1763, %v1764
        %v1766 = vrot.slane %v1422, 3
        %v1767 = vrot.slane %v1425, 4
        %v1768 = vor.u32 %v1766, %v1767
        %v1769 = vsel %vm556, %v1765, %v1768
        %v1772 = vunpack.c.l.b16 %v1758
        %v1773 = vunpack.c.l.b16 %v1759
        %v1774 = vpack.c.b16 %v1773, %v1772
        %v1777 = vsel %vm170, %v1769, 0
        %1779 = vmatprep.subr.bf16.mxu0 0
        %1780 = vmatpush1.bf16.msra.mxu0 %v1774
        %1781 = vmatprep.subr.bf16.mxu0 0
        %1782 = vmatpush1.bf16.msra.mxu0 0
        %1783 = vmatprep.subr.bf16.mxu0 0
        %1784 = vmatpush1.bf16.msra.mxu0 0
        %1785 = vmatprep.subr.bf16.mxu0 0
        %1786 = vmatpush1.bf16.msra.mxu0 0
        %1787 = vmatprep.subr.bf16.mxu0 0
        %1788 = vmatpush1.bf16.msra.mxu0 0
        %1789 = vmatprep.subr.bf16.mxu0 0
        %1790 = vmatpush1.bf16.msra.mxu0 0
        %1791 = vmatprep.subr.bf16.mxu0 0
        %1792 = vmatpush1.bf16.msra.mxu0 0
        %1793 = vmatprep.subr.bf16.mxu0 0
        %1794 = vmatpush1.bf16.msra.mxu0 0
        %1795 = vmatprep.subr.bf16.mxu0 0
        %1796 = vmatpush1.bf16.msra.mxu0 0
        %1797 = vmatprep.subr.bf16.mxu0 0
        %1798 = vmatpush1.bf16.msra.mxu0 0
        %1799 = vmatprep.subr.bf16.mxu0 0
        %1800 = vmatpush1.bf16.msra.mxu0 0
        %1801 = vmatprep.subr.bf16.mxu0 0
        %1802 = vmatpush1.bf16.msra.mxu0 0
        %1803 = vmatprep.subr.bf16.mxu0 0
        %1804 = vmatpush1.bf16.msra.mxu0 0
        %1805 = vmatprep.subr.bf16.mxu0 0
        %1806 = vmatpush1.bf16.msra.mxu0 0
        %1807 = vmatprep.subr.bf16.mxu0 0
        %1808 = vmatpush1.bf16.msra.mxu0 0
        %1809 = vmatprep.subr.bf16.mxu0 0
        %1810 = vmatpush1.bf16.msra.mxu0 0
        %1811 = vmatprep.mubr.bf16.mxu0 0
        %1812 = vmatmul.mubr.bf16.gmra.mrb[0].mxu0 %v1777
        %v1813 = vpop.f32.mrb[0].mxu0
        %v1814 = vadd.f32 0.0, %v1813
        %v1815 = vpop.f32.mrb[0].mxu0
        %v1816 = vpop.f32.mrb[0].mxu0
        %v1817 = vadd.f32 0.0, %v1816
        %v1818 = vpop.f32.mrb[0].mxu0
        %1819 = vdwg.mxu0
        %v1820 = vadd.f32 %v1755, %v1814
        %v1821 = vadd.f32 %v1756, %v1817
        %v1824 = vunpack.c.l.b16 %v1761
        %v1825 = vunpack.c.l.b16 %v1762
        %v1826 = vpack.c.b16 %v1825, %v1824
        %1828 = vmatprep.subr.bf16.mxu0 0
        %1829 = vmatpush1.bf16.msra.mxu0 %v1826
        %1830 = vmatprep.subr.bf16.mxu0 0
        %1831 = vmatpush1.bf16.msra.mxu0 0
        %1832 = vmatprep.subr.bf16.mxu0 0
        %1833 = vmatpush1.bf16.msra.mxu0 0
        %1834 = vmatprep.subr.bf16.mxu0 0
        %1835 = vmatpush1.bf16.msra.mxu0 0
        %1836 = vmatprep.subr.bf16.mxu0 0
        %1837 = vmatpush1.bf16.msra.mxu0 0
        %1838 = vmatprep.subr.bf16.mxu0 0
        %1839 = vmatpush1.bf16.msra.mxu0 0
        %1840 = vmatprep.subr.bf16.mxu0 0
        %1841 = vmatpush1.bf16.msra.mxu0 0
        %1842 = vmatprep.subr.bf16.mxu0 0
        %1843 = vmatpush1.bf16.msra.mxu0 0
        %1844 = vmatprep.subr.bf16.mxu0 0
        %1845 = vmatpush1.bf16.msra.mxu0 0
        %1846 = vmatprep.subr.bf16.mxu0 0
        %1847 = vmatpush1.bf16.msra.mxu0 0
        %1848 = vmatprep.subr.bf16.mxu0 0
        %1849 = vmatpush1.bf16.msra.mxu0 0
        %1850 = vmatprep.subr.bf16.mxu0 0
        %1851 = vmatpush1.bf16.msra.mxu0 0
        %1852 = vmatprep.subr.bf16.mxu0 0
        %1853 = vmatpush1.bf16.msra.mxu0 0
        %1854 = vmatprep.subr.bf16.mxu0 0
        %1855 = vmatpush1.bf16.msra.mxu0 0
        %1856 = vmatprep.subr.bf16.mxu0 0
        %1857 = vmatpush1.bf16.msra.mxu0 0
        %1858 = vmatprep.subr.bf16.mxu0 0
        %1859 = vmatpush1.bf16.msra.mxu0 0
        %1860 = vmatprep.mubr.bf16.mxu0 0
        %1861 = vmatmul.mubr.bf16.gmra.mrb[0].mxu0 %v1777
        %v1862 = vpop.f32.mrb[0].mxu0
        %v1863 = vadd.f32 0.0, %v1862
        %v1864 = vpop.f32.mrb[0].mxu0
        %v1865 = vpop.f32.mrb[0].mxu0
        %v1866 = vadd.f32 0.0, %v1865
        %v1867 = vpop.f32.mrb[0].mxu0
        %1868 = vdwg.mxu0
        %v1869 = vadd.f32 %v1820, %v1863
        %v1870 = vadd.f32 %v1821, %v1866
        %v1871 = vrot.slane %v1532, 3
        %v1872 = vrot.slane %v1535, 4
        %v1873 = vor.u32 %v1871, %v1872
        %v1874 = vrot.slane %v1540, 3
        %v1875 = vrot.slane %v1543, 4
        %v1876 = vor.u32 %v1874, %v1875
        %v1877 = vsel %vm556, %v1873, %v1876
        %v1879 = vsel %vm170, %v1877, 0
        %1881 = vmatprep.subr.bf16.mxu0 0
        %1882 = vmatpush1.bf16.msra.mxu0 %v1774
        %1883 = vmatprep.subr.bf16.mxu0 0
        %1884 = vmatpush1.bf16.msra.mxu0 0
        %1885 = vmatprep.subr.bf16.mxu0 0
        %1886 = vmatpush1.bf16.msra.mxu0 0
        %1887 = vmatprep.subr.bf16.mxu0 0
        %1888 = vmatpush1.bf16.msra.mxu0 0
        %1889 = vmatprep.subr.bf16.mxu0 0
        %1890 = vmatpush1.bf16.msra.mxu0 0
        %1891 = vmatprep.subr.bf16.mxu0 0
        %1892 = vmatpush1.bf16.msra.mxu0 0
        %1893 = vmatprep.subr.bf16.mxu0 0
        %1894 = vmatpush1.bf16.msra.mxu0 0
        %1895 = vmatprep.subr.bf16.mxu0 0
        %1896 = vmatpush1.bf16.msra.mxu0 0
        %1897 = vmatprep.subr.bf16.mxu0 0
        %1898 = vmatpush1.bf16.msra.mxu0 0
        %1899 = vmatprep.subr.bf16.mxu0 0
        %1900 = vmatpush1.bf16.msra.mxu0 0
        %1901 = vmatprep.subr.bf16.mxu0 0
        %1902 = vmatpush1.bf16.msra.mxu0 0
        %1903 = vmatprep.subr.bf16.mxu0 0
        %1904 = vmatpush1.bf16.msra.mxu0 0
        %1905 = vmatprep.subr.bf16.mxu0 0
        %1906 = vmatpush1.bf16.msra.mxu0 0
        %1907 = vmatprep.subr.bf16.mxu0 0
        %1908 = vmatpush1.bf16.msra.mxu0 0
        %1909 = vmatprep.subr.bf16.mxu0 0
        %1910 = vmatpush1.bf16.msra.mxu0 0
        %1911 = vmatprep.subr.bf16.mxu0 0
        %1912 = vmatpush1.bf16.msra.mxu0 0
        %1913 = vmatprep.mubr.bf16.mxu0 0
        %1914 = vmatmul.mubr.bf16.gmra.mrb[0].mxu0 %v1879
        %v1915 = vpop.f32.mrb[0].mxu0
        %v1916 = vadd.f32 0.0, %v1915
        %v1917 = vpop.f32.mrb[0].mxu0
        %v1918 = vpop.f32.mrb[0].mxu0
        %v1919 = vadd.f32 0.0, %v1918
        %v1920 = vpop.f32.mrb[0].mxu0
        %1921 = vdwg.mxu0
        %v1922 = vadd.f32 %v1869, %v1916
        %v1923 = vadd.f32 %v1870, %v1919
        %v1924 = vpack.c.bf16 %v1395, %v1394
        %v1925 = vunpack.c.l.bf16 %v1924
        %v1926 = vunpack.c.h.bf16 %v1924
        %v1927 = vsub.f32 %v1394, %v1925
        %v1928 = vsub.f32 %v1395, %v1926
        %v1929 = vpack.c.bf16 %v1928, %v1927
        %s1930 = scalar_lea.vmem %s0, 80
        %v1931 = vld [vmem:[%s1930] sm:$0xf]
        %v1932 = vld [vmem:[%s1930 + $0x4] sm:$0xf]
        %s1933 = scalar_lea.vmem %s1, 80
        %v1934 = vld [vmem:[%s1933] sm:$0xf]
        %v1935 = vld [vmem:[%s1933 + $0x4] sm:$0xf]
        %v1938 = vunpack.c.l.b16 %v1931
        %v1939 = vunpack.c.l.b16 %v1932
        %v1940 = vpack.c.b16 %v1939, %v1938
        %v1943 = vsel %vm170, %v1924, 0
        %1945 = vmatprep.subr.bf16.mxu0 0
        %1946 = vmatpush1.bf16.msra.mxu0 %v1940
        %1947 = vmatprep.subr.bf16.mxu0 0
        %1948 = vmatpush1.bf16.msra.mxu0 0
        %1949 = vmatprep.subr.bf16.mxu0 0
        %1950 = vmatpush1.bf16.msra.mxu0 0
        %1951 = vmatprep.subr.bf16.mxu0 0
        %1952 = vmatpush1.bf16.msra.mxu0 0
        %1953 = vmatprep.subr.bf16.mxu0 0
        %1954 = vmatpush1.bf16.msra.mxu0 0
        %1955 = vmatprep.subr.bf16.mxu0 0
        %1956 = vmatpush1.bf16.msra.mxu0 0
        %1957 = vmatprep.subr.bf16.mxu0 0
        %1958 = vmatpush1.bf16.msra.mxu0 0
        %1959 = vmatprep.subr.bf16.mxu0 0
        %1960 = vmatpush1.bf16.msra.mxu0 0
        %1961 = vmatprep.subr.bf16.mxu0 0
        %1962 = vmatpush1.bf16.msra.mxu0 0
        %1963 = vmatprep.subr.bf16.mxu0 0
        %1964 = vmatpush1.bf16.msra.mxu0 0
        %1965 = vmatprep.subr.bf16.mxu0 0
        %1966 = vmatpush1.bf16.msra.mxu0 0
        %1967 = vmatprep.subr.bf16.mxu0 0
        %1968 = vmatpush1.bf16.msra.mxu0 0
        %1969 = vmatprep.subr.bf16.mxu0 0
        %1970 = vmatpush1.bf16.msra.mxu0 0
        %1971 = vmatprep.subr.bf16.mxu0 0
        %1972 = vmatpush1.bf16.msra.mxu0 0
        %1973 = vmatprep.subr.bf16.mxu0 0
        %1974 = vmatpush1.bf16.msra.mxu0 0
        %1975 = vmatprep.subr.bf16.mxu0 0
        %1976 = vmatpush1.bf16.msra.mxu0 0
        %1977 = vmatprep.mubr.bf16.mxu0 0
        %1978 = vmatmul.mubr.bf16.gmra.mrb[0].mxu0 %v1943
        %v1979 = vpop.f32.mrb[0].mxu0
        %v1980 = vadd.f32 0.0, %v1979
        %v1981 = vpop.f32.mrb[0].mxu0
        %v1982 = vpop.f32.mrb[0].mxu0
        %v1983 = vadd.f32 0.0, %v1982
        %v1984 = vpop.f32.mrb[0].mxu0
        %1985 = vdwg.mxu0
        %v1986 = vadd.f32 %v1922, %v1980
        %v1987 = vadd.f32 %v1923, %v1983
        %v1990 = vunpack.c.l.b16 %v1934
        %v1991 = vunpack.c.l.b16 %v1935
        %v1992 = vpack.c.b16 %v1991, %v1990
        %1994 = vmatprep.subr.bf16.mxu0 0
        %1995 = vmatpush1.bf16.msra.mxu0 %v1992
        %1996 = vmatprep.subr.bf16.mxu0 0
        %1997 = vmatpush1.bf16.msra.mxu0 0
        %1998 = vmatprep.subr.bf16.mxu0 0
        %1999 = vmatpush1.bf16.msra.mxu0 0
        %2000 = vmatprep.subr.bf16.mxu0 0
        %2001 = vmatpush1.bf16.msra.mxu0 0
        %2002 = vmatprep.subr.bf16.mxu0 0
        %2003 = vmatpush1.bf16.msra.mxu0 0
        %2004 = vmatprep.subr.bf16.mxu0 0
        %2005 = vmatpush1.bf16.msra.mxu0 0
        %2006 = vmatprep.subr.bf16.mxu0 0
        %2007 = vmatpush1.bf16.msra.mxu0 0
        %2008 = vmatprep.subr.bf16.mxu0 0
        %2009 = vmatpush1.bf16.msra.mxu0 0
        %2010 = vmatprep.subr.bf16.mxu0 0
        %2011 = vmatpush1.bf16.msra.mxu0 0
        %2012 = vmatprep.subr.bf16.mxu0 0
        %2013 = vmatpush1.bf16.msra.mxu0 0
        %2014 = vmatprep.subr.bf16.mxu0 0
        %2015 = vmatpush1.bf16.msra.mxu0 0
        %2016 = vmatprep.subr.bf16.mxu0 0
        %2017 = vmatpush1.bf16.msra.mxu0 0
        %2018 = vmatprep.subr.bf16.mxu0 0
        %2019 = vmatpush1.bf16.msra.mxu0 0
        %2020 = vmatprep.subr.bf16.mxu0 0
        %2021 = vmatpush1.bf16.msra.mxu0 0
        %2022 = vmatprep.subr.bf16.mxu0 0
        %2023 = vmatpush1.bf16.msra.mxu0 0
        %2024 = vmatprep.subr.bf16.mxu0 0
        %2025 = vmatpush1.bf16.msra.mxu0 0
        %2026 = vmatprep.mubr.bf16.mxu0 0
        %2027 = vmatmul.mubr.bf16.gmra.mrb[0].mxu0 %v1943
        %v2028 = vpop.f32.mrb[0].mxu0
        %v2029 = vadd.f32 0.0, %v2028
        %v2030 = vpop.f32.mrb[0].mxu0
        %v2031 = vpop.f32.mrb[0].mxu0
        %v2032 = vadd.f32 0.0, %v2031
        %v2033 = vpop.f32.mrb[0].mxu0
        %2034 = vdwg.mxu0
        %v2035 = vadd.f32 %v1986, %v2029
        %v2036 = vadd.f32 %v1987, %v2032
        %v2038 = vsel %vm170, %v1929, 0
        %2040 = vmatprep.subr.bf16.mxu0 0
        %2041 = vmatpush1.bf16.msra.mxu0 %v1940
        %2042 = vmatprep.subr.bf16.mxu0 0
        %2043 = vmatpush1.bf16.msra.mxu0 0
        %2044 = vmatprep.subr.bf16.mxu0 0
        %2045 = vmatpush1.bf16.msra.mxu0 0
        %2046 = vmatprep.subr.bf16.mxu0 0
        %2047 = vmatpush1.bf16.msra.mxu0 0
        %2048 = vmatprep.subr.bf16.mxu0 0
        %2049 = vmatpush1.bf16.msra.mxu0 0
        %2050 = vmatprep.subr.bf16.mxu0 0
        %2051 = vmatpush1.bf16.msra.mxu0 0
        %2052 = vmatprep.subr.bf16.mxu0 0
        %2053 = vmatpush1.bf16.msra.mxu0 0
        %2054 = vmatprep.subr.bf16.mxu0 0
        %2055 = vmatpush1.bf16.msra.mxu0 0
        %2056 = vmatprep.subr.bf16.mxu0 0
        %2057 = vmatpush1.bf16.msra.mxu0 0
        %2058 = vmatprep.subr.bf16.mxu0 0
        %2059 = vmatpush1.bf16.msra.mxu0 0
        %2060 = vmatprep.subr.bf16.mxu0 0
        %2061 = vmatpush1.bf16.msra.mxu0 0
        %2062 = vmatprep.subr.bf16.mxu0 0
        %2063 = vmatpush1.bf16.msra.mxu0 0
        %2064 = vmatprep.subr.bf16.mxu0 0
        %2065 = vmatpush1.bf16.msra.mxu0 0
        %2066 = vmatprep.subr.bf16.mxu0 0
        %2067 = vmatpush1.bf16.msra.mxu0 0
        %2068 = vmatprep.subr.bf16.mxu0 0
        %2069 = vmatpush1.bf16.msra.mxu0 0
        %2070 = vmatprep.subr.bf16.mxu0 0
        %2071 = vmatpush1.bf16.msra.mxu0 0
        %2072 = vmatprep.mubr.bf16.mxu0 0
        %2073 = vmatmul.mubr.bf16.gmra.mrb[0].mxu0 %v2038
        %v2074 = vpop.f32.mrb[0].mxu0
        %v2075 = vadd.f32 0.0, %v2074
        %v2076 = vpop.f32.mrb[0].mxu0
        %v2077 = vpop.f32.mrb[0].mxu0
        %v2078 = vadd.f32 0.0, %v2077
        %v2079 = vpop.f32.mrb[0].mxu0
        %2080 = vdwg.mxu0
        %v2081 = vadd.f32 %v2035, %v2075
        %v2082 = vadd.f32 %v2036, %v2078
        %v2083 = vpack.c.bf16 %v1396, %v1396
        %v2084 = vunpack.c.l.bf16 %v2083
        %v2085 = vsub.f32 %v1396, %v2084
        %v2086 = vpack.c.bf16 %v2085, %v2085
        %s2087 = scalar_lea.vmem %s0, 88
        %v2088 = vld [vmem:[%s2087] sm:$0xf]
        %v2089 = vld [vmem:[%s2087 + $0x4] sm:$0xf]
        %s2090 = scalar_lea.vmem %s1, 88
        %v2091 = vld [vmem:[%s2090] sm:$0xf]
        %v2092 = vld [vmem:[%s2090 + $0x4] sm:$0xf]
        %v2093 = vshrl.u32 %v1924, 16
        %v2095 = vshll.u32 %v1924, 16
        %v2097 = vrot.slane %v2095, 1
        %v2098 = vor.u32 %v2093, %v2097
        %v2100 = vshll.u32 %v2083, 16
        %v2102 = vrot.slane %v2100, 1
        %v2103 = vsel %vm887, %v2098, %v2102
        %v2106 = vunpack.c.l.b16 %v2088
        %v2107 = vunpack.c.l.b16 %v2089
        %v2108 = vpack.c.b16 %v2107, %v2106
        %v2111 = vsel %vm170, %v2103, 0
        %2113 = vmatprep.subr.bf16.mxu0 0
        %2114 = vmatpush1.bf16.msra.mxu0 %v2108
        %2115 = vmatprep.subr.bf16.mxu0 0
        %2116 = vmatpush1.bf16.msra.mxu0 0
        %2117 = vmatprep.subr.bf16.mxu0 0
        %2118 = vmatpush1.bf16.msra.mxu0 0
        %2119 = vmatprep.subr.bf16.mxu0 0
        %2120 = vmatpush1.bf16.msra.mxu0 0
        %2121 = vmatprep.subr.bf16.mxu0 0
        %2122 = vmatpush1.bf16.msra.mxu0 0
        %2123 = vmatprep.subr.bf16.mxu0 0
        %2124 = vmatpush1.bf16.msra.mxu0 0
        %2125 = vmatprep.subr.bf16.mxu0 0
        %2126 = vmatpush1.bf16.msra.mxu0 0
        %2127 = vmatprep.subr.bf16.mxu0 0
        %2128 = vmatpush1.bf16.msra.mxu0 0
        %2129 = vmatprep.subr.bf16.mxu0 0
        %2130 = vmatpush1.bf16.msra.mxu0 0
        %2131 = vmatprep.subr.bf16.mxu0 0
        %2132 = vmatpush1.bf16.msra.mxu0 0
        %2133 = vmatprep.subr.bf16.mxu0 0
        %2134 = vmatpush1.bf16.msra.mxu0 0
        %2135 = vmatprep.subr.bf16.mxu0 0
        %2136 = vmatpush1.bf16.msra.mxu0 0
        %2137 = vmatprep.subr.bf16.mxu0 0
        %2138 = vmatpush1.bf16.msra.mxu0 0
        %2139 = vmatprep.subr.bf16.mxu0 0
        %2140 = vmatpush1.bf16.msra.mxu0 0
        %2141 = vmatprep.subr.bf16.mxu0 0
        %2142 = vmatpush1.bf16.msra.mxu0 0
        %2143 = vmatprep.subr.bf16.mxu0 0
        %2144 = vmatpush1.bf16.msra.mxu0 0
        %2145 = vmatprep.mubr.bf16.mxu0 0
        %2146 = vmatmul.mubr.bf16.gmra.mrb[0].mxu0 %v2111
        %v2147 = vpop.f32.mrb[0].mxu0
        %v2148 = vadd.f32 0.0, %v2147
        %v2149 = vpop.f32.mrb[0].mxu0
        %v2150 = vpop.f32.mrb[0].mxu0
        %v2151 = vadd.f32 0.0, %v2150
        %v2152 = vpop.f32.mrb[0].mxu0
        %2153 = vdwg.mxu0
        %v2154 = vadd.f32 %v2081, %v2148
        %v2155 = vadd.f32 %v2082, %v2151
        %v2158 = vunpack.c.l.b16 %v2091
        %v2159 = vunpack.c.l.b16 %v2092
        %v2160 = vpack.c.b16 %v2159, %v2158
        %2162 = vmatprep.subr.bf16.mxu0 0
        %2163 = vmatpush1.bf16.msra.mxu0 %v2160
        %2164 = vmatprep.subr.bf16.mxu0 0
        %2165 = vmatpush1.bf16.msra.mxu0 0
        %2166 = vmatprep.subr.bf16.mxu0 0
        %2167 = vmatpush1.bf16.msra.mxu0 0
        %2168 = vmatprep.subr.bf16.mxu0 0
        %2169 = vmatpush1.bf16.msra.mxu0 0
        %2170 = vmatprep.subr.bf16.mxu0 0
        %2171 = vmatpush1.bf16.msra.mxu0 0
        %2172 = vmatprep.subr.bf16.mxu0 0
        %2173 = vmatpush1.bf16.msra.mxu0 0
        %2174 = vmatprep.subr.bf16.mxu0 0
        %2175 = vmatpush1.bf16.msra.mxu0 0
        %2176 = vmatprep.subr.bf16.mxu0 0
        %2177 = vmatpush1.bf16.msra.mxu0 0
        %2178 = vmatprep.subr.bf16.mxu0 0
        %2179 = vmatpush1.bf16.msra.mxu0 0
        %2180 = vmatprep.subr.bf16.mxu0 0
        %2181 = vmatpush1.bf16.msra.mxu0 0
        %2182 = vmatprep.subr.bf16.mxu0 0
        %2183 = vmatpush1.bf16.msra.mxu0 0
        %2184 = vmatprep.subr.bf16.mxu0 0
        %2185 = vmatpush1.bf16.msra.mxu0 0
        %2186 = vmatprep.subr.bf16.mxu0 0
        %2187 = vmatpush1.bf16.msra.mxu0 0
        %2188 = vmatprep.subr.bf16.mxu0 0
        %2189 = vmatpush1.bf16.msra.mxu0 0
        %2190 = vmatprep.subr.bf16.mxu0 0
        %2191 = vmatpush1.bf16.msra.mxu0 0
        %2192 = vmatprep.subr.bf16.mxu0 0
        %2193 = vmatpush1.bf16.msra.mxu0 0
        %2194 = vmatprep.mubr.bf16.mxu0 0
        %2195 = vmatmul.mubr.bf16.gmra.mrb[0].mxu0 %v2111
        %v2196 = vpop.f32.mrb[0].mxu0
        %v2197 = vadd.f32 0.0, %v2196
        %v2198 = vpop.f32.mrb[0].mxu0
        %v2199 = vpop.f32.mrb[0].mxu0
        %v2200 = vadd.f32 0.0, %v2199
        %v2201 = vpop.f32.mrb[0].mxu0
        %2202 = vdwg.mxu0
        %v2203 = vadd.f32 %v2154, %v2197
        %v2204 = vadd.f32 %v2155, %v2200
        %v2205 = vshrl.u32 %v1929, 16
        %v2207 = vshll.u32 %v1929, 16
        %v2209 = vrot.slane %v2207, 1
        %v2210 = vor.u32 %v2205, %v2209
        %v2212 = vshll.u32 %v2086, 16
        %v2214 = vrot.slane %v2212, 1
        %v2215 = vsel %vm887, %v2210, %v2214
        %v2217 = vsel %vm170, %v2215, 0
        %2219 = vmatprep.subr.bf16.mxu0 0
        %2220 = vmatpush1.bf16.msra.mxu0 %v2108
        %2221 = vmatprep.subr.bf16.mxu0 0
        %2222 = vmatpush1.bf16.msra.mxu0 0
        %2223 = vmatprep.subr.bf16.mxu0 0
        %2224 = vmatpush1.bf16.msra.mxu0 0
        %2225 = vmatprep.subr.bf16.mxu0 0
        %2226 = vmatpush1.bf16.msra.mxu0 0
        %2227 = vmatprep.subr.bf16.mxu0 0
        %2228 = vmatpush1.bf16.msra.mxu0 0
        %2229 = vmatprep.subr.bf16.mxu0 0
        %2230 = vmatpush1.bf16.msra.mxu0 0
        %2231 = vmatprep.subr.bf16.mxu0 0
        %2232 = vmatpush1.bf16.msra.mxu0 0
        %2233 = vmatprep.subr.bf16.mxu0 0
        %2234 = vmatpush1.bf16.msra.mxu0 0
        %2235 = vmatprep.subr.bf16.mxu0 0
        %2236 = vmatpush1.bf16.msra.mxu0 0
        %2237 = vmatprep.subr.bf16.mxu0 0
        %2238 = vmatpush1.bf16.msra.mxu0 0
        %2239 = vmatprep.subr.bf16.mxu0 0
        %2240 = vmatpush1.bf16.msra.mxu0 0
        %2241 = vmatprep.subr.bf16.mxu0 0
        %2242 = vmatpush1.bf16.msra.mxu0 0
        %2243 = vmatprep.subr.bf16.mxu0 0
        %2244 = vmatpush1.bf16.msra.mxu0 0
        %2245 = vmatprep.subr.bf16.mxu0 0
        %2246 = vmatpush1.bf16.msra.mxu0 0
        %2247 = vmatprep.subr.bf16.mxu0 0
        %2248 = vmatpush1.bf16.msra.mxu0 0
        %2249 = vmatprep.subr.bf16.mxu0 0
        %2250 = vmatpush1.bf16.msra.mxu0 0
        %2251 = vmatprep.mubr.bf16.mxu0 0
        %2252 = vmatmul.mubr.bf16.gmra.mrb[0].mxu0 %v2217
        %v2253 = vpop.f32.mrb[0].mxu0
        %v2254 = vadd.f32 0.0, %v2253
        %v2255 = vpop.f32.mrb[0].mxu0
        %v2256 = vpop.f32.mrb[0].mxu0
        %v2257 = vadd.f32 0.0, %v2256
        %v2258 = vpop.f32.mrb[0].mxu0
        %2259 = vdwg.mxu0
        %v2260 = vadd.f32 %v2203, %v2254
        %v2261 = vadd.f32 %v2204, %v2257
        %s2262 = scalar_lea.vmem %s0, 96
        %v2263 = vld [vmem:[%s2262] sm:$0xf]
        %v2264 = vld [vmem:[%s2262 + $0x4] sm:$0xf]
        %s2265 = scalar_lea.vmem %s1, 96
        %v2266 = vld [vmem:[%s2265] sm:$0xf]
        %v2267 = vld [vmem:[%s2265 + $0x4] sm:$0xf]
        %v2270 = vrot.slane %v1924, 1
        %v2271 = vrot.slane %v2083, 1
        %v2272 = vsel %vm1065, %v2270, %v2271
        %v2275 = vunpack.c.l.b16 %v2263
        %v2276 = vunpack.c.l.b16 %v2264
        %v2277 = vpack.c.b16 %v2276, %v2275
        %v2280 = vsel %vm170, %v2272, 0
        %2282 = vmatprep.subr.bf16.mxu0 0
        %2283 = vmatpush1.bf16.msra.mxu0 %v2277
        %2284 = vmatprep.subr.bf16.mxu0 0
        %2285 = vmatpush1.bf16.msra.mxu0 0
        %2286 = vmatprep.subr.bf16.mxu0 0
        %2287 = vmatpush1.bf16.msra.mxu0 0
        %2288 = vmatprep.subr.bf16.mxu0 0
        %2289 = vmatpush1.bf16.msra.mxu0 0
        %2290 = vmatprep.subr.bf16.mxu0 0
        %2291 = vmatpush1.bf16.msra.mxu0 0
        %2292 = vmatprep.subr.bf16.mxu0 0
        %2293 = vmatpush1.bf16.msra.mxu0 0
        %2294 = vmatprep.subr.bf16.mxu0 0
        %2295 = vmatpush1.bf16.msra.mxu0 0
        %2296 = vmatprep.subr.bf16.mxu0 0
        %2297 = vmatpush1.bf16.msra.mxu0 0
        %2298 = vmatprep.subr.bf16.mxu0 0
        %2299 = vmatpush1.bf16.msra.mxu0 0
        %2300 = vmatprep.subr.bf16.mxu0 0
        %2301 = vmatpush1.bf16.msra.mxu0 0
        %2302 = vmatprep.subr.bf16.mxu0 0
        %2303 = vmatpush1.bf16.msra.mxu0 0
        %2304 = vmatprep.subr.bf16.mxu0 0
        %2305 = vmatpush1.bf16.msra.mxu0 0
        %2306 = vmatprep.subr.bf16.mxu0 0
        %2307 = vmatpush1.bf16.msra.mxu0 0
        %2308 = vmatprep.subr.bf16.mxu0 0
        %2309 = vmatpush1.bf16.msra.mxu0 0
        %2310 = vmatprep.subr.bf16.mxu0 0
        %2311 = vmatpush1.bf16.msra.mxu0 0
        %2312 = vmatprep.subr.bf16.mxu0 0
        %2313 = vmatpush1.bf16.msra.mxu0 0
        %2314 = vmatprep.mubr.bf16.mxu0 0
        %2315 = vmatmul.mubr.bf16.gmra.mrb[0].mxu0 %v2280
        %v2316 = vpop.f32.mrb[0].mxu0
        %v2317 = vadd.f32 0.0, %v2316
        %v2318 = vpop.f32.mrb[0].mxu0
        %v2319 = vpop.f32.mrb[0].mxu0
        %v2320 = vadd.f32 0.0, %v2319
        %v2321 = vpop.f32.mrb[0].mxu0
        %2322 = vdwg.mxu0
        %v2323 = vadd.f32 %v2260, %v2317
        %v2324 = vadd.f32 %v2261, %v2320
        %v2327 = vunpack.c.l.b16 %v2266
        %v2328 = vunpack.c.l.b16 %v2267
        %v2329 = vpack.c.b16 %v2328, %v2327
        %2331 = vmatprep.subr.bf16.mxu0 0
        %2332 = vmatpush1.bf16.msra.mxu0 %v2329
        %2333 = vmatprep.subr.bf16.mxu0 0
        %2334 = vmatpush1.bf16.msra.mxu0 0
        %2335 = vmatprep.subr.bf16.mxu0 0
        %2336 = vmatpush1.bf16.msra.mxu0 0
        %2337 = vmatprep.subr.bf16.mxu0 0
        %2338 = vmatpush1.bf16.msra.mxu0 0
        %2339 = vmatprep.subr.bf16.mxu0 0
        %2340 = vmatpush1.bf16.msra.mxu0 0
        %2341 = vmatprep.subr.bf16.mxu0 0
        %2342 = vmatpush1.bf16.msra.mxu0 0
        %2343 = vmatprep.subr.bf16.mxu0 0
        %2344 = vmatpush1.bf16.msra.mxu0 0
        %2345 = vmatprep.subr.bf16.mxu0 0
        %2346 = vmatpush1.bf16.msra.mxu0 0
        %2347 = vmatprep.subr.bf16.mxu0 0
        %2348 = vmatpush1.bf16.msra.mxu0 0
        %2349 = vmatprep.subr.bf16.mxu0 0
        %2350 = vmatpush1.bf16.msra.mxu0 0
        %2351 = vmatprep.subr.bf16.mxu0 0
        %2352 = vmatpush1.bf16.msra.mxu0 0
        %2353 = vmatprep.subr.bf16.mxu0 0
        %2354 = vmatpush1.bf16.msra.mxu0 0
        %2355 = vmatprep.subr.bf16.mxu0 0
        %2356 = vmatpush1.bf16.msra.mxu0 0
        %2357 = vmatprep.subr.bf16.mxu0 0
        %2358 = vmatpush1.bf16.msra.mxu0 0
        %2359 = vmatprep.subr.bf16.mxu0 0
        %2360 = vmatpush1.bf16.msra.mxu0 0
        %2361 = vmatprep.subr.bf16.mxu0 0
        %2362 = vmatpush1.bf16.msra.mxu0 0
        %2363 = vmatprep.mubr.bf16.mxu0 0
        %2364 = vmatmul.mubr.bf16.gmra.mrb[0].mxu0 %v2280
        %v2365 = vpop.f32.mrb[0].mxu0
        %v2366 = vadd.f32 0.0, %v2365
        %v2367 = vpop.f32.mrb[0].mxu0
        %v2368 = vpop.f32.mrb[0].mxu0
        %v2369 = vadd.f32 0.0, %v2368
        %v2370 = vpop.f32.mrb[0].mxu0
        %2371 = vdwg.mxu0
        %v2372 = vadd.f32 %v2323, %v2366
        %v2373 = vadd.f32 %v2324, %v2369
        %v2376 = vrot.slane %v1929, 1
        %v2377 = vrot.slane %v2086, 1
        %v2378 = vsel %vm1065, %v2376, %v2377
        %v2380 = vsel %vm170, %v2378, 0
        %2382 = vmatprep.subr.bf16.mxu0 0
        %2383 = vmatpush1.bf16.msra.mxu0 %v2277
        %2384 = vmatprep.subr.bf16.mxu0 0
        %2385 = vmatpush1.bf16.msra.mxu0 0
        %2386 = vmatprep.subr.bf16.mxu0 0
        %2387 = vmatpush1.bf16.msra.mxu0 0
        %2388 = vmatprep.subr.bf16.mxu0 0
        %2389 = vmatpush1.bf16.msra.mxu0 0
        %2390 = vmatprep.subr.bf16.mxu0 0
        %2391 = vmatpush1.bf16.msra.mxu0 0
        %2392 = vmatprep.subr.bf16.mxu0 0
        %2393 = vmatpush1.bf16.msra.mxu0 0
        %2394 = vmatprep.subr.bf16.mxu0 0
        %2395 = vmatpush1.bf16.msra.mxu0 0
        %2396 = vmatprep.subr.bf16.mxu0 0
        %2397 = vmatpush1.bf16.msra.mxu0 0
        %2398 = vmatprep.subr.bf16.mxu0 0
        %2399 = vmatpush1.bf16.msra.mxu0 0
        %2400 = vmatprep.subr.bf16.mxu0 0
        %2401 = vmatpush1.bf16.msra.mxu0 0
        %2402 = vmatprep.subr.bf16.mxu0 0
        %2403 = vmatpush1.bf16.msra.mxu0 0
        %2404 = vmatprep.subr.bf16.mxu0 0
        %2405 = vmatpush1.bf16.msra.mxu0 0
        %2406 = vmatprep.subr.bf16.mxu0 0
        %2407 = vmatpush1.bf16.msra.mxu0 0
        %2408 = vmatprep.subr.bf16.mxu0 0
        %2409 = vmatpush1.bf16.msra.mxu0 0
        %2410 = vmatprep.subr.bf16.mxu0 0
        %2411 = vmatpush1.bf16.msra.mxu0 0
        %2412 = vmatprep.subr.bf16.mxu0 0
        %2413 = vmatpush1.bf16.msra.mxu0 0
        %2414 = vmatprep.mubr.bf16.mxu0 0
        %2415 = vmatmul.mubr.bf16.gmra.mrb[0].mxu0 %v2380
        %v2416 = vpop.f32.mrb[0].mxu0
        %v2417 = vadd.f32 0.0, %v2416
        %v2418 = vpop.f32.mrb[0].mxu0
        %v2419 = vpop.f32.mrb[0].mxu0
        %v2420 = vadd.f32 0.0, %v2419
        %v2421 = vpop.f32.mrb[0].mxu0
        %2422 = vdwg.mxu0
        %v2423 = vadd.f32 %v2372, %v2417
        %v2424 = vadd.f32 %v2373, %v2420
        %s2425 = scalar_lea.vmem %s0, 104
        %v2426 = vld [vmem:[%s2425] sm:$0xf]
        %v2427 = vld [vmem:[%s2425 + $0x4] sm:$0xf]
        %s2428 = scalar_lea.vmem %s1, 104
        %v2429 = vld [vmem:[%s2428] sm:$0xf]
        %v2430 = vld [vmem:[%s2428 + $0x4] sm:$0xf]
        %v2431 = vrot.slane %v2093, 1
        %v2432 = vrot.slane %v2095, 2
        %v2433 = vor.u32 %v2431, %v2432
        %v2434 = vshrl.u32 %v2083, 16
        %v2436 = vrot.slane %v2434, 1
        %v2437 = vrot.slane %v2100, 2
        %v2438 = vor.u32 %v2436, %v2437
        %v2439 = vsel %vm1227, %v2433, %v2438
        %v2442 = vunpack.c.l.b16 %v2426
        %v2443 = vunpack.c.l.b16 %v2427
        %v2444 = vpack.c.b16 %v2443, %v2442
        %v2447 = vsel %vm170, %v2439, 0
        %2449 = vmatprep.subr.bf16.mxu0 0
        %2450 = vmatpush1.bf16.msra.mxu0 %v2444
        %2451 = vmatprep.subr.bf16.mxu0 0
        %2452 = vmatpush1.bf16.msra.mxu0 0
        %2453 = vmatprep.subr.bf16.mxu0 0
        %2454 = vmatpush1.bf16.msra.mxu0 0
        %2455 = vmatprep.subr.bf16.mxu0 0
        %2456 = vmatpush1.bf16.msra.mxu0 0
        %2457 = vmatprep.subr.bf16.mxu0 0
        %2458 = vmatpush1.bf16.msra.mxu0 0
        %2459 = vmatprep.subr.bf16.mxu0 0
        %2460 = vmatpush1.bf16.msra.mxu0 0
        %2461 = vmatprep.subr.bf16.mxu0 0
        %2462 = vmatpush1.bf16.msra.mxu0 0
        %2463 = vmatprep.subr.bf16.mxu0 0
        %2464 = vmatpush1.bf16.msra.mxu0 0
        %2465 = vmatprep.subr.bf16.mxu0 0
        %2466 = vmatpush1.bf16.msra.mxu0 0
        %2467 = vmatprep.subr.bf16.mxu0 0
        %2468 = vmatpush1.bf16.msra.mxu0 0
        %2469 = vmatprep.subr.bf16.mxu0 0
        %2470 = vmatpush1.bf16.msra.mxu0 0
        %2471 = vmatprep.subr.bf16.mxu0 0
        %2472 = vmatpush1.bf16.msra.mxu0 0
        %2473 = vmatprep.subr.bf16.mxu0 0
        %2474 = vmatpush1.bf16.msra.mxu0 0
        %2475 = vmatprep.subr.bf16.mxu0 0
        %2476 = vmatpush1.bf16.msra.mxu0 0
        %2477 = vmatprep.subr.bf16.mxu0 0
        %2478 = vmatpush1.bf16.msra.mxu0 0
        %2479 = vmatprep.subr.bf16.mxu0 0
        %2480 = vmatpush1.bf16.msra.mxu0 0
        %2481 = vmatprep.mubr.bf16.mxu0 0
        %2482 = vmatmul.mubr.bf16.gmra.mrb[0].mxu0 %v2447
        %v2483 = vpop.f32.mrb[0].mxu0
        %v2484 = vadd.f32 0.0, %v2483
        %v2485 = vpop.f32.mrb[0].mxu0
        %v2486 = vpop.f32.mrb[0].mxu0
        %v2487 = vadd.f32 0.0, %v2486
        %v2488 = vpop.f32.mrb[0].mxu0
        %2489 = vdwg.mxu0
        %v2490 = vadd.f32 %v2423, %v2484
        %v2491 = vadd.f32 %v2424, %v2487
        %v2494 = vunpack.c.l.b16 %v2429
        %v2495 = vunpack.c.l.b16 %v2430
        %v2496 = vpack.c.b16 %v2495, %v2494
        %2498 = vmatprep.subr.bf16.mxu0 0
        %2499 = vmatpush1.bf16.msra.mxu0 %v2496
        %2500 = vmatprep.subr.bf16.mxu0 0
        %2501 = vmatpush1.bf16.msra.mxu0 0
        %2502 = vmatprep.subr.bf16.mxu0 0
        %2503 = vmatpush1.bf16.msra.mxu0 0
        %2504 = vmatprep.subr.bf16.mxu0 0
        %2505 = vmatpush1.bf16.msra.mxu0 0
        %2506 = vmatprep.subr.bf16.mxu0 0
        %2507 = vmatpush1.bf16.msra.mxu0 0
        %2508 = vmatprep.subr.bf16.mxu0 0
        %2509 = vmatpush1.bf16.msra.mxu0 0
        %2510 = vmatprep.subr.bf16.mxu0 0
        %2511 = vmatpush1.bf16.msra.mxu0 0
        %2512 = vmatprep.subr.bf16.mxu0 0
        %2513 = vmatpush1.bf16.msra.mxu0 0
        %2514 = vmatprep.subr.bf16.mxu0 0
        %2515 = vmatpush1.bf16.msra.mxu0 0
        %2516 = vmatprep.subr.bf16.mxu0 0
        %2517 = vmatpush1.bf16.msra.mxu0 0
        %2518 = vmatprep.subr.bf16.mxu0 0
        %2519 = vmatpush1.bf16.msra.mxu0 0
        %2520 = vmatprep.subr.bf16.mxu0 0
        %2521 = vmatpush1.bf16.msra.mxu0 0
        %2522 = vmatprep.subr.bf16.mxu0 0
        %2523 = vmatpush1.bf16.msra.mxu0 0
        %2524 = vmatprep.subr.bf16.mxu0 0
        %2525 = vmatpush1.bf16.msra.mxu0 0
        %2526 = vmatprep.subr.bf16.mxu0 0
        %2527 = vmatpush1.bf16.msra.mxu0 0
        %2528 = vmatprep.subr.bf16.mxu0 0
        %2529 = vmatpush1.bf16.msra.mxu0 0
        %2530 = vmatprep.mubr.bf16.mxu0 0
        %2531 = vmatmul.mubr.bf16.gmra.mrb[0].mxu0 %v2447
        %v2532 = vpop.f32.mrb[0].mxu0
        %v2533 = vadd.f32 0.0, %v2532
        %v2534 = vpop.f32.mrb[0].mxu0
        %v2535 = vpop.f32.mrb[0].mxu0
        %v2536 = vadd.f32 0.0, %v2535
        %v2537 = vpop.f32.mrb[0].mxu0
        %2538 = vdwg.mxu0
        %v2539 = vadd.f32 %v2490, %v2533
        %v2540 = vadd.f32 %v2491, %v2536
        %v2541 = vrot.slane %v2205, 1
        %v2542 = vrot.slane %v2207, 2
        %v2543 = vor.u32 %v2541, %v2542
        %v2544 = vshrl.u32 %v2086, 16
        %v2546 = vrot.slane %v2544, 1
        %v2547 = vrot.slane %v2212, 2
        %v2548 = vor.u32 %v2546, %v2547
        %v2549 = vsel %vm1227, %v2543, %v2548
        %v2551 = vsel %vm170, %v2549, 0
        %2553 = vmatprep.subr.bf16.mxu0 0
        %2554 = vmatpush1.bf16.msra.mxu0 %v2444
        %2555 = vmatprep.subr.bf16.mxu0 0
        %2556 = vmatpush1.bf16.msra.mxu0 0
        %2557 = vmatprep.subr.bf16.mxu0 0
        %2558 = vmatpush1.bf16.msra.mxu0 0
        %2559 = vmatprep.subr.bf16.mxu0 0
        %2560 = vmatpush1.bf16.msra.mxu0 0
        %2561 = vmatprep.subr.bf16.mxu0 0
        %2562 = vmatpush1.bf16.msra.mxu0 0
        %2563 = vmatprep.subr.bf16.mxu0 0
        %2564 = vmatpush1.bf16.msra.mxu0 0
        %2565 = vmatprep.subr.bf16.mxu0 0
        %2566 = vmatpush1.bf16.msra.mxu0 0
        %2567 = vmatprep.subr.bf16.mxu0 0
        %2568 = vmatpush1.bf16.msra.mxu0 0
        %2569 = vmatprep.subr.bf16.mxu0 0
        %2570 = vmatpush1.bf16.msra.mxu0 0
        %2571 = vmatprep.subr.bf16.mxu0 0
        %2572 = vmatpush1.bf16.msra.mxu0 0
        %2573 = vmatprep.subr.bf16.mxu0 0
        %2574 = vmatpush1.bf16.msra.mxu0 0
        %2575 = vmatprep.subr.bf16.mxu0 0
        %2576 = vmatpush1.bf16.msra.mxu0 0
        %2577 = vmatprep.subr.bf16.mxu0 0
        %2578 = vmatpush1.bf16.msra.mxu0 0
        %2579 = vmatprep.subr.bf16.mxu0 0
        %2580 = vmatpush1.bf16.msra.mxu0 0
        %2581 = vmatprep.subr.bf16.mxu0 0
        %2582 = vmatpush1.bf16.msra.mxu0 0
        %2583 = vmatprep.subr.bf16.mxu0 0
        %2584 = vmatpush1.bf16.msra.mxu0 0
        %2585 = vmatprep.mubr.bf16.mxu0 0
        %2586 = vmatmul.mubr.bf16.gmra.mrb[0].mxu0 %v2551
        %v2587 = vpop.f32.mrb[0].mxu0
        %v2588 = vadd.f32 0.0, %v2587
        %v2589 = vpop.f32.mrb[0].mxu0
        %v2590 = vpop.f32.mrb[0].mxu0
        %v2591 = vadd.f32 0.0, %v2590
        %v2592 = vpop.f32.mrb[0].mxu0
        %2593 = vdwg.mxu0
        %v2594 = vadd.f32 %v2539, %v2588
        %v2595 = vadd.f32 %v2540, %v2591
        %v2596 = vxor.u32 %v2594, 2147483648
        %v2597 = vxor.u32 %v2595, 2147483648
        %v2598 = vmul.f32 %v2596, 1.442695
        %v2599 = vpow.pop %v2598
        %v2600 = vmul.f32 %v2597, 1.442695
        %v2601 = vpow.pop %v2600
        %v2602 = vadd.f32 %v2599, 1.0
        %v2603 = vadd.f32 %v2601, 1.0
        %v2604 = vrcp.pop %v2602
        %v2605 = vmul.f32 1.0, %v2604
        %v2606 = vrcp.pop %v2603
        %v2607 = vmul.f32 1.0, %v2606
        %2608 = vst.msk [vmem:[%s163] sm:$0xff] %vm170, %v2605
        %2609 = vst.msk [vmem:[%s163 + $0x8] sm:$0xff] %vm170, %v2607
        %s2610 = sand.u32 %s93, 1
        %s2611 = scalar_lea.sflag [#allocation4], %s2610
        %s2612 = sand.u32 %s93, 1
        %s2613 = smul.addr %s2612, 16
        %s2614 = scalar_lea.vmem [#allocation3], %s2613
        // Predicated region
        $region33: #{spatial_attention.3} parent=31 // pred_check
          %p2615 = pneg %p103
        $region34: #{spatial_attention.3} parent=31 // pred_check_branch
          %2617 = sbr.rel (%p2615) target = $region36
        $region35: #{spatial_attention.3} parent=31 // pred_region
          %s2619 = ssub.s32 256, 256
          %2620 = vsyncadd %s2611, %s2619
          %s2621 = smul.addr %s17, 2
          %s2622 = smul.addr %s2621, 128
          %s2623 = scalar_lea.hbm %s3, %s2622
          %s2624 = sshll.u32 %s2614, 4
          %s2625 = int_to_ptr.vmem [resolvable:$true] %s2624
          %2630 = dma.vmem_to_hbm [thread:$0]  %s2625, 256, %s2623, %s2611, 128, 128, 8
        $region36: #{spatial_attention.3} parent=31 // pred_fallthru
          _
      $region32: #{spatial_attention.3} parent=5 // pred_fallthru
        _
      %p2631 = scmp.le.s32.totalorder 2, %s12
      // Predicated region
      $region37: #{spatial_attention.3} parent=5 // pred_check
        %p2632 = pneg %p2631
      $region38: #{spatial_attention.3} parent=5 // pred_check_branch
        %2634 = sbr.rel (%p2632) target = $region40
      $region39: #{spatial_attention.3} parent=5 // pred_region
        %s2635 = ssub.s32 %s12, 2
        // Predicated region
        $region41: #{spatial_attention.3} parent=39 // pred_check
          %p2636 = pneg %p109
        $region42: #{spatial_attention.3} parent=39 // pred_check_branch
          %2638 = sbr.rel (%p2636) target = $region44
        $region43: #{spatial_attention.3} parent=39 // pred_region
          %s2639 = sand.u32 %s94, 1
          %s2640 = scalar_lea.sflag [#allocation4], %s2639
          %s2641 = sand.u32 %s94, 1
          %s2642 = smul.addr %s2641, 16
          %s2643 = scalar_lea.vmem [#allocation3], %s2642
          %2644 = dma.done %s2640, 256
        $region44: #{spatial_attention.3} parent=39 // pred_fallthru
          _
      $region40: #{spatial_attention.3} parent=5 // pred_fallthru
        _
    $region6: #{spatial_attention.3} parent=1 // loop_footer
      %s16 = sadd.s32 1, %s12
    $region7: #{spatial_attention.3} parent=1 // loop_footer_branch
      %11 = sbr.rel target = $region3
    $region8: #{spatial_attention.3} parent=1 // loop_exit
      _
    %2645 = vsyncpa [#allocation4], 1
    %s2646 = scalar_lea.sflag [#allocation4], 1
    %2647 = vsyncpa %s2646, 1

</llo_original>
